<compile_context>
chip_gen: v5e
topology: v5e:2x2
jax: 0.10.0
libtpu: 0.0.40
codegen_flags: <defaults>
</compile_context>

<pallas_src>
import functools

import jax
import jax.numpy as jnp
from jax.experimental import pallas as pl
from jax.experimental.pallas import tpu as pltpu

DIM = 256           # module default dim=256 (fills the 256-wide MXU contraction on v6e/v7x)
EXPANSION = 4
HIDDEN = DIM * EXPANSION
COV_EPS = 1e-8      # register_buffer('cov_add_eps', eye(3) * 1e-8)
LN_EPS = 1e-5
QR_EPS = 1e-20      # floor for the Gram-Schmidt rsqrt (guards zero-norm columns)


def _softplus(x):
    # numerically-stable log(1 + exp(x)) == nn.Softplus() (beta=1).
    # (kept as log(1+exp(-|x|)) rather than log1p for guaranteed Mosaic lowering)
    return jnp.maximum(x, 0.0) + jnp.log(1.0 + jnp.exp(-jnp.abs(x)))


def _full_cov_kernel(x_ref, ln_g_ref, ln_b_ref, w1_ref, b1_ref, w2_ref, b2_ref,
                     wht_ref, bht_ref, out_ref):
    x = x_ref[...]                                   # (TM, C) f32

    # ---------------- IsoFFN ----------------
    # TODO(synk): IsoFFN internals are not given; assumed pre-LN residual MLP
    #             (LayerNorm -> Linear -> GELU(tanh) -> Linear + residual),
    #             dropout is identity at inference.
    mu = jnp.mean(x, axis=-1, keepdims=True)
    var = jnp.mean((x - mu) ** 2, axis=-1, keepdims=True)
    xn = (x - mu) * jax.lax.rsqrt(var + LN_EPS)
    xn = xn * ln_g_ref[...] + ln_b_ref[...]
    # bf16 inputs, f32 accumulation on the MXU (weights arrive already in bf16).
    h = jnp.dot(xn.astype(jnp.bfloat16), w1_ref[...],
                preferred_element_type=jnp.float32) + b1_ref[...]
    h = jax.nn.gelu(h, approximate=True)
    y = x + jnp.dot(h.astype(jnp.bfloat16), w2_ref[...],
                    preferred_element_type=jnp.float32) + b2_ref[...]

    # -------- fused heads, transposed so tokens are the lane axis --------
    # heads_t[k, t] : k in [0,3) eigenvalue logits, k in [3,12) eigenvector logits
    # wht_ref is (12, C); contract its dim 1 with y's dim 1  ->  (12, TM)   (NT matmul)
    heads_t = jax.lax.dot_general(
        wht_ref[...], y,
        dimension_numbers=(((1,), (1,)), ((), ())),
        preferred_element_type=jnp.float32) + bht_ref[...]

    lam = _softplus(heads_t[0:3, :])                 # (3, TM), one vectorized softplus
    L = (lam[0:1, :], lam[1:2, :], lam[2:3, :])      # each (1, TM), lane-dense

    def V(r, c):  # row-major 3x3 of the eigenvector logits, per token -> (1, TM)
        k = 3 + 3 * r + c
        return heads_t[k:k + 1, :]

    # -------- QR of each 3x3 via modified Gram-Schmidt on columns --------
    # Q is unique up to per-column sign vs. torch.linalg.qr (Householder);
    # the sign cancels in Q diag(lam) Q^T, so cov matches exactly.
    v00, v10, v20 = V(0, 0), V(1, 0), V(2, 0)
    v01, v11, v21 = V(0, 1), V(1, 1), V(2, 1)
    v02, v12, v22 = V(0, 2), V(1, 2), V(2, 2)

    inv0 = jax.lax.rsqrt(v00 * v00 + v10 * v10 + v20 * v20 + QR_EPS)
    q00, q10, q20 = v00 * inv0, v10 * inv0, v20 * inv0

    d01 = q00 * v01 + q10 * v11 + q20 * v21
    u01, u11, u21 = v01 - d01 * q00, v11 - d01 * q10, v21 - d01 * q20
    inv1 = jax.lax.rsqrt(u01 * u01 + u11 * u11 + u21 * u21 + QR_EPS)
    q01, q11, q21 = u01 * inv1, u11 * inv1, u21 * inv1

    d02 = q00 * v02 + q10 * v12 + q20 * v22
    d12 = q01 * v02 + q11 * v12 + q21 * v22
    u02 = v02 - d02 * q00 - d12 * q01
    u12 = v12 - d02 * q10 - d12 * q11
    u22 = v22 - d02 * q20 - d12 * q21
    inv2 = jax.lax.rsqrt(u02 * u02 + u12 * u12 + u22 * u22 + QR_EPS)
    q02, q12, q22 = u02 * inv2, u12 * inv2, u22 * inv2

    Q = ((q00, q01, q02), (q10, q11, q12), (q20, q21, q22))

    # cov = Q diag(lam) Q^T : symmetric by construction (== (cov+cov^T)/2),
    # only the 6 unique entries are computed, + eps * I on the diagonal.
    cov = [[None] * 3 for _ in range(3)]
    for i in range(3):
        for j in range(i, 3):
            c = (L[0] * Q[i][0] * Q[j][0]
                 + L[1] * Q[i][1] * Q[j][1]
                 + L[2] * Q[i][2] * Q[j][2])
            if i == j:
                c = c + COV_EPS
            cov[i][j] = c
            cov[j][i] = c

    rows = [cov[i][j] for i in range(3) for j in range(3)]   # 9 x (1, TM)
    out_ref[...] = jnp.concatenate(rows, axis=0)             # (9, TM), lane-dense store


def init_params(key, dim=DIM, hidden=HIDDEN):
    k1, k2, k3, k4 = jax.random.split(key, 4)
    s = 0.02
    return dict(
        ln_g=jnp.ones((1, dim), jnp.float32),
        ln_b=jnp.zeros((1, dim), jnp.float32),
        w1=(jax.random.normal(k1, (dim, hidden), jnp.float32) * s),
        b1=jnp.zeros((1, hidden), jnp.float32),
        w2=(jax.random.normal(k2, (hidden, dim), jnp.float32) * s),
        b2=jnp.zeros((1, dim), jnp.float32),
        # fused: cols 0:3 eigenvalue_head weights, cols 3:12 eigenvector_head weights
        wh=(jax.random.normal(k3, (dim, 12), jnp.float32) * 0.1),
        bh=(jax.random.normal(k4, (1, 12), jnp.float32) * 0.1),
    )


def _round_up(v, m):
    return (v + m - 1) // m * m


@functools.partial(jax.jit, static_argnames=("block_tokens",))
def full_cov_predict(x, params, block_tokens=512):
    """block_tokens: token-tile size. ~512 keeps VMEM < a few MiB (v7x-safe);
    sweep up to 1024-2048 on v6e/v5e."""
    B, N, C = x.shape
    T = B * N
    tm = _round_up(min(block_tokens, _round_up(T, 128)), 128)
    T_pad = _round_up(T, tm)

    xf = x.reshape(T, C).astype(jnp.float32)
    if T_pad != T:
        xf = jnp.pad(xf, ((0, T_pad - T), (0, 0)))

    w1 = params["w1"].astype(jnp.bfloat16)           # (C, H) resident bf16
    w2 = params["w2"].astype(jnp.bfloat16)           # (H, C) resident bf16
    hidden = w1.shape[1]
    wh_t = params["wh"].T                            # (12, C)
    bh_t = params["bh"].T                            # (12, 1)

    const = lambda i: (0, 0)
    cov_t = pl.pallas_call(
        _full_cov_kernel,
        out_shape=jax.ShapeDtypeStruct((9, T_pad), jnp.float32),
        grid_spec=pltpu.PrefetchScalarGridSpec(
            num_scalar_prefetch=0,
            grid=(T_pad // tm,),
            in_specs=[
                pl.BlockSpec((tm, C), lambda i: (i, 0)),   # x tile (pipelined)
                pl.BlockSpec((1, C), const),               # ln_g   (resident)
                pl.BlockSpec((1, C), const),               # ln_b
                pl.BlockSpec((C, hidden), const),          # w1 bf16
                pl.BlockSpec((1, hidden), const),          # b1
                pl.BlockSpec((hidden, C), const),          # w2 bf16
                pl.BlockSpec((1, C), const),               # b2
                pl.BlockSpec((12, C), const),              # wh^T
                pl.BlockSpec((12, 1), const),              # bh^T
            ],
            out_specs=pl.BlockSpec((9, tm), lambda i: (0, i)),
        ),
        compiler_params=pltpu.CompilerParams(
            dimension_semantics=("parallel",)),
    )(xf, params["ln_g"], params["ln_b"], w1, params["b1"],
      w2, params["b2"], wh_t, bh_t)

    # (9, T_pad) -> (T, 9) row-major 3x3 -> (B, N, 3, 3)
    return cov_t[:, :T].T.reshape(B, N, 3, 3)


def reference(x, p):
    """Pure-JAX reference mirroring the PyTorch forward (with the same assumed
    IsoFFN and the same bf16 casts on the two FFN matmuls)."""
    B, N, C = x.shape
    xf = x.reshape(B * N, C).astype(jnp.float32)
    mu = xf.mean(-1, keepdims=True)
    var = ((xf - mu) ** 2).mean(-1, keepdims=True)
    xn = (xf - mu) * jax.lax.rsqrt(var + LN_EPS) * p["ln_g"] + p["ln_b"]
    w1 = p["w1"].astype(jnp.bfloat16)
    w2 = p["w2"].astype(jnp.bfloat16)
    h = jnp.dot(xn.astype(jnp.bfloat16), w1,
                preferred_element_type=jnp.float32) + p["b1"]
    h = jax.nn.gelu(h, approximate=True)
    y = xf + jnp.dot(h.astype(jnp.bfloat16), w2,
                     preferred_element_type=jnp.float32) + p["b2"]
    heads = y @ p["wh"] + p["bh"]
    lam = jax.nn.softplus(heads[:, :3])
    V = heads[:, 3:].reshape(-1, 3, 3)
    Q, _ = jnp.linalg.qr(V)
    cov = Q @ (lam[:, :, None] * jnp.swapaxes(Q, -1, -2))
    cov = (cov + jnp.swapaxes(cov, -1, -2)) / 2.0
    cov = cov + jnp.eye(3, dtype=cov.dtype) * COV_EPS
    return cov.reshape(B, N, 3, 3)


if __name__ == "__main__":
    key = jax.random.PRNGKey(0)
    kx, kp = jax.random.split(key)
    B, N = 2, 8
    x = jax.random.normal(kx, (B, N, DIM), jnp.float32)
    params = init_params(kp)

    cov = full_cov_predict(x, params)
    jax.block_until_ready(cov)

    ref = reference(x, params)
    err = float(jnp.max(jnp.abs(cov - ref)))
    sym_err = float(jnp.max(jnp.abs(cov - jnp.swapaxes(cov, -1, -2))))
    assert cov.shape == (B, N, 3, 3), cov.shape
    assert bool(jnp.all(jnp.isfinite(cov)))
    assert sym_err < 1e-12, f"covariance not symmetric, err = {sym_err}"
    assert err < 5e-3, f"max abs err vs reference = {err}"
    print("KERNEL_OK")
</pallas_src>

<mosaic_0001>
module attributes {stable_mosaic.version = 11 : i64} {
  func.func @_full_cov_kernel(%arg0: i32, %arg1: memref<128x256xf32, #tpu.memory_space<vmem>>, %arg2: memref<1x256xf32, #tpu.memory_space<vmem>>, %arg3: memref<1x256xf32, #tpu.memory_space<vmem>>, %arg4: memref<256x1024xbf16, #tpu.memory_space<vmem>>, %arg5: memref<1x1024xf32, #tpu.memory_space<vmem>>, %arg6: memref<1024x256xbf16, #tpu.memory_space<vmem>>, %arg7: memref<1x256xf32, #tpu.memory_space<vmem>>, %arg8: memref<12x256xf32, #tpu.memory_space<vmem>>, %arg9: memref<12x1xf32, #tpu.memory_space<vmem>>, %arg10: memref<9x128xf32, #tpu.memory_space<vmem>>) attributes {dimension_semantics = [#tpu.dimension_semantics<parallel>], iteration_bounds = array<i64: 1>, scalar_prefetch = 0 : i64, scratch_operands = 0 : i64, tpu.core_type = #tpu.core_type<tc>, window_params = [{transform_indices = @transform_0, window_bounds = array<i64: 128, 256>}, {pipeline_mode = #tpu.pipeline_mode<synchronous>, transform_indices = @transform_1, window_bounds = array<i64: 1, 256>}, {pipeline_mode = #tpu.pipeline_mode<synchronous>, transform_indices = @transform_2, window_bounds = array<i64: 1, 256>}, {pipeline_mode = #tpu.pipeline_mode<synchronous>, transform_indices = @transform_3, window_bounds = array<i64: 256, 1024>}, {pipeline_mode = #tpu.pipeline_mode<synchronous>, transform_indices = @transform_4, window_bounds = array<i64: 1, 1024>}, {pipeline_mode = #tpu.pipeline_mode<synchronous>, transform_indices = @transform_5, window_bounds = array<i64: 1024, 256>}, {pipeline_mode = #tpu.pipeline_mode<synchronous>, transform_indices = @transform_6, window_bounds = array<i64: 1, 256>}, {pipeline_mode = #tpu.pipeline_mode<synchronous>, transform_indices = @transform_7, window_bounds = array<i64: 12, 256>}, {pipeline_mode = #tpu.pipeline_mode<synchronous>, transform_indices = @transform_8, window_bounds = array<i64: 12, 1>}, {transform_indices = @transform_9, window_bounds = array<i64: 9, 128>}]} {
    %c0 = arith.constant 0 : index
    %c0_0 = arith.constant 0 : index
    %0 = vector.load %arg1[%c0, %c0_0] : memref<128x256xf32, #tpu.memory_space<vmem>>, vector<128x256xf32>
    %cst = arith.constant dense<0.000000e+00> : vector<128xf32>
    %1 = vector.multi_reduction <add>, %0, %cst [1] : vector<128x256xf32> to vector<128xf32>
    %2 = vector.shape_cast %1 : vector<128xf32> to vector<128x1xf32>
    %cst_1 = arith.constant 2.560000e+02 : f32
    %3 = vector.broadcast %cst_1 : f32 to vector<128x1xf32>
    %4 = arith.divf %2, %3 : vector<128x1xf32>
    %5 = vector.broadcast %4 : vector<128x1xf32> to vector<128x256xf32>
    %6 = arith.subf %0, %5 : vector<128x256xf32>
    %7 = arith.mulf %6, %6 : vector<128x256xf32>
    %cst_2 = arith.constant dense<0.000000e+00> : vector<128xf32>
    %8 = vector.multi_reduction <add>, %7, %cst_2 [1] : vector<128x256xf32> to vector<128xf32>
    %9 = vector.shape_cast %8 : vector<128xf32> to vector<128x1xf32>
    %cst_3 = arith.constant 2.560000e+02 : f32
    %10 = vector.broadcast %cst_3 : f32 to vector<128x1xf32>
    %11 = arith.divf %9, %10 : vector<128x1xf32>
    %12 = vector.broadcast %4 : vector<128x1xf32> to vector<128x256xf32>
    %13 = arith.subf %0, %12 : vector<128x256xf32>
    %cst_4 = arith.constant 9.99999974E-6 : f32
    %14 = vector.broadcast %cst_4 : f32 to vector<128x1xf32>
    %15 = arith.addf %11, %14 : vector<128x1xf32>
    %16 = math.rsqrt %15 : vector<128x1xf32>
    %17 = vector.broadcast %16 : vector<128x1xf32> to vector<128x256xf32>
    %18 = arith.mulf %13, %17 : vector<128x256xf32>
    %c0_5 = arith.constant 0 : index
    %c0_6 = arith.constant 0 : index
    %19 = vector.load %arg2[%c0_5, %c0_6] : memref<1x256xf32, #tpu.memory_space<vmem>>, vector<1x256xf32>
    %20 = vector.broadcast %19 : vector<1x256xf32> to vector<128x256xf32>
    %21 = arith.mulf %18, %20 : vector<128x256xf32>
    %c0_7 = arith.constant 0 : index
    %c0_8 = arith.constant 0 : index
    %22 = vector.load %arg3[%c0_7, %c0_8] : memref<1x256xf32, #tpu.memory_space<vmem>>, vector<1x256xf32>
    %23 = vector.broadcast %22 : vector<1x256xf32> to vector<128x256xf32>
    %24 = arith.addf %21, %23 : vector<128x256xf32>
    %25 = arith.truncf %24 : vector<128x256xf32> to vector<128x256xbf16>
    %c0_9 = arith.constant 0 : index
    %c0_10 = arith.constant 0 : index
    %26 = vector.load %arg4[%c0_9, %c0_10] : memref<256x1024xbf16, #tpu.memory_space<vmem>>, vector<256x1024xbf16>
    %cst_11 = arith.constant dense<0.000000e+00> : vector<128x1024xf32>
    %27 = tpu.matmul %25, %26, %cst_11 {dimension_numbers = #tpu.dot_dimension_numbers<[1], [0], [0], [1], [0, 0, 1, 1], [], []>} : vector<128x256xbf16>, vector<256x1024xbf16>, vector<128x1024xf32> -> vector<128x1024xf32>
    %c0_12 = arith.constant 0 : index
    %c0_13 = arith.constant 0 : index
    %28 = vector.load %arg5[%c0_12, %c0_13] : memref<1x1024xf32, #tpu.memory_space<vmem>>, vector<1x1024xf32>
    %29 = vector.broadcast %28 : vector<1x1024xf32> to vector<128x1024xf32>
    %30 = arith.addf %27, %29 : vector<128x1024xf32>
    %31 = arith.mulf %30, %30 : vector<128x1024xf32>
    %32 = arith.mulf %30, %31 : vector<128x1024xf32>
    %cst_14 = arith.constant 4.471500e-02 : f32
    %33 = vector.broadcast %cst_14 : f32 to vector<128x1024xf32>
    %34 = arith.mulf %33, %32 : vector<128x1024xf32>
    %35 = arith.addf %30, %34 : vector<128x1024xf32>
    %cst_15 = arith.constant 0.797884583 : f32
    %36 = vector.broadcast %cst_15 : f32 to vector<128x1024xf32>
    %37 = arith.mulf %36, %35 : vector<128x1024xf32>
    %38 = math.tanh %37 : vector<128x1024xf32>
    %cst_16 = arith.constant 1.000000e+00 : f32
    %39 = vector.broadcast %cst_16 : f32 to vector<128x1024xf32>
    %40 = arith.addf %39, %38 : vector<128x1024xf32>
    %cst_17 = arith.constant 5.000000e-01 : f32
    %41 = vector.broadcast %cst_17 : f32 to vector<128x1024xf32>
    %42 = arith.mulf %41, %40 : vector<128x1024xf32>
    %43 = arith.mulf %30, %42 : vector<128x1024xf32>
    %44 = arith.truncf %43 : vector<128x1024xf32> to vector<128x1024xbf16>
    %c0_18 = arith.constant 0 : index
    %c0_19 = arith.constant 0 : index
    %45 = vector.load %arg6[%c0_18, %c0_19] : memref<1024x256xbf16, #tpu.memory_space<vmem>>, vector<1024x256xbf16>
    %cst_20 = arith.constant dense<0.000000e+00> : vector<128x256xf32>
    %46 = tpu.matmul %44, %45, %cst_20 {dimension_numbers = #tpu.dot_dimension_numbers<[1], [0], [0], [1], [0, 0, 1, 1], [], []>} : vector<128x1024xbf16>, vector<1024x256xbf16>, vector<128x256xf32> -> vector<128x256xf32>
    %47 = arith.addf %0, %46 : vector<128x256xf32>
    %c0_21 = arith.constant 0 : index
    %c0_22 = arith.constant 0 : index
    %48 = vector.load %arg7[%c0_21, %c0_22] : memref<1x256xf32, #tpu.memory_space<vmem>>, vector<1x256xf32>
    %49 = vector.broadcast %48 : vector<1x256xf32> to vector<128x256xf32>
    %50 = arith.addf %47, %49 : vector<128x256xf32>
    %c0_23 = arith.constant 0 : index
    %c0_24 = arith.constant 0 : index
    %51 = vector.load %arg8[%c0_23, %c0_24] : memref<12x256xf32, #tpu.memory_space<vmem>>, vector<12x256xf32>
    %cst_25 = arith.constant dense<0.000000e+00> : vector<12x128xf32>
    %52 = tpu.matmul %51, %50, %cst_25 {dimension_numbers = #tpu.dot_dimension_numbers<[1], [1], [0], [0], [0, 0, 1, 0], [], []>} : vector<12x256xf32>, vector<128x256xf32>, vector<12x128xf32> -> vector<12x128xf32>
    %c0_26 = arith.constant 0 : index
    %c0_27 = arith.constant 0 : index
    %53 = vector.load %arg9[%c0_26, %c0_27] : memref<12x1xf32, #tpu.memory_space<vmem>>, vector<12x1xf32>
    %54 = vector.broadcast %53 : vector<12x1xf32> to vector<12x128xf32>
    %55 = arith.addf %52, %54 : vector<12x128xf32>
    %56 = vector.extract_strided_slice %55 {offsets = [0, 0], sizes = [3, 128], strides = [1, 1]} : vector<12x128xf32> to vector<3x128xf32>
    %cst_28 = arith.constant 0.000000e+00 : f32
    %57 = vector.broadcast %cst_28 : f32 to vector<3x128xf32>
    %58 = arith.maximumf %56, %57 : vector<3x128xf32>
    %59 = math.absf %56 : vector<3x128xf32>
    %cst_29 = arith.constant 0.000000e+00 : f32
    %60 = vector.broadcast %cst_29 : f32 to vector<3x128xf32>
    %61 = arith.subf %60, %59 : vector<3x128xf32>
    %62 = math.exp %61 : vector<3x128xf32>
    %cst_30 = arith.constant 1.000000e+00 : f32
    %63 = vector.broadcast %cst_30 : f32 to vector<3x128xf32>
    %64 = arith.addf %63, %62 : vector<3x128xf32>
    %65 = math.log %64 : vector<3x128xf32>
    %66 = arith.addf %58, %65 : vector<3x128xf32>
    %67 = vector.extract_strided_slice %66 {offsets = [0, 0], sizes = [1, 128], strides = [1, 1]} : vector<3x128xf32> to vector<1x128xf32>
    %68 = vector.extract_strided_slice %66 {offsets = [1, 0], sizes = [1, 128], strides = [1, 1]} : vector<3x128xf32> to vector<1x128xf32>
    %69 = vector.extract_strided_slice %66 {offsets = [2, 0], sizes = [1, 128], strides = [1, 1]} : vector<3x128xf32> to vector<1x128xf32>
    %70 = vector.extract_strided_slice %55 {offsets = [3, 0], sizes = [1, 128], strides = [1, 1]} : vector<12x128xf32> to vector<1x128xf32>
    %71 = vector.extract_strided_slice %55 {offsets = [6, 0], sizes = [1, 128], strides = [1, 1]} : vector<12x128xf32> to vector<1x128xf32>
    %72 = vector.extract_strided_slice %55 {offsets = [9, 0], sizes = [1, 128], strides = [1, 1]} : vector<12x128xf32> to vector<1x128xf32>
    %73 = vector.extract_strided_slice %55 {offsets = [4, 0], sizes = [1, 128], strides = [1, 1]} : vector<12x128xf32> to vector<1x128xf32>
    %74 = vector.extract_strided_slice %55 {offsets = [7, 0], sizes = [1, 128], strides = [1, 1]} : vector<12x128xf32> to vector<1x128xf32>
    %75 = vector.extract_strided_slice %55 {offsets = [10, 0], sizes = [1, 128], strides = [1, 1]} : vector<12x128xf32> to vector<1x128xf32>
    %76 = vector.extract_strided_slice %55 {offsets = [5, 0], sizes = [1, 128], strides = [1, 1]} : vector<12x128xf32> to vector<1x128xf32>
    %77 = vector.extract_strided_slice %55 {offsets = [8, 0], sizes = [1, 128], strides = [1, 1]} : vector<12x128xf32> to vector<1x128xf32>
    %78 = vector.extract_strided_slice %55 {offsets = [11, 0], sizes = [1, 128], strides = [1, 1]} : vector<12x128xf32> to vector<1x128xf32>
    %79 = arith.mulf %70, %70 : vector<1x128xf32>
    %80 = arith.mulf %71, %71 : vector<1x128xf32>
    %81 = arith.addf %79, %80 : vector<1x128xf32>
    %82 = arith.mulf %72, %72 : vector<1x128xf32>
    %83 = arith.addf %81, %82 : vector<1x128xf32>
    %cst_31 = arith.constant 9.99999968E-21 : f32
    %84 = vector.broadcast %cst_31 : f32 to vector<1x128xf32>
    %85 = arith.addf %83, %84 : vector<1x128xf32>
    %86 = math.rsqrt %85 : vector<1x128xf32>
    %87 = arith.mulf %70, %86 : vector<1x128xf32>
    %88 = arith.mulf %71, %86 : vector<1x128xf32>
    %89 = arith.mulf %72, %86 : vector<1x128xf32>
    %90 = arith.mulf %87, %73 : vector<1x128xf32>
    %91 = arith.mulf %88, %74 : vector<1x128xf32>
    %92 = arith.addf %90, %91 : vector<1x128xf32>
    %93 = arith.mulf %89, %75 : vector<1x128xf32>
    %94 = arith.addf %92, %93 : vector<1x128xf32>
    %95 = arith.mulf %94, %87 : vector<1x128xf32>
    %96 = arith.subf %73, %95 : vector<1x128xf32>
    %97 = arith.mulf %94, %88 : vector<1x128xf32>
    %98 = arith.subf %74, %97 : vector<1x128xf32>
    %99 = arith.mulf %94, %89 : vector<1x128xf32>
    %100 = arith.subf %75, %99 : vector<1x128xf32>
    %101 = arith.mulf %96, %96 : vector<1x128xf32>
    %102 = arith.mulf %98, %98 : vector<1x128xf32>
    %103 = arith.addf %101, %102 : vector<1x128xf32>
    %104 = arith.mulf %100, %100 : vector<1x128xf32>
    %105 = arith.addf %103, %104 : vector<1x128xf32>
    %cst_32 = arith.constant 9.99999968E-21 : f32
    %106 = vector.broadcast %cst_32 : f32 to vector<1x128xf32>
    %107 = arith.addf %105, %106 : vector<1x128xf32>
    %108 = math.rsqrt %107 : vector<1x128xf32>
    %109 = arith.mulf %96, %108 : vector<1x128xf32>
    %110 = arith.mulf %98, %108 : vector<1x128xf32>
    %111 = arith.mulf %100, %108 : vector<1x128xf32>
    %112 = arith.mulf %87, %76 : vector<1x128xf32>
    %113 = arith.mulf %88, %77 : vector<1x128xf32>
    %114 = arith.addf %112, %113 : vector<1x128xf32>
    %115 = arith.mulf %89, %78 : vector<1x128xf32>
    %116 = arith.addf %114, %115 : vector<1x128xf32>
    %117 = arith.mulf %109, %76 : vector<1x128xf32>
    %118 = arith.mulf %110, %77 : vector<1x128xf32>
    %119 = arith.addf %117, %118 : vector<1x128xf32>
    %120 = arith.mulf %111, %78 : vector<1x128xf32>
    %121 = arith.addf %119, %120 : vector<1x128xf32>
    %122 = arith.mulf %116, %87 : vector<1x128xf32>
    %123 = arith.subf %76, %122 : vector<1x128xf32>
    %124 = arith.mulf %121, %109 : vector<1x128xf32>
    %125 = arith.subf %123, %124 : vector<1x128xf32>
    %126 = arith.mulf %116, %88 : vector<1x128xf32>
    %127 = arith.subf %77, %126 : vector<1x128xf32>
    %128 = arith.mulf %121, %110 : vector<1x128xf32>
    %129 = arith.subf %127, %128 : vector<1x128xf32>
    %130 = arith.mulf %116, %89 : vector<1x128xf32>
    %131 = arith.subf %78, %130 : vector<1x128xf32>
    %132 = arith.mulf %121, %111 : vector<1x128xf32>
    %133 = arith.subf %131, %132 : vector<1x128xf32>
    %134 = arith.mulf %125, %125 : vector<1x128xf32>
    %135 = arith.mulf %129, %129 : vector<1x128xf32>
    %136 = arith.addf %134, %135 : vector<1x128xf32>
    %137 = arith.mulf %133, %133 : vector<1x128xf32>
    %138 = arith.addf %136, %137 : vector<1x128xf32>
    %cst_33 = arith.constant 9.99999968E-21 : f32
    %139 = vector.broadcast %cst_33 : f32 to vector<1x128xf32>
    %140 = arith.addf %138, %139 : vector<1x128xf32>
    %141 = math.rsqrt %140 : vector<1x128xf32>
    %142 = arith.mulf %125, %141 : vector<1x128xf32>
    %143 = arith.mulf %129, %141 : vector<1x128xf32>
    %144 = arith.mulf %133, %141 : vector<1x128xf32>
    %145 = arith.mulf %67, %87 : vector<1x128xf32>
    %146 = arith.mulf %145, %87 : vector<1x128xf32>
    %147 = arith.mulf %68, %109 : vector<1x128xf32>
    %148 = arith.mulf %147, %109 : vector<1x128xf32>
    %149 = arith.addf %146, %148 : vector<1x128xf32>
    %150 = arith.mulf %69, %142 : vector<1x128xf32>
    %151 = arith.mulf %150, %142 : vector<1x128xf32>
    %152 = arith.addf %149, %151 : vector<1x128xf32>
    %cst_34 = arith.constant 9.99999993E-9 : f32
    %153 = vector.broadcast %cst_34 : f32 to vector<1x128xf32>
    %154 = arith.addf %152, %153 : vector<1x128xf32>
    %155 = arith.mulf %67, %87 : vector<1x128xf32>
    %156 = arith.mulf %155, %88 : vector<1x128xf32>
    %157 = arith.mulf %68, %109 : vector<1x128xf32>
    %158 = arith.mulf %157, %110 : vector<1x128xf32>
    %159 = arith.addf %156, %158 : vector<1x128xf32>
    %160 = arith.mulf %69, %142 : vector<1x128xf32>
    %161 = arith.mulf %160, %143 : vector<1x128xf32>
    %162 = arith.addf %159, %161 : vector<1x128xf32>
    %163 = arith.mulf %67, %87 : vector<1x128xf32>
    %164 = arith.mulf %163, %89 : vector<1x128xf32>
    %165 = arith.mulf %68, %109 : vector<1x128xf32>
    %166 = arith.mulf %165, %111 : vector<1x128xf32>
    %167 = arith.addf %164, %166 : vector<1x128xf32>
    %168 = arith.mulf %69, %142 : vector<1x128xf32>
    %169 = arith.mulf %168, %144 : vector<1x128xf32>
    %170 = arith.addf %167, %169 : vector<1x128xf32>
    %171 = arith.mulf %67, %88 : vector<1x128xf32>
    %172 = arith.mulf %171, %88 : vector<1x128xf32>
    %173 = arith.mulf %68, %110 : vector<1x128xf32>
    %174 = arith.mulf %173, %110 : vector<1x128xf32>
    %175 = arith.addf %172, %174 : vector<1x128xf32>
    %176 = arith.mulf %69, %143 : vector<1x128xf32>
    %177 = arith.mulf %176, %143 : vector<1x128xf32>
    %178 = arith.addf %175, %177 : vector<1x128xf32>
    %cst_35 = arith.constant 9.99999993E-9 : f32
    %179 = vector.broadcast %cst_35 : f32 to vector<1x128xf32>
    %180 = arith.addf %178, %179 : vector<1x128xf32>
    %181 = arith.mulf %67, %88 : vector<1x128xf32>
    %182 = arith.mulf %181, %89 : vector<1x128xf32>
    %183 = arith.mulf %68, %110 : vector<1x128xf32>
    %184 = arith.mulf %183, %111 : vector<1x128xf32>
    %185 = arith.addf %182, %184 : vector<1x128xf32>
    %186 = arith.mulf %69, %143 : vector<1x128xf32>
    %187 = arith.mulf %186, %144 : vector<1x128xf32>
    %188 = arith.addf %185, %187 : vector<1x128xf32>
    %189 = arith.mulf %67, %89 : vector<1x128xf32>
    %190 = arith.mulf %189, %89 : vector<1x128xf32>
    %191 = arith.mulf %68, %111 : vector<1x128xf32>
    %192 = arith.mulf %191, %111 : vector<1x128xf32>
    %193 = arith.addf %190, %192 : vector<1x128xf32>
    %194 = arith.mulf %69, %144 : vector<1x128xf32>
    %195 = arith.mulf %194, %144 : vector<1x128xf32>
    %196 = arith.addf %193, %195 : vector<1x128xf32>
    %cst_36 = arith.constant 9.99999993E-9 : f32
    %197 = vector.broadcast %cst_36 : f32 to vector<1x128xf32>
    %198 = arith.addf %196, %197 : vector<1x128xf32>
    %199 = tpu.concatenate %154, %162, %170, %162, %180, %188, %170, %188, %198 in 0 : vector<1x128xf32>, vector<1x128xf32>, vector<1x128xf32>, vector<1x128xf32>, vector<1x128xf32>, vector<1x128xf32>, vector<1x128xf32>, vector<1x128xf32>, vector<1x128xf32> -> vector<9x128xf32>
    %c0_37 = arith.constant 0 : index
    %c0_38 = arith.constant 0 : index
    %200 = vector.load %arg10[%c0_37, %c0_38] : memref<9x128xf32, #tpu.memory_space<vmem>>, vector<9x128xf32>
    tpu.vector_store %arg10[%c0_37, %c0_38], %199 {strides = array<i32>} : memref<9x128xf32, #tpu.memory_space<vmem>>, vector<9x128xf32>,
    return
  }
  func.func @transform_0(%arg0: i32) -> (i32, i32) {
    %c0_i32 = arith.constant 0 : i32
    %c0_i32_0 = arith.constant 0 : i32
    return %arg0, %c0_i32 : i32, i32
  }
  func.func @transform_1(%arg0: i32) -> (i32, i32) {
    %c0_i32 = arith.constant 0 : i32
    %c0_i32_0 = arith.constant 0 : i32
    %c0_i32_1 = arith.constant 0 : i32
    return %c0_i32, %c0_i32_0 : i32, i32
  }
  func.func @transform_2(%arg0: i32) -> (i32, i32) {
    %c0_i32 = arith.constant 0 : i32
    %c0_i32_0 = arith.constant 0 : i32
    %c0_i32_1 = arith.constant 0 : i32
    return %c0_i32, %c0_i32_0 : i32, i32
  }
  func.func @transform_3(%arg0: i32) -> (i32, i32) {
    %c0_i32 = arith.constant 0 : i32
    %c0_i32_0 = arith.constant 0 : i32
    %c0_i32_1 = arith.constant 0 : i32
    return %c0_i32, %c0_i32_0 : i32, i32
  }
  func.func @transform_4(%arg0: i32) -> (i32, i32) {
    %c0_i32 = arith.constant 0 : i32
    %c0_i32_0 = arith.constant 0 : i32
    %c0_i32_1 = arith.constant 0 : i32
    return %c0_i32, %c0_i32_0 : i32, i32
  }
  func.func @transform_5(%arg0: i32) -> (i32, i32) {
    %c0_i32 = arith.constant 0 : i32
    %c0_i32_0 = arith.constant 0 : i32
    %c0_i32_1 = arith.constant 0 : i32
    return %c0_i32, %c0_i32_0 : i32, i32
  }
  func.func @transform_6(%arg0: i32) -> (i32, i32) {
    %c0_i32 = arith.constant 0 : i32
    %c0_i32_0 = arith.constant 0 : i32
    %c0_i32_1 = arith.constant 0 : i32
    return %c0_i32, %c0_i32_0 : i32, i32
  }
  func.func @transform_7(%arg0: i32) -> (i32, i32) {
    %c0_i32 = arith.constant 0 : i32
    %c0_i32_0 = arith.constant 0 : i32
    %c0_i32_1 = arith.constant 0 : i32
    return %c0_i32, %c0_i32_0 : i32, i32
  }
  func.func @transform_8(%arg0: i32) -> (i32, i32) {
    %c0_i32 = arith.constant 0 : i32
    %c0_i32_0 = arith.constant 0 : i32
    %c0_i32_1 = arith.constant 0 : i32
    return %c0_i32, %c0_i32_0 : i32, i32
  }
  func.func @transform_9(%arg0: i32) -> (i32, i32) {
    %c0_i32 = arith.constant 0 : i32
    %c0_i32_0 = arith.constant 0 : i32
    return %c0_i32, %arg0 : i32, i32
  }
}

</mosaic_0001>

<llo_original>
// kernel: full_cov_predict.1
$region0: #{full_cov_predict.1}
  #allocation0 [shape = 'u32[]', space=smem, size = 0x4, offset = 0x4, fixed_abs, tag = 'smem constant byte address 0x4 - core index']
  #allocation1 [shape = 'u32[72,128]{1,0:T(1,128)}', space=vmem, size = 0x9000, scoped, tag = 'internal scratch']
  %s0 = inlined_call_operand.vmem [shape: f32[128,256], index: 0, kind: input, shape index: {}]
  %s1 = inlined_call_operand.vmem [shape: f32[1,256], index: 1, kind: input, shape index: {}]
  %s2 = inlined_call_operand.vmem [shape: f32[1,256], index: 2, kind: input, shape index: {}]
  %s3 = inlined_call_operand.vmem [shape: bf16[256,1024], index: 3, kind: input, shape index: {}]
  %s4 = inlined_call_operand.vmem [shape: f32[1,1024], index: 4, kind: input, shape index: {}]
  %s5 = inlined_call_operand.vmem [shape: bf16[1024,256], index: 5, kind: input, shape index: {}]
  %s6 = inlined_call_operand.vmem [shape: f32[1,256], index: 6, kind: input, shape index: {}]
  %s7 = inlined_call_operand.vmem [shape: f32[12,256], index: 7, kind: input, shape index: {}]
  %s8 = inlined_call_operand.vmem [shape: f32[12,1], index: 8, kind: input, shape index: {}]
  %s9 = inlined_call_operand.vmem [shape: f32[9,128], index: 9, kind: output, shape index: {}]
  %s10 = sld [smem:[#allocation0]]
  $region46: #{full_cov_predict.1} parent=0
    _
  %s12 = ssub.s32 1, %s10
  %s13 = scalar_select 0, %s12, %s10
  // Predicated region
  $region2: #{full_cov_predict.1} parent=0 // pred_check
    _
  $region3: #{full_cov_predict.1} parent=0 // pred_check_branch
    %15 = sbr.rel (0) target = $region5
  $region4: #{full_cov_predict.1} parent=0 // pred_region
    _
  $region5: #{full_cov_predict.1} parent=0 // pred_fallthru
    _
  // Predicated region
  $region6: #{full_cov_predict.1} parent=0 // pred_check
    _
  $region7: #{full_cov_predict.1} parent=0 // pred_check_branch
    %17 = sbr.rel (0) target = $region9
  $region8: #{full_cov_predict.1} parent=0 // pred_region
    _
  $region9: #{full_cov_predict.1} parent=0 // pred_fallthru
    _
  // Predicated region
  $region10: #{full_cov_predict.1} parent=0 // pred_check
    _
  $region11: #{full_cov_predict.1} parent=0 // pred_check_branch
    %19 = sbr.rel (0) target = $region13
  $region12: #{full_cov_predict.1} parent=0 // pred_region
    _
  $region13: #{full_cov_predict.1} parent=0 // pred_fallthru
    _
  // Predicated region
  $region14: #{full_cov_predict.1} parent=0 // pred_check
    _
  $region15: #{full_cov_predict.1} parent=0 // pred_check_branch
    %21 = sbr.rel (0) target = $region17
  $region16: #{full_cov_predict.1} parent=0 // pred_region
    _
  $region17: #{full_cov_predict.1} parent=0 // pred_fallthru
    _
  // Predicated region
  $region18: #{full_cov_predict.1} parent=0 // pred_check
    _
  $region19: #{full_cov_predict.1} parent=0 // pred_check_branch
    %23 = sbr.rel (0) target = $region21
  $region20: #{full_cov_predict.1} parent=0 // pred_region
    _
  $region21: #{full_cov_predict.1} parent=0 // pred_fallthru
    _
  // Predicated region
  $region22: #{full_cov_predict.1} parent=0 // pred_check
    _
  $region23: #{full_cov_predict.1} parent=0 // pred_check_branch
    %25 = sbr.rel (0) target = $region25
  $region24: #{full_cov_predict.1} parent=0 // pred_region
    _
  $region25: #{full_cov_predict.1} parent=0 // pred_fallthru
    _
  // Predicated region
  $region26: #{full_cov_predict.1} parent=0 // pred_check
    _
  $region27: #{full_cov_predict.1} parent=0 // pred_check_branch
    %27 = sbr.rel (0) target = $region29
  $region28: #{full_cov_predict.1} parent=0 // pred_region
    _
  $region29: #{full_cov_predict.1} parent=0 // pred_fallthru
    _
  // Predicated region
  $region30: #{full_cov_predict.1} parent=0 // pred_check
    _
  $region31: #{full_cov_predict.1} parent=0 // pred_check_branch
    %29 = sbr.rel (0) target = $region33
  $region32: #{full_cov_predict.1} parent=0 // pred_region
    _
  $region33: #{full_cov_predict.1} parent=0 // pred_fallthru
    _
  // Predicated region
  $region34: #{full_cov_predict.1} parent=0 // pred_check
    _
  $region35: #{full_cov_predict.1} parent=0 // pred_check_branch
    %31 = sbr.rel (0) target = $region37
  $region36: #{full_cov_predict.1} parent=0 // pred_region
    _
  $region37: #{full_cov_predict.1} parent=0 // pred_fallthru
    _
  %v32 = vld [vmem:[%s0] sm:$0xff]
  %v33 = vld [vmem:[%s0 + $0x8] sm:$0xff]
  %v34 = vld [vmem:[%s0 + $0x10] sm:$0xff]
  %v35 = vld [vmem:[%s0 + $0x18] sm:$0xff]
  %v36 = vld [vmem:[%s0 + $0x20] sm:$0xff]
  %v37 = vld [vmem:[%s0 + $0x28] sm:$0xff]
  %v38 = vld [vmem:[%s0 + $0x30] sm:$0xff]
  %v39 = vld [vmem:[%s0 + $0x38] sm:$0xff]
  %v40 = vld [vmem:[%s0 + $0x40] sm:$0xff]
  %v41 = vld [vmem:[%s0 + $0x48] sm:$0xff]
  %v42 = vld [vmem:[%s0 + $0x50] sm:$0xff]
  %v43 = vld [vmem:[%s0 + $0x58] sm:$0xff]
  %v44 = vld [vmem:[%s0 + $0x60] sm:$0xff]
  %v45 = vld [vmem:[%s0 + $0x68] sm:$0xff]
  %v46 = vld [vmem:[%s0 + $0x70] sm:$0xff]
  %v47 = vld [vmem:[%s0 + $0x78] sm:$0xff]
  %v48 = vld [vmem:[%s0 + $0x80] sm:$0xff]
  %v49 = vld [vmem:[%s0 + $0x88] sm:$0xff]
  %v50 = vld [vmem:[%s0 + $0x90] sm:$0xff]
  %v51 = vld [vmem:[%s0 + $0x98] sm:$0xff]
  %v52 = vld [vmem:[%s0 + $0xa0] sm:$0xff]
  %v53 = vld [vmem:[%s0 + $0xa8] sm:$0xff]
  %v54 = vld [vmem:[%s0 + $0xb0] sm:$0xff]
  %v55 = vld [vmem:[%s0 + $0xb8] sm:$0xff]
  %v56 = vld [vmem:[%s0 + $0xc0] sm:$0xff]
  %v57 = vld [vmem:[%s0 + $0xc8] sm:$0xff]
  %v58 = vld [vmem:[%s0 + $0xd0] sm:$0xff]
  %v59 = vld [vmem:[%s0 + $0xd8] sm:$0xff]
  %v60 = vld [vmem:[%s0 + $0xe0] sm:$0xff]
  %v61 = vld [vmem:[%s0 + $0xe8] sm:$0xff]
  %v62 = vld [vmem:[%s0 + $0xf0] sm:$0xff]
  %v63 = vld [vmem:[%s0 + $0xf8] sm:$0xff]
  %v64 = vadd.f32 %v32, %v33
  %65 = vadd.xlane.f32.xlu0 %v64
  %v66 = vpop.xlane.xlu0 %65
  %v67 = vadd.f32 %v34, %v35
  %68 = vadd.xlane.f32.xlu0 %v67
  %v69 = vpop.xlane.xlu0 %68
  %v70 = vadd.f32 %v36, %v37
  %71 = vadd.xlane.f32.xlu0 %v70
  %v72 = vpop.xlane.xlu0 %71
  %v73 = vadd.f32 %v38, %v39
  %74 = vadd.xlane.f32.xlu0 %v73
  %v75 = vpop.xlane.xlu0 %74
  %v76 = vadd.f32 %v40, %v41
  %77 = vadd.xlane.f32.xlu0 %v76
  %v78 = vpop.xlane.xlu0 %77
  %v79 = vadd.f32 %v42, %v43
  %80 = vadd.xlane.f32.xlu0 %v79
  %v81 = vpop.xlane.xlu0 %80
  %v82 = vadd.f32 %v44, %v45
  %83 = vadd.xlane.f32.xlu0 %v82
  %v84 = vpop.xlane.xlu0 %83
  %v85 = vadd.f32 %v46, %v47
  %86 = vadd.xlane.f32.xlu0 %v85
  %v87 = vpop.xlane.xlu0 %86
  %v88 = vadd.f32 %v48, %v49
  %89 = vadd.xlane.f32.xlu0 %v88
  %v90 = vpop.xlane.xlu0 %89
  %v91 = vadd.f32 %v50, %v51
  %92 = vadd.xlane.f32.xlu0 %v91
  %v93 = vpop.xlane.xlu0 %92
  %v94 = vadd.f32 %v52, %v53
  %95 = vadd.xlane.f32.xlu0 %v94
  %v96 = vpop.xlane.xlu0 %95
  %v97 = vadd.f32 %v54, %v55
  %98 = vadd.xlane.f32.xlu0 %v97
  %v99 = vpop.xlane.xlu0 %98
  %v100 = vadd.f32 %v56, %v57
  %101 = vadd.xlane.f32.xlu0 %v100
  %v102 = vpop.xlane.xlu0 %101
  %v103 = vadd.f32 %v58, %v59
  %104 = vadd.xlane.f32.xlu0 %v103
  %v105 = vpop.xlane.xlu0 %104
  %v106 = vadd.f32 %v60, %v61
  %107 = vadd.xlane.f32.xlu0 %v106
  %v108 = vpop.xlane.xlu0 %107
  %v109 = vadd.f32 %v62, %v63
  %110 = vadd.xlane.f32.xlu0 %v109
  %v111 = vpop.xlane.xlu0 %110
  %v112 = vrcp.pop 256.0
  %v113 = vmul.f32 256.0, %v112
  %v114 = vsub.f32 1.0, %v113
  %v115 = vmul.f32 %v112, %v114
  %v116 = vadd.f32 %v112, %v115
  %vm117 = vweird.f32 %v112
  %v118 = vsel %vm117, %v112, %v116
  %v119 = vmul.f32 %v66, %v118
  %v120 = vmul.f32 %v69, %v118
  %v121 = vmul.f32 %v72, %v118
  %v122 = vmul.f32 %v75, %v118
  %v123 = vmul.f32 %v78, %v118
  %v124 = vmul.f32 %v81, %v118
  %v125 = vmul.f32 %v84, %v118
  %v126 = vmul.f32 %v87, %v118
  %v127 = vmul.f32 %v90, %v118
  %v128 = vmul.f32 %v93, %v118
  %v129 = vmul.f32 %v96, %v118
  %v130 = vmul.f32 %v99, %v118
  %v131 = vmul.f32 %v102, %v118
  %v132 = vmul.f32 %v105, %v118
  %v133 = vmul.f32 %v108, %v118
  %v134 = vmul.f32 %v111, %v118
  %v135 = vsub.f32 %v32, %v119
  %v136 = vsub.f32 %v33, %v119
  %v137 = vsub.f32 %v34, %v120
  %v138 = vsub.f32 %v35, %v120
  %v139 = vsub.f32 %v36, %v121
  %v140 = vsub.f32 %v37, %v121
  %v141 = vsub.f32 %v38, %v122
  %v142 = vsub.f32 %v39, %v122
  %v143 = vsub.f32 %v40, %v123
  %v144 = vsub.f32 %v41, %v123
  %v145 = vsub.f32 %v42, %v124
  %v146 = vsub.f32 %v43, %v124
  %v147 = vsub.f32 %v44, %v125
  %v148 = vsub.f32 %v45, %v125
  %v149 = vsub.f32 %v46, %v126
  %v150 = vsub.f32 %v47, %v126
  %v151 = vsub.f32 %v48, %v127
  %v152 = vsub.f32 %v49, %v127
  %v153 = vsub.f32 %v50, %v128
  %v154 = vsub.f32 %v51, %v128
  %v155 = vsub.f32 %v52, %v129
  %v156 = vsub.f32 %v53, %v129
  %v157 = vsub.f32 %v54, %v130
  %v158 = vsub.f32 %v55, %v130
  %v159 = vsub.f32 %v56, %v131
  %v160 = vsub.f32 %v57, %v131
  %v161 = vsub.f32 %v58, %v132
  %v162 = vsub.f32 %v59, %v132
  %v163 = vsub.f32 %v60, %v133
  %v164 = vsub.f32 %v61, %v133
  %v165 = vsub.f32 %v62, %v134
  %v166 = vsub.f32 %v63, %v134
  %v167 = vmul.f32 %v135, %v135
  %v168 = vmul.f32 %v136, %v136
  %v169 = vmul.f32 %v137, %v137
  %v170 = vmul.f32 %v138, %v138
  %v171 = vmul.f32 %v139, %v139
  %v172 = vmul.f32 %v140, %v140
  %v173 = vmul.f32 %v141, %v141
  %v174 = vmul.f32 %v142, %v142
  %v175 = vmul.f32 %v143, %v143
  %v176 = vmul.f32 %v144, %v144
  %v177 = vmul.f32 %v145, %v145
  %v178 = vmul.f32 %v146, %v146
  %v179 = vmul.f32 %v147, %v147
  %v180 = vmul.f32 %v148, %v148
  %v181 = vmul.f32 %v149, %v149
  %v182 = vmul.f32 %v150, %v150
  %v183 = vmul.f32 %v151, %v151
  %v184 = vmul.f32 %v152, %v152
  %v185 = vmul.f32 %v153, %v153
  %v186 = vmul.f32 %v154, %v154
  %v187 = vmul.f32 %v155, %v155
  %v188 = vmul.f32 %v156, %v156
  %v189 = vmul.f32 %v157, %v157
  %v190 = vmul.f32 %v158, %v158
  %v191 = vmul.f32 %v159, %v159
  %v192 = vmul.f32 %v160, %v160
  %v193 = vmul.f32 %v161, %v161
  %v194 = vmul.f32 %v162, %v162
  %v195 = vmul.f32 %v163, %v163
  %v196 = vmul.f32 %v164, %v164
  %v197 = vmul.f32 %v165, %v165
  %v198 = vmul.f32 %v166, %v166
  %v199 = vadd.f32 %v167, %v168
  %200 = vadd.xlane.f32.xlu0 %v199
  %v201 = vpop.xlane.xlu0 %200
  %v202 = vadd.f32 %v169, %v170
  %203 = vadd.xlane.f32.xlu0 %v202
  %v204 = vpop.xlane.xlu0 %203
  %v205 = vadd.f32 %v171, %v172
  %206 = vadd.xlane.f32.xlu0 %v205
  %v207 = vpop.xlane.xlu0 %206
  %v208 = vadd.f32 %v173, %v174
  %209 = vadd.xlane.f32.xlu0 %v208
  %v210 = vpop.xlane.xlu0 %209
  %v211 = vadd.f32 %v175, %v176
  %212 = vadd.xlane.f32.xlu0 %v211
  %v213 = vpop.xlane.xlu0 %212
  %v214 = vadd.f32 %v177, %v178
  %215 = vadd.xlane.f32.xlu0 %v214
  %v216 = vpop.xlane.xlu0 %215
  %v217 = vadd.f32 %v179, %v180
  %218 = vadd.xlane.f32.xlu0 %v217
  %v219 = vpop.xlane.xlu0 %218
  %v220 = vadd.f32 %v181, %v182
  %221 = vadd.xlane.f32.xlu0 %v220
  %v222 = vpop.xlane.xlu0 %221
  %v223 = vadd.f32 %v183, %v184
  %224 = vadd.xlane.f32.xlu0 %v223
  %v225 = vpop.xlane.xlu0 %224
  %v226 = vadd.f32 %v185, %v186
  %227 = vadd.xlane.f32.xlu0 %v226
  %v228 = vpop.xlane.xlu0 %227
  %v229 = vadd.f32 %v187, %v188
  %230 = vadd.xlane.f32.xlu0 %v229
  %v231 = vpop.xlane.xlu0 %230
  %v232 = vadd.f32 %v189, %v190
  %233 = vadd.xlane.f32.xlu0 %v232
  %v234 = vpop.xlane.xlu0 %233
  %v235 = vadd.f32 %v191, %v192
  %236 = vadd.xlane.f32.xlu0 %v235
  %v237 = vpop.xlane.xlu0 %236
  %v238 = vadd.f32 %v193, %v194
  %239 = vadd.xlane.f32.xlu0 %v238
  %v240 = vpop.xlane.xlu0 %239
  %v241 = vadd.f32 %v195, %v196
  %242 = vadd.xlane.f32.xlu0 %v241
  %v243 = vpop.xlane.xlu0 %242
  %v244 = vadd.f32 %v197, %v198
  %245 = vadd.xlane.f32.xlu0 %v244
  %v246 = vpop.xlane.xlu0 %245
  %v247 = vmul.f32 %v201, %v118
  %v248 = vmul.f32 %v204, %v118
  %v249 = vmul.f32 %v207, %v118
  %v250 = vmul.f32 %v210, %v118
  %v251 = vmul.f32 %v213, %v118
  %v252 = vmul.f32 %v216, %v118
  %v253 = vmul.f32 %v219, %v118
  %v254 = vmul.f32 %v222, %v118
  %v255 = vmul.f32 %v225, %v118
  %v256 = vmul.f32 %v228, %v118
  %v257 = vmul.f32 %v231, %v118
  %v258 = vmul.f32 %v234, %v118
  %v259 = vmul.f32 %v237, %v118
  %v260 = vmul.f32 %v240, %v118
  %v261 = vmul.f32 %v243, %v118
  %v262 = vmul.f32 %v246, %v118
  %v263 = vadd.f32 %v247, 1e-05
  %v264 = vadd.f32 %v248, 1e-05
  %v265 = vadd.f32 %v249, 1e-05
  %v266 = vadd.f32 %v250, 1e-05
  %v267 = vadd.f32 %v251, 1e-05
  %v268 = vadd.f32 %v252, 1e-05
  %v269 = vadd.f32 %v253, 1e-05
  %v270 = vadd.f32 %v254, 1e-05
  %v271 = vadd.f32 %v255, 1e-05
  %v272 = vadd.f32 %v256, 1e-05
  %v273 = vadd.f32 %v257, 1e-05
  %v274 = vadd.f32 %v258, 1e-05
  %v275 = vadd.f32 %v259, 1e-05
  %v276 = vadd.f32 %v260, 1e-05
  %v277 = vadd.f32 %v261, 1e-05
  %v278 = vadd.f32 %v262, 1e-05
  %v279 = vrsqrt.pop %v263
  %v280 = vmul.f32 %v279, %v263
  %v281 = vmul.f32 %v280, %v279
  %v282 = vmul.f32 0.5, %v281
  %v283 = vsub.f32 1.5, %v282
  %v284 = vmul.f32 %v279, %v283
  %vm285 = vweird.f32 %v263
  %vm286 = vweird.f32 %v279
  %vm287 = vmor %vm285, %vm286
  %v288 = vsel %vm287, %v279, %v284
  %v289 = vrsqrt.pop %v264
  %v290 = vmul.f32 %v289, %v264
  %v291 = vmul.f32 %v290, %v289
  %v292 = vmul.f32 0.5, %v291
  %v293 = vsub.f32 1.5, %v292
  %v294 = vmul.f32 %v289, %v293
  %vm295 = vweird.f32 %v264
  %vm296 = vweird.f32 %v289
  %vm297 = vmor %vm295, %vm296
  %v298 = vsel %vm297, %v289, %v294
  %v299 = vrsqrt.pop %v265
  %v300 = vmul.f32 %v299, %v265
  %v301 = vmul.f32 %v300, %v299
  %v302 = vmul.f32 0.5, %v301
  %v303 = vsub.f32 1.5, %v302
  %v304 = vmul.f32 %v299, %v303
  %vm305 = vweird.f32 %v265
  %vm306 = vweird.f32 %v299
  %vm307 = vmor %vm305, %vm306
  %v308 = vsel %vm307, %v299, %v304
  %v309 = vrsqrt.pop %v266
  %v310 = vmul.f32 %v309, %v266
  %v311 = vmul.f32 %v310, %v309
  %v312 = vmul.f32 0.5, %v311
  %v313 = vsub.f32 1.5, %v312
  %v314 = vmul.f32 %v309, %v313
  %vm315 = vweird.f32 %v266
  %vm316 = vweird.f32 %v309
  %vm317 = vmor %vm315, %vm316
  %v318 = vsel %vm317, %v309, %v314
  %v319 = vrsqrt.pop %v267
  %v320 = vmul.f32 %v319, %v267
  %v321 = vmul.f32 %v320, %v319
  %v322 = vmul.f32 0.5, %v321
  %v323 = vsub.f32 1.5, %v322
  %v324 = vmul.f32 %v319, %v323
  %vm325 = vweird.f32 %v267
  %vm326 = vweird.f32 %v319
  %vm327 = vmor %vm325, %vm326
  %v328 = vsel %vm327, %v319, %v324
  %v329 = vrsqrt.pop %v268
  %v330 = vmul.f32 %v329, %v268
  %v331 = vmul.f32 %v330, %v329
  %v332 = vmul.f32 0.5, %v331
  %v333 = vsub.f32 1.5, %v332
  %v334 = vmul.f32 %v329, %v333
  %vm335 = vweird.f32 %v268
  %vm336 = vweird.f32 %v329
  %vm337 = vmor %vm335, %vm336
  %v338 = vsel %vm337, %v329, %v334
  %v339 = vrsqrt.pop %v269
  %v340 = vmul.f32 %v339, %v269
  %v341 = vmul.f32 %v340, %v339
  %v342 = vmul.f32 0.5, %v341
  %v343 = vsub.f32 1.5, %v342
  %v344 = vmul.f32 %v339, %v343
  %vm345 = vweird.f32 %v269
  %vm346 = vweird.f32 %v339
  %vm347 = vmor %vm345, %vm346
  %v348 = vsel %vm347, %v339, %v344
  %v349 = vrsqrt.pop %v270
  %v350 = vmul.f32 %v349, %v270
  %v351 = vmul.f32 %v350, %v349
  %v352 = vmul.f32 0.5, %v351
  %v353 = vsub.f32 1.5, %v352
  %v354 = vmul.f32 %v349, %v353
  %vm355 = vweird.f32 %v270
  %vm356 = vweird.f32 %v349
  %vm357 = vmor %vm355, %vm356
  %v358 = vsel %vm357, %v349, %v354
  %v359 = vrsqrt.pop %v271
  %v360 = vmul.f32 %v359, %v271
  %v361 = vmul.f32 %v360, %v359
  %v362 = vmul.f32 0.5, %v361
  %v363 = vsub.f32 1.5, %v362
  %v364 = vmul.f32 %v359, %v363
  %vm365 = vweird.f32 %v271
  %vm366 = vweird.f32 %v359
  %vm367 = vmor %vm365, %vm366
  %v368 = vsel %vm367, %v359, %v364
  %v369 = vrsqrt.pop %v272
  %v370 = vmul.f32 %v369, %v272
  %v371 = vmul.f32 %v370, %v369
  %v372 = vmul.f32 0.5, %v371
  %v373 = vsub.f32 1.5, %v372
  %v374 = vmul.f32 %v369, %v373
  %vm375 = vweird.f32 %v272
  %vm376 = vweird.f32 %v369
  %vm377 = vmor %vm375, %vm376
  %v378 = vsel %vm377, %v369, %v374
  %v379 = vrsqrt.pop %v273
  %v380 = vmul.f32 %v379, %v273
  %v381 = vmul.f32 %v380, %v379
  %v382 = vmul.f32 0.5, %v381
  %v383 = vsub.f32 1.5, %v382
  %v384 = vmul.f32 %v379, %v383
  %vm385 = vweird.f32 %v273
  %vm386 = vweird.f32 %v379
  %vm387 = vmor %vm385, %vm386
  %v388 = vsel %vm387, %v379, %v384
  %v389 = vrsqrt.pop %v274
  %v390 = vmul.f32 %v389, %v274
  %v391 = vmul.f32 %v390, %v389
  %v392 = vmul.f32 0.5, %v391
  %v393 = vsub.f32 1.5, %v392
  %v394 = vmul.f32 %v389, %v393
  %vm395 = vweird.f32 %v274
  %vm396 = vweird.f32 %v389
  %vm397 = vmor %vm395, %vm396
  %v398 = vsel %vm397, %v389, %v394
  %v399 = vrsqrt.pop %v275
  %v400 = vmul.f32 %v399, %v275
  %v401 = vmul.f32 %v400, %v399
  %v402 = vmul.f32 0.5, %v401
  %v403 = vsub.f32 1.5, %v402
  %v404 = vmul.f32 %v399, %v403
  %vm405 = vweird.f32 %v275
  %vm406 = vweird.f32 %v399
  %vm407 = vmor %vm405, %vm406
  %v408 = vsel %vm407, %v399, %v404
  %v409 = vrsqrt.pop %v276
  %v410 = vmul.f32 %v409, %v276
  %v411 = vmul.f32 %v410, %v409
  %v412 = vmul.f32 0.5, %v411
  %v413 = vsub.f32 1.5, %v412
  %v414 = vmul.f32 %v409, %v413
  %vm415 = vweird.f32 %v276
  %vm416 = vweird.f32 %v409
  %vm417 = vmor %vm415, %vm416
  %v418 = vsel %vm417, %v409, %v414
  %v419 = vrsqrt.pop %v277
  %v420 = vmul.f32 %v419, %v277
  %v421 = vmul.f32 %v420, %v419
  %v422 = vmul.f32 0.5, %v421
  %v423 = vsub.f32 1.5, %v422
  %v424 = vmul.f32 %v419, %v423
  %vm425 = vweird.f32 %v277
  %vm426 = vweird.f32 %v419
  %vm427 = vmor %vm425, %vm426
  %v428 = vsel %vm427, %v419, %v424
  %v429 = vrsqrt.pop %v278
  %v430 = vmul.f32 %v429, %v278
  %v431 = vmul.f32 %v430, %v429
  %v432 = vmul.f32 0.5, %v431
  %v433 = vsub.f32 1.5, %v432
  %v434 = vmul.f32 %v429, %v433
  %vm435 = vweird.f32 %v278
  %vm436 = vweird.f32 %v429
  %vm437 = vmor %vm435, %vm436
  %v438 = vsel %vm437, %v429, %v434
  %v439 = vmul.f32 %v135, %v288
  %v440 = vmul.f32 %v136, %v288
  %v441 = vmul.f32 %v137, %v298
  %v442 = vmul.f32 %v138, %v298
  %v443 = vmul.f32 %v139, %v308
  %v444 = vmul.f32 %v140, %v308
  %v445 = vmul.f32 %v141, %v318
  %v446 = vmul.f32 %v142, %v318
  %v447 = vmul.f32 %v143, %v328
  %v448 = vmul.f32 %v144, %v328
  %v449 = vmul.f32 %v145, %v338
  %v450 = vmul.f32 %v146, %v338
  %v451 = vmul.f32 %v147, %v348
  %v452 = vmul.f32 %v148, %v348
  %v453 = vmul.f32 %v149, %v358
  %v454 = vmul.f32 %v150, %v358
  %v455 = vmul.f32 %v151, %v368
  %v456 = vmul.f32 %v152, %v368
  %v457 = vmul.f32 %v153, %v378
  %v458 = vmul.f32 %v154, %v378
  %v459 = vmul.f32 %v155, %v388
  %v460 = vmul.f32 %v156, %v388
  %v461 = vmul.f32 %v157, %v398
  %v462 = vmul.f32 %v158, %v398
  %v463 = vmul.f32 %v159, %v408
  %v464 = vmul.f32 %v160, %v408
  %v465 = vmul.f32 %v161, %v418
  %v466 = vmul.f32 %v162, %v418
  %v467 = vmul.f32 %v163, %v428
  %v468 = vmul.f32 %v164, %v428
  %v469 = vmul.f32 %v165, %v438
  %v470 = vmul.f32 %v166, %v438
  %v471 = vld [vmem:[%s1] sm:$0x3]
  %v473 = vperm.slane %v471, 0
  %v474 = vperm.slane %v471, 1
  %v477 = vmul.f32 %v439, %v473
  %v478 = vmul.f32 %v440, %v474
  %v479 = vmul.f32 %v441, %v473
  %v480 = vmul.f32 %v442, %v474
  %v481 = vmul.f32 %v443, %v473
  %v482 = vmul.f32 %v444, %v474
  %v483 = vmul.f32 %v445, %v473
  %v484 = vmul.f32 %v446, %v474
  %v485 = vmul.f32 %v447, %v473
  %v486 = vmul.f32 %v448, %v474
  %v487 = vmul.f32 %v449, %v473
  %v488 = vmul.f32 %v450, %v474
  %v489 = vmul.f32 %v451, %v473
  %v490 = vmul.f32 %v452, %v474
  %v491 = vmul.f32 %v453, %v473
  %v492 = vmul.f32 %v454, %v474
  %v493 = vmul.f32 %v455, %v473
  %v494 = vmul.f32 %v456, %v474
  %v495 = vmul.f32 %v457, %v473
  %v496 = vmul.f32 %v458, %v474
  %v497 = vmul.f32 %v459, %v473
  %v498 = vmul.f32 %v460, %v474
  %v499 = vmul.f32 %v461, %v473
  %v500 = vmul.f32 %v462, %v474
  %v501 = vmul.f32 %v463, %v473
  %v502 = vmul.f32 %v464, %v474
  %v503 = vmul.f32 %v465, %v473
  %v504 = vmul.f32 %v466, %v474
  %v505 = vmul.f32 %v467, %v473
  %v506 = vmul.f32 %v468, %v474
  %v507 = vmul.f32 %v469, %v473
  %v508 = vmul.f32 %v470, %v474
  %v509 = vld [vmem:[%s2] sm:$0x3]
  %v511 = vperm.slane %v509, 0
  %v512 = vperm.slane %v509, 1
  %v515 = vadd.f32 %v477, %v511
  %v516 = vadd.f32 %v478, %v512
  %v517 = vadd.f32 %v479, %v511
  %v518 = vadd.f32 %v480, %v512
  %v519 = vadd.f32 %v481, %v511
  %v520 = vadd.f32 %v482, %v512
  %v521 = vadd.f32 %v483, %v511
  %v522 = vadd.f32 %v484, %v512
  %v523 = vadd.f32 %v485, %v511
  %v524 = vadd.f32 %v486, %v512
  %v525 = vadd.f32 %v487, %v511
  %v526 = vadd.f32 %v488, %v512
  %v527 = vadd.f32 %v489, %v511
  %v528 = vadd.f32 %v490, %v512
  %v529 = vadd.f32 %v491, %v511
  %v530 = vadd.f32 %v492, %v512
  %v531 = vadd.f32 %v493, %v511
  %v532 = vadd.f32 %v494, %v512
  %v533 = vadd.f32 %v495, %v511
  %v534 = vadd.f32 %v496, %v512
  %v535 = vadd.f32 %v497, %v511
  %v536 = vadd.f32 %v498, %v512
  %v537 = vadd.f32 %v499, %v511
  %v538 = vadd.f32 %v500, %v512
  %v539 = vadd.f32 %v501, %v511
  %v540 = vadd.f32 %v502, %v512
  %v541 = vadd.f32 %v503, %v511
  %v542 = vadd.f32 %v504, %v512
  %v543 = vadd.f32 %v505, %v511
  %v544 = vadd.f32 %v506, %v512
  %v545 = vadd.f32 %v507, %v511
  %v546 = vadd.f32 %v508, %v512
  %v547 = vpack.c.bf16 %v517, %v515
  %v548 = vpack.c.bf16 %v518, %v516
  %v549 = vpack.c.bf16 %v521, %v519
  %v550 = vpack.c.bf16 %v522, %v520
  %v551 = vpack.c.bf16 %v525, %v523
  %v552 = vpack.c.bf16 %v526, %v524
  %v553 = vpack.c.bf16 %v529, %v527
  %v554 = vpack.c.bf16 %v530, %v528
  %v555 = vpack.c.bf16 %v533, %v531
  %v556 = vpack.c.bf16 %v534, %v532
  %v557 = vpack.c.bf16 %v537, %v535
  %v558 = vpack.c.bf16 %v538, %v536
  %v559 = vpack.c.bf16 %v541, %v539
  %v560 = vpack.c.bf16 %v542, %v540
  %v561 = vpack.c.bf16 %v545, %v543
  %v562 = vpack.c.bf16 %v546, %v544
  %v563 = vld [vmem:[%s3] sm:$0xff]
  %v564 = vld [vmem:[%s3 + $0x8] sm:$0xff]
  %v565 = vld [vmem:[%s3 + $0x10] sm:$0xff]
  %v566 = vld [vmem:[%s3 + $0x18] sm:$0xff]
  %v567 = vld [vmem:[%s3 + $0x20] sm:$0xff]
  %v568 = vld [vmem:[%s3 + $0x28] sm:$0xff]
  %v569 = vld [vmem:[%s3 + $0x30] sm:$0xff]
  %v570 = vld [vmem:[%s3 + $0x38] sm:$0xff]
  %v571 = vld [vmem:[%s3 + $0x40] sm:$0xff]
  %v572 = vld [vmem:[%s3 + $0x48] sm:$0xff]
  %v573 = vld [vmem:[%s3 + $0x50] sm:$0xff]
  %v574 = vld [vmem:[%s3 + $0x58] sm:$0xff]
  %v575 = vld [vmem:[%s3 + $0x60] sm:$0xff]
  %v576 = vld [vmem:[%s3 + $0x68] sm:$0xff]
  %v577 = vld [vmem:[%s3 + $0x70] sm:$0xff]
  %v578 = vld [vmem:[%s3 + $0x78] sm:$0xff]
  %v579 = vld [vmem:[%s3 + $0x80] sm:$0xff]
  %v580 = vld [vmem:[%s3 + $0x88] sm:$0xff]
  %v581 = vld [vmem:[%s3 + $0x90] sm:$0xff]
  %v582 = vld [vmem:[%s3 + $0x98] sm:$0xff]
  %v583 = vld [vmem:[%s3 + $0xa0] sm:$0xff]
  %v584 = vld [vmem:[%s3 + $0xa8] sm:$0xff]
  %v585 = vld [vmem:[%s3 + $0xb0] sm:$0xff]
  %v586 = vld [vmem:[%s3 + $0xb8] sm:$0xff]
  %v587 = vld [vmem:[%s3 + $0xc0] sm:$0xff]
  %v588 = vld [vmem:[%s3 + $0xc8] sm:$0xff]
  %v589 = vld [vmem:[%s3 + $0xd0] sm:$0xff]
  %v590 = vld [vmem:[%s3 + $0xd8] sm:$0xff]
  %v591 = vld [vmem:[%s3 + $0xe0] sm:$0xff]
  %v592 = vld [vmem:[%s3 + $0xe8] sm:$0xff]
  %v593 = vld [vmem:[%s3 + $0xf0] sm:$0xff]
  %v594 = vld [vmem:[%s3 + $0xf8] sm:$0xff]
  %v595 = vld [vmem:[%s3 + $0x100] sm:$0xff]
  %v596 = vld [vmem:[%s3 + $0x108] sm:$0xff]
  %v597 = vld [vmem:[%s3 + $0x110] sm:$0xff]
  %v598 = vld [vmem:[%s3 + $0x118] sm:$0xff]
  %v599 = vld [vmem:[%s3 + $0x120] sm:$0xff]
  %v600 = vld [vmem:[%s3 + $0x128] sm:$0xff]
  %v601 = vld [vmem:[%s3 + $0x130] sm:$0xff]
  %v602 = vld [vmem:[%s3 + $0x138] sm:$0xff]
  %v603 = vld [vmem:[%s3 + $0x140] sm:$0xff]
  %v604 = vld [vmem:[%s3 + $0x148] sm:$0xff]
  %v605 = vld [vmem:[%s3 + $0x150] sm:$0xff]
  %v606 = vld [vmem:[%s3 + $0x158] sm:$0xff]
  %v607 = vld [vmem:[%s3 + $0x160] sm:$0xff]
  %v608 = vld [vmem:[%s3 + $0x168] sm:$0xff]
  %v609 = vld [vmem:[%s3 + $0x170] sm:$0xff]
  %v610 = vld [vmem:[%s3 + $0x178] sm:$0xff]
  %v611 = vld [vmem:[%s3 + $0x180] sm:$0xff]
  %v612 = vld [vmem:[%s3 + $0x188] sm:$0xff]
  %v613 = vld [vmem:[%s3 + $0x190] sm:$0xff]
  %v614 = vld [vmem:[%s3 + $0x198] sm:$0xff]
  %v615 = vld [vmem:[%s3 + $0x1a0] sm:$0xff]
  %v616 = vld [vmem:[%s3 + $0x1a8] sm:$0xff]
  %v617 = vld [vmem:[%s3 + $0x1b0] sm:$0xff]
  %v618 = vld [vmem:[%s3 + $0x1b8] sm:$0xff]
  %v619 = vld [vmem:[%s3 + $0x1c0] sm:$0xff]
  %v620 = vld [vmem:[%s3 + $0x1c8] sm:$0xff]
  %v621 = vld [vmem:[%s3 + $0x1d0] sm:$0xff]
  %v622 = vld [vmem:[%s3 + $0x1d8] sm:$0xff]
  %v623 = vld [vmem:[%s3 + $0x1e0] sm:$0xff]
  %v624 = vld [vmem:[%s3 + $0x1e8] sm:$0xff]
  %v625 = vld [vmem:[%s3 + $0x1f0] sm:$0xff]
  %v626 = vld [vmem:[%s3 + $0x1f8] sm:$0xff]
  %v627 = vld [vmem:[%s3 + $0x200] sm:$0xff]
  %v628 = vld [vmem:[%s3 + $0x208] sm:$0xff]
  %v629 = vld [vmem:[%s3 + $0x210] sm:$0xff]
  %v630 = vld [vmem:[%s3 + $0x218] sm:$0xff]
  %v631 = vld [vmem:[%s3 + $0x220] sm:$0xff]
  %v632 = vld [vmem:[%s3 + $0x228] sm:$0xff]
  %v633 = vld [vmem:[%s3 + $0x230] sm:$0xff]
  %v634 = vld [vmem:[%s3 + $0x238] sm:$0xff]
  %v635 = vld [vmem:[%s3 + $0x240] sm:$0xff]
  %v636 = vld [vmem:[%s3 + $0x248] sm:$0xff]
  %v637 = vld [vmem:[%s3 + $0x250] sm:$0xff]
  %v638 = vld [vmem:[%s3 + $0x258] sm:$0xff]
  %v639 = vld [vmem:[%s3 + $0x260] sm:$0xff]
  %v640 = vld [vmem:[%s3 + $0x268] sm:$0xff]
  %v641 = vld [vmem:[%s3 + $0x270] sm:$0xff]
  %v642 = vld [vmem:[%s3 + $0x278] sm:$0xff]
  %v643 = vld [vmem:[%s3 + $0x280] sm:$0xff]
  %v644 = vld [vmem:[%s3 + $0x288] sm:$0xff]
  %v645 = vld [vmem:[%s3 + $0x290] sm:$0xff]
  %v646 = vld [vmem:[%s3 + $0x298] sm:$0xff]
  %v647 = vld [vmem:[%s3 + $0x2a0] sm:$0xff]
  %v648 = vld [vmem:[%s3 + $0x2a8] sm:$0xff]
  %v649 = vld [vmem:[%s3 + $0x2b0] sm:$0xff]
  %v650 = vld [vmem:[%s3 + $0x2b8] sm:$0xff]
  %v651 = vld [vmem:[%s3 + $0x2c0] sm:$0xff]
  %v652 = vld [vmem:[%s3 + $0x2c8] sm:$0xff]
  %v653 = vld [vmem:[%s3 + $0x2d0] sm:$0xff]
  %v654 = vld [vmem:[%s3 + $0x2d8] sm:$0xff]
  %v655 = vld [vmem:[%s3 + $0x2e0] sm:$0xff]
  %v656 = vld [vmem:[%s3 + $0x2e8] sm:$0xff]
  %v657 = vld [vmem:[%s3 + $0x2f0] sm:$0xff]
  %v658 = vld [vmem:[%s3 + $0x2f8] sm:$0xff]
  %v659 = vld [vmem:[%s3 + $0x300] sm:$0xff]
  %v660 = vld [vmem:[%s3 + $0x308] sm:$0xff]
  %v661 = vld [vmem:[%s3 + $0x310] sm:$0xff]
  %v662 = vld [vmem:[%s3 + $0x318] sm:$0xff]
  %v663 = vld [vmem:[%s3 + $0x320] sm:$0xff]
  %v664 = vld [vmem:[%s3 + $0x328] sm:$0xff]
  %v665 = vld [vmem:[%s3 + $0x330] sm:$0xff]
  %v666 = vld [vmem:[%s3 + $0x338] sm:$0xff]
  %v667 = vld [vmem:[%s3 + $0x340] sm:$0xff]
  %v668 = vld [vmem:[%s3 + $0x348] sm:$0xff]
  %v669 = vld [vmem:[%s3 + $0x350] sm:$0xff]
  %v670 = vld [vmem:[%s3 + $0x358] sm:$0xff]
  %v671 = vld [vmem:[%s3 + $0x360] sm:$0xff]
  %v672 = vld [vmem:[%s3 + $0x368] sm:$0xff]
  %v673 = vld [vmem:[%s3 + $0x370] sm:$0xff]
  %v674 = vld [vmem:[%s3 + $0x378] sm:$0xff]
  %v675 = vld [vmem:[%s3 + $0x380] sm:$0xff]
  %v676 = vld [vmem:[%s3 + $0x388] sm:$0xff]
  %v677 = vld [vmem:[%s3 + $0x390] sm:$0xff]
  %v678 = vld [vmem:[%s3 + $0x398] sm:$0xff]
  %v679 = vld [vmem:[%s3 + $0x3a0] sm:$0xff]
  %v680 = vld [vmem:[%s3 + $0x3a8] sm:$0xff]
  %v681 = vld [vmem:[%s3 + $0x3b0] sm:$0xff]
  %v682 = vld [vmem:[%s3 + $0x3b8] sm:$0xff]
  %v683 = vld [vmem:[%s3 + $0x3c0] sm:$0xff]
  %v684 = vld [vmem:[%s3 + $0x3c8] sm:$0xff]
  %v685 = vld [vmem:[%s3 + $0x3d0] sm:$0xff]
  %v686 = vld [vmem:[%s3 + $0x3d8] sm:$0xff]
  %v687 = vld [vmem:[%s3 + $0x3e0] sm:$0xff]
  %v688 = vld [vmem:[%s3 + $0x3e8] sm:$0xff]
  %v689 = vld [vmem:[%s3 + $0x3f0] sm:$0xff]
  %v690 = vld [vmem:[%s3 + $0x3f8] sm:$0xff]
  %v691 = vld [vmem:[%s4] sm:$0xff]
  %v693 = vperm.slane %v691, 0
  %v694 = vperm.slane %v691, 1
  %v695 = vperm.slane %v691, 2
  %v696 = vperm.slane %v691, 3
  %v697 = vperm.slane %v691, 4
  %v698 = vperm.slane %v691, 5
  %v699 = vperm.slane %v691, 6
  %v700 = vperm.slane %v691, 7
  %v837 = vunpack.c.l.b16 %v563
  %v838 = vunpack.c.h.b16 %v563
  %v839 = vunpack.c.l.b16 %v564
  %v840 = vunpack.c.h.b16 %v564
  %v841 = vunpack.c.l.b16 %v565
  %v842 = vunpack.c.h.b16 %v565
  %v843 = vunpack.c.l.b16 %v566
  %v844 = vunpack.c.h.b16 %v566
  %v845 = vunpack.c.l.b16 %v567
  %v846 = vunpack.c.h.b16 %v567
  %v847 = vunpack.c.l.b16 %v568
  %v848 = vunpack.c.h.b16 %v568
  %v849 = vunpack.c.l.b16 %v569
  %v850 = vunpack.c.h.b16 %v569
  %v851 = vunpack.c.l.b16 %v570
  %v852 = vunpack.c.h.b16 %v570
  %v853 = vunpack.c.l.b16 %v571
  %v854 = vunpack.c.h.b16 %v571
  %v855 = vunpack.c.l.b16 %v572
  %v856 = vunpack.c.h.b16 %v572
  %v857 = vunpack.c.l.b16 %v573
  %v858 = vunpack.c.h.b16 %v573
  %v859 = vunpack.c.l.b16 %v574
  %v860 = vunpack.c.h.b16 %v574
  %v861 = vunpack.c.l.b16 %v575
  %v862 = vunpack.c.h.b16 %v575
  %v863 = vunpack.c.l.b16 %v576
  %v864 = vunpack.c.h.b16 %v576
  %v865 = vunpack.c.l.b16 %v577
  %v866 = vunpack.c.h.b16 %v577
  %v867 = vunpack.c.l.b16 %v578
  %v868 = vunpack.c.h.b16 %v578
  %v869 = vunpack.c.l.b16 %v579
  %v870 = vunpack.c.h.b16 %v579
  %v871 = vunpack.c.l.b16 %v580
  %v872 = vunpack.c.h.b16 %v580
  %v873 = vunpack.c.l.b16 %v581
  %v874 = vunpack.c.h.b16 %v581
  %v875 = vunpack.c.l.b16 %v582
  %v876 = vunpack.c.h.b16 %v582
  %v877 = vunpack.c.l.b16 %v583
  %v878 = vunpack.c.h.b16 %v583
  %v879 = vunpack.c.l.b16 %v584
  %v880 = vunpack.c.h.b16 %v584
  %v881 = vunpack.c.l.b16 %v585
  %v882 = vunpack.c.h.b16 %v585
  %v883 = vunpack.c.l.b16 %v586
  %v884 = vunpack.c.h.b16 %v586
  %v885 = vunpack.c.l.b16 %v587
  %v886 = vunpack.c.h.b16 %v587
  %v887 = vunpack.c.l.b16 %v588
  %v888 = vunpack.c.h.b16 %v588
  %v889 = vunpack.c.l.b16 %v589
  %v890 = vunpack.c.h.b16 %v589
  %v891 = vunpack.c.l.b16 %v590
  %v892 = vunpack.c.h.b16 %v590
  %v893 = vunpack.c.l.b16 %v591
  %v894 = vunpack.c.h.b16 %v591
  %v895 = vunpack.c.l.b16 %v592
  %v896 = vunpack.c.h.b16 %v592
  %v897 = vunpack.c.l.b16 %v593
  %v898 = vunpack.c.h.b16 %v593
  %v899 = vunpack.c.l.b16 %v594
  %v900 = vunpack.c.h.b16 %v594
  %v901 = vunpack.c.l.b16 %v595
  %v902 = vunpack.c.h.b16 %v595
  %v903 = vunpack.c.l.b16 %v596
  %v904 = vunpack.c.h.b16 %v596
  %v905 = vunpack.c.l.b16 %v597
  %v906 = vunpack.c.h.b16 %v597
  %v907 = vunpack.c.l.b16 %v598
  %v908 = vunpack.c.h.b16 %v598
  %v909 = vunpack.c.l.b16 %v599
  %v910 = vunpack.c.h.b16 %v599
  %v911 = vunpack.c.l.b16 %v600
  %v912 = vunpack.c.h.b16 %v600
  %v913 = vunpack.c.l.b16 %v601
  %v914 = vunpack.c.h.b16 %v601
  %v915 = vunpack.c.l.b16 %v602
  %v916 = vunpack.c.h.b16 %v602
  %v917 = vunpack.c.l.b16 %v603
  %v918 = vunpack.c.h.b16 %v603
  %v919 = vunpack.c.l.b16 %v604
  %v920 = vunpack.c.h.b16 %v604
  %v921 = vunpack.c.l.b16 %v605
  %v922 = vunpack.c.h.b16 %v605
  %v923 = vunpack.c.l.b16 %v606
  %v924 = vunpack.c.h.b16 %v606
  %v925 = vunpack.c.l.b16 %v607
  %v926 = vunpack.c.h.b16 %v607
  %v927 = vunpack.c.l.b16 %v608
  %v928 = vunpack.c.h.b16 %v608
  %v929 = vunpack.c.l.b16 %v609
  %v930 = vunpack.c.h.b16 %v609
  %v931 = vunpack.c.l.b16 %v610
  %v932 = vunpack.c.h.b16 %v610
  %v933 = vunpack.c.l.b16 %v611
  %v934 = vunpack.c.h.b16 %v611
  %v935 = vunpack.c.l.b16 %v612
  %v936 = vunpack.c.h.b16 %v612
  %v937 = vunpack.c.l.b16 %v613
  %v938 = vunpack.c.h.b16 %v613
  %v939 = vunpack.c.l.b16 %v614
  %v940 = vunpack.c.h.b16 %v614
  %v941 = vunpack.c.l.b16 %v615
  %v942 = vunpack.c.h.b16 %v615
  %v943 = vunpack.c.l.b16 %v616
  %v944 = vunpack.c.h.b16 %v616
  %v945 = vunpack.c.l.b16 %v617
  %v946 = vunpack.c.h.b16 %v617
  %v947 = vunpack.c.l.b16 %v618
  %v948 = vunpack.c.h.b16 %v618
  %v949 = vunpack.c.l.b16 %v619
  %v950 = vunpack.c.h.b16 %v619
  %v951 = vunpack.c.l.b16 %v620
  %v952 = vunpack.c.h.b16 %v620
  %v953 = vunpack.c.l.b16 %v621
  %v954 = vunpack.c.h.b16 %v621
  %v955 = vunpack.c.l.b16 %v622
  %v956 = vunpack.c.h.b16 %v622
  %v957 = vunpack.c.l.b16 %v623
  %v958 = vunpack.c.h.b16 %v623
  %v959 = vunpack.c.l.b16 %v624
  %v960 = vunpack.c.h.b16 %v624
  %v961 = vunpack.c.l.b16 %v625
  %v962 = vunpack.c.h.b16 %v625
  %v963 = vunpack.c.l.b16 %v626
  %v964 = vunpack.c.h.b16 %v626
  %v965 = vunpack.c.l.b16 %v627
  %v966 = vunpack.c.h.b16 %v627
  %v967 = vunpack.c.l.b16 %v628
  %v968 = vunpack.c.h.b16 %v628
  %v969 = vunpack.c.l.b16 %v629
  %v970 = vunpack.c.h.b16 %v629
  %v971 = vunpack.c.l.b16 %v630
  %v972 = vunpack.c.h.b16 %v630
  %v973 = vunpack.c.l.b16 %v631
  %v974 = vunpack.c.h.b16 %v631
  %v975 = vunpack.c.l.b16 %v632
  %v976 = vunpack.c.h.b16 %v632
  %v977 = vunpack.c.l.b16 %v633
  %v978 = vunpack.c.h.b16 %v633
  %v979 = vunpack.c.l.b16 %v634
  %v980 = vunpack.c.h.b16 %v634
  %v981 = vunpack.c.l.b16 %v635
  %v982 = vunpack.c.h.b16 %v635
  %v983 = vunpack.c.l.b16 %v636
  %v984 = vunpack.c.h.b16 %v636
  %v985 = vunpack.c.l.b16 %v637
  %v986 = vunpack.c.h.b16 %v637
  %v987 = vunpack.c.l.b16 %v638
  %v988 = vunpack.c.h.b16 %v638
  %v989 = vunpack.c.l.b16 %v639
  %v990 = vunpack.c.h.b16 %v639
  %v991 = vunpack.c.l.b16 %v640
  %v992 = vunpack.c.h.b16 %v640
  %v993 = vunpack.c.l.b16 %v641
  %v994 = vunpack.c.h.b16 %v641
  %v995 = vunpack.c.l.b16 %v642
  %v996 = vunpack.c.h.b16 %v642
  %v997 = vunpack.c.l.b16 %v643
  %v998 = vunpack.c.h.b16 %v643
  %v999 = vunpack.c.l.b16 %v644
  %v1000 = vunpack.c.h.b16 %v644
  %v1001 = vunpack.c.l.b16 %v645
  %v1002 = vunpack.c.h.b16 %v645
  %v1003 = vunpack.c.l.b16 %v646
  %v1004 = vunpack.c.h.b16 %v646
  %v1005 = vunpack.c.l.b16 %v647
  %v1006 = vunpack.c.h.b16 %v647
  %v1007 = vunpack.c.l.b16 %v648
  %v1008 = vunpack.c.h.b16 %v648
  %v1009 = vunpack.c.l.b16 %v649
  %v1010 = vunpack.c.h.b16 %v649
  %v1011 = vunpack.c.l.b16 %v650
  %v1012 = vunpack.c.h.b16 %v650
  %v1013 = vunpack.c.l.b16 %v651
  %v1014 = vunpack.c.h.b16 %v651
  %v1015 = vunpack.c.l.b16 %v652
  %v1016 = vunpack.c.h.b16 %v652
  %v1017 = vunpack.c.l.b16 %v653
  %v1018 = vunpack.c.h.b16 %v653
  %v1019 = vunpack.c.l.b16 %v654
  %v1020 = vunpack.c.h.b16 %v654
  %v1021 = vunpack.c.l.b16 %v655
  %v1022 = vunpack.c.h.b16 %v655
  %v1023 = vunpack.c.l.b16 %v656
  %v1024 = vunpack.c.h.b16 %v656
  %v1025 = vunpack.c.l.b16 %v657
  %v1026 = vunpack.c.h.b16 %v657
  %v1027 = vunpack.c.l.b16 %v658
  %v1028 = vunpack.c.h.b16 %v658
  %v1029 = vunpack.c.l.b16 %v659
  %v1030 = vunpack.c.h.b16 %v659
  %v1031 = vunpack.c.l.b16 %v660
  %v1032 = vunpack.c.h.b16 %v660
  %v1033 = vunpack.c.l.b16 %v661
  %v1034 = vunpack.c.h.b16 %v661
  %v1035 = vunpack.c.l.b16 %v662
  %v1036 = vunpack.c.h.b16 %v662
  %v1037 = vunpack.c.l.b16 %v663
  %v1038 = vunpack.c.h.b16 %v663
  %v1039 = vunpack.c.l.b16 %v664
  %v1040 = vunpack.c.h.b16 %v664
  %v1041 = vunpack.c.l.b16 %v665
  %v1042 = vunpack.c.h.b16 %v665
  %v1043 = vunpack.c.l.b16 %v666
  %v1044 = vunpack.c.h.b16 %v666
  %v1045 = vunpack.c.l.b16 %v667
  %v1046 = vunpack.c.h.b16 %v667
  %v1047 = vunpack.c.l.b16 %v668
  %v1048 = vunpack.c.h.b16 %v668
  %v1049 = vunpack.c.l.b16 %v669
  %v1050 = vunpack.c.h.b16 %v669
  %v1051 = vunpack.c.l.b16 %v670
  %v1052 = vunpack.c.h.b16 %v670
  %v1053 = vunpack.c.l.b16 %v671
  %v1054 = vunpack.c.h.b16 %v671
  %v1055 = vunpack.c.l.b16 %v672
  %v1056 = vunpack.c.h.b16 %v672
  %v1057 = vunpack.c.l.b16 %v673
  %v1058 = vunpack.c.h.b16 %v673
  %v1059 = vunpack.c.l.b16 %v674
  %v1060 = vunpack.c.h.b16 %v674
  %v1061 = vunpack.c.l.b16 %v675
  %v1062 = vunpack.c.h.b16 %v675
  %v1063 = vunpack.c.l.b16 %v676
  %v1064 = vunpack.c.h.b16 %v676
  %v1065 = vunpack.c.l.b16 %v677
  %v1066 = vunpack.c.h.b16 %v677
  %v1067 = vunpack.c.l.b16 %v678
  %v1068 = vunpack.c.h.b16 %v678
  %v1069 = vunpack.c.l.b16 %v679
  %v1070 = vunpack.c.h.b16 %v679
  %v1071 = vunpack.c.l.b16 %v680
  %v1072 = vunpack.c.h.b16 %v680
  %v1073 = vunpack.c.l.b16 %v681
  %v1074 = vunpack.c.h.b16 %v681
  %v1075 = vunpack.c.l.b16 %v682
  %v1076 = vunpack.c.h.b16 %v682
  %v1077 = vunpack.c.l.b16 %v683
  %v1078 = vunpack.c.h.b16 %v683
  %v1079 = vunpack.c.l.b16 %v684
  %v1080 = vunpack.c.h.b16 %v684
  %v1081 = vunpack.c.l.b16 %v685
  %v1082 = vunpack.c.h.b16 %v685
  %v1083 = vunpack.c.l.b16 %v686
  %v1084 = vunpack.c.h.b16 %v686
  %v1085 = vunpack.c.l.b16 %v687
  %v1086 = vunpack.c.h.b16 %v687
  %v1087 = vunpack.c.l.b16 %v688
  %v1088 = vunpack.c.h.b16 %v688
  %v1089 = vunpack.c.l.b16 %v689
  %v1090 = vunpack.c.h.b16 %v689
  %v1091 = vunpack.c.l.b16 %v690
  %v1092 = vunpack.c.h.b16 %v690
  %v1093 = vpack.c.b16 %v845, %v837
  %v1094 = vpack.c.b16 %v846, %v838
  %v1095 = vpack.c.b16 %v847, %v839
  %v1096 = vpack.c.b16 %v848, %v840
  %v1097 = vpack.c.b16 %v849, %v841
  %v1098 = vpack.c.b16 %v850, %v842
  %v1099 = vpack.c.b16 %v851, %v843
  %v1100 = vpack.c.b16 %v852, %v844
  %v1101 = vpack.c.b16 %v861, %v853
  %v1102 = vpack.c.b16 %v862, %v854
  %v1103 = vpack.c.b16 %v863, %v855
  %v1104 = vpack.c.b16 %v864, %v856
  %v1105 = vpack.c.b16 %v865, %v857
  %v1106 = vpack.c.b16 %v866, %v858
  %v1107 = vpack.c.b16 %v867, %v859
  %v1108 = vpack.c.b16 %v868, %v860
  %v1109 = vpack.c.b16 %v877, %v869
  %v1110 = vpack.c.b16 %v878, %v870
  %v1111 = vpack.c.b16 %v879, %v871
  %v1112 = vpack.c.b16 %v880, %v872
  %v1113 = vpack.c.b16 %v881, %v873
  %v1114 = vpack.c.b16 %v882, %v874
  %v1115 = vpack.c.b16 %v883, %v875
  %v1116 = vpack.c.b16 %v884, %v876
  %v1117 = vpack.c.b16 %v893, %v885
  %v1118 = vpack.c.b16 %v894, %v886
  %v1119 = vpack.c.b16 %v895, %v887
  %v1120 = vpack.c.b16 %v896, %v888
  %v1121 = vpack.c.b16 %v897, %v889
  %v1122 = vpack.c.b16 %v898, %v890
  %v1123 = vpack.c.b16 %v899, %v891
  %v1124 = vpack.c.b16 %v900, %v892
  %v1125 = vpack.c.b16 %v909, %v901
  %v1126 = vpack.c.b16 %v910, %v902
  %v1127 = vpack.c.b16 %v911, %v903
  %v1128 = vpack.c.b16 %v912, %v904
  %v1129 = vpack.c.b16 %v913, %v905
  %v1130 = vpack.c.b16 %v914, %v906
  %v1131 = vpack.c.b16 %v915, %v907
  %v1132 = vpack.c.b16 %v916, %v908
  %v1133 = vpack.c.b16 %v925, %v917
  %v1134 = vpack.c.b16 %v926, %v918
  %v1135 = vpack.c.b16 %v927, %v919
  %v1136 = vpack.c.b16 %v928, %v920
  %v1137 = vpack.c.b16 %v929, %v921
  %v1138 = vpack.c.b16 %v930, %v922
  %v1139 = vpack.c.b16 %v931, %v923
  %v1140 = vpack.c.b16 %v932, %v924
  %v1141 = vpack.c.b16 %v941, %v933
  %v1142 = vpack.c.b16 %v942, %v934
  %v1143 = vpack.c.b16 %v943, %v935
  %v1144 = vpack.c.b16 %v944, %v936
  %v1145 = vpack.c.b16 %v945, %v937
  %v1146 = vpack.c.b16 %v946, %v938
  %v1147 = vpack.c.b16 %v947, %v939
  %v1148 = vpack.c.b16 %v948, %v940
  %v1149 = vpack.c.b16 %v957, %v949
  %v1150 = vpack.c.b16 %v958, %v950
  %v1151 = vpack.c.b16 %v959, %v951
  %v1152 = vpack.c.b16 %v960, %v952
  %v1153 = vpack.c.b16 %v961, %v953
  %v1154 = vpack.c.b16 %v962, %v954
  %v1155 = vpack.c.b16 %v963, %v955
  %v1156 = vpack.c.b16 %v964, %v956
  %v1157 = vpack.c.b16 %v973, %v965
  %v1158 = vpack.c.b16 %v974, %v966
  %v1159 = vpack.c.b16 %v975, %v967
  %v1160 = vpack.c.b16 %v976, %v968
  %v1161 = vpack.c.b16 %v977, %v969
  %v1162 = vpack.c.b16 %v978, %v970
  %v1163 = vpack.c.b16 %v979, %v971
  %v1164 = vpack.c.b16 %v980, %v972
  %v1165 = vpack.c.b16 %v989, %v981
  %v1166 = vpack.c.b16 %v990, %v982
  %v1167 = vpack.c.b16 %v991, %v983
  %v1168 = vpack.c.b16 %v992, %v984
  %v1169 = vpack.c.b16 %v993, %v985
  %v1170 = vpack.c.b16 %v994, %v986
  %v1171 = vpack.c.b16 %v995, %v987
  %v1172 = vpack.c.b16 %v996, %v988
  %v1173 = vpack.c.b16 %v1005, %v997
  %v1174 = vpack.c.b16 %v1006, %v998
  %v1175 = vpack.c.b16 %v1007, %v999
  %v1176 = vpack.c.b16 %v1008, %v1000
  %v1177 = vpack.c.b16 %v1009, %v1001
  %v1178 = vpack.c.b16 %v1010, %v1002
  %v1179 = vpack.c.b16 %v1011, %v1003
  %v1180 = vpack.c.b16 %v1012, %v1004
  %v1181 = vpack.c.b16 %v1021, %v1013
  %v1182 = vpack.c.b16 %v1022, %v1014
  %v1183 = vpack.c.b16 %v1023, %v1015
  %v1184 = vpack.c.b16 %v1024, %v1016
  %v1185 = vpack.c.b16 %v1025, %v1017
  %v1186 = vpack.c.b16 %v1026, %v1018
  %v1187 = vpack.c.b16 %v1027, %v1019
  %v1188 = vpack.c.b16 %v1028, %v1020
  %v1189 = vpack.c.b16 %v1037, %v1029
  %v1190 = vpack.c.b16 %v1038, %v1030
  %v1191 = vpack.c.b16 %v1039, %v1031
  %v1192 = vpack.c.b16 %v1040, %v1032
  %v1193 = vpack.c.b16 %v1041, %v1033
  %v1194 = vpack.c.b16 %v1042, %v1034
  %v1195 = vpack.c.b16 %v1043, %v1035
  %v1196 = vpack.c.b16 %v1044, %v1036
  %v1197 = vpack.c.b16 %v1053, %v1045
  %v1198 = vpack.c.b16 %v1054, %v1046
  %v1199 = vpack.c.b16 %v1055, %v1047
  %v1200 = vpack.c.b16 %v1056, %v1048
  %v1201 = vpack.c.b16 %v1057, %v1049
  %v1202 = vpack.c.b16 %v1058, %v1050
  %v1203 = vpack.c.b16 %v1059, %v1051
  %v1204 = vpack.c.b16 %v1060, %v1052
  %v1205 = vpack.c.b16 %v1069, %v1061
  %v1206 = vpack.c.b16 %v1070, %v1062
  %v1207 = vpack.c.b16 %v1071, %v1063
  %v1208 = vpack.c.b16 %v1072, %v1064
  %v1209 = vpack.c.b16 %v1073, %v1065
  %v1210 = vpack.c.b16 %v1074, %v1066
  %v1211 = vpack.c.b16 %v1075, %v1067
  %v1212 = vpack.c.b16 %v1076, %v1068
  %v1213 = vpack.c.b16 %v1085, %v1077
  %v1214 = vpack.c.b16 %v1086, %v1078
  %v1215 = vpack.c.b16 %v1087, %v1079
  %v1216 = vpack.c.b16 %v1088, %v1080
  %v1217 = vpack.c.b16 %v1089, %v1081
  %v1218 = vpack.c.b16 %v1090, %v1082
  %v1219 = vpack.c.b16 %v1091, %v1083
  %v1220 = vpack.c.b16 %v1092, %v1084
  %1349 = vmatpush.bf16.msra.mxu0 %v1149
  %1350 = vmatpush.bf16.msra.mxu0 %v1141
  %1351 = vmatpush.bf16.msra.mxu0 %v1133
  %1352 = vmatpush.bf16.msra.mxu0 %v1125
  %1353 = vmatpush.bf16.msra.mxu0 %v1117
  %1354 = vmatpush.bf16.msra.mxu0 %v1109
  %1355 = vmatpush.bf16.msra.mxu0 %v1101
  %1356 = vmatpush.bf16.msra.mxu0 %v1093
  %1357 = vmatmul.bf16.gmra.mxu0 %v547
  %v1358 = vpop.f32.mrf.mxu0
  %v1359 = vadd.f32 %v693, %v1358
  %v1360 = vpop.f32.mrf.mxu0
  %v1361 = vadd.f32 %v693, %v1360
  %1362 = vmatmul.bf16.gmra.mxu0 %v549
  %v1363 = vpop.f32.mrf.mxu0
  %v1364 = vadd.f32 %v693, %v1363
  %v1365 = vpop.f32.mrf.mxu0
  %v1366 = vadd.f32 %v693, %v1365
  %1367 = vmatmul.bf16.gmra.mxu0 %v551
  %v1368 = vpop.f32.mrf.mxu0
  %v1369 = vadd.f32 %v693, %v1368
  %v1370 = vpop.f32.mrf.mxu0
  %v1371 = vadd.f32 %v693, %v1370
  %1372 = vmatmul.bf16.gmra.mxu0 %v553
  %v1373 = vpop.f32.mrf.mxu0
  %v1374 = vadd.f32 %v693, %v1373
  %v1375 = vpop.f32.mrf.mxu0
  %v1376 = vadd.f32 %v693, %v1375
  %1377 = vmatmul.bf16.gmra.mxu0 %v555
  %v1378 = vpop.f32.mrf.mxu0
  %v1379 = vadd.f32 %v693, %v1378
  %v1380 = vpop.f32.mrf.mxu0
  %v1381 = vadd.f32 %v693, %v1380
  %1382 = vmatmul.bf16.gmra.mxu0 %v557
  %v1383 = vpop.f32.mrf.mxu0
  %v1384 = vadd.f32 %v693, %v1383
  %v1385 = vpop.f32.mrf.mxu0
  %v1386 = vadd.f32 %v693, %v1385
  %1387 = vmatmul.bf16.gmra.mxu0 %v559
  %v1388 = vpop.f32.mrf.mxu0
  %v1389 = vadd.f32 %v693, %v1388
  %v1390 = vpop.f32.mrf.mxu0
  %v1391 = vadd.f32 %v693, %v1390
  %1392 = vmatmul.bf16.gmra.mxu0 %v561
  %v1393 = vpop.f32.mrf.mxu0
  %v1394 = vadd.f32 %v693, %v1393
  %v1395 = vpop.f32.mrf.mxu0
  %v1396 = vadd.f32 %v693, %v1395
  %1397 = vdwg.mxu0
  %1398 = vmatpush.bf16.msra.mxu0 %v1213
  %1399 = vmatpush.bf16.msra.mxu0 %v1205
  %1400 = vmatpush.bf16.msra.mxu0 %v1197
  %1401 = vmatpush.bf16.msra.mxu0 %v1189
  %1402 = vmatpush.bf16.msra.mxu0 %v1181
  %1403 = vmatpush.bf16.msra.mxu0 %v1173
  %1404 = vmatpush.bf16.msra.mxu0 %v1165
  %1405 = vmatpush.bf16.msra.mxu0 %v1157
  %1406 = vmatmul.bf16.gmra.mxu0 %v548
  %v1407 = vpop.f32.mrf.mxu0
  %v1408 = vadd.f32 %v1359, %v1407
  %v1409 = vpop.f32.mrf.mxu0
  %v1410 = vadd.f32 %v1361, %v1409
  %1411 = vmatmul.bf16.gmra.mxu0 %v550
  %v1412 = vpop.f32.mrf.mxu0
  %v1413 = vadd.f32 %v1364, %v1412
  %v1414 = vpop.f32.mrf.mxu0
  %v1415 = vadd.f32 %v1366, %v1414
  %1416 = vmatmul.bf16.gmra.mxu0 %v552
  %v1417 = vpop.f32.mrf.mxu0
  %v1418 = vadd.f32 %v1369, %v1417
  %v1419 = vpop.f32.mrf.mxu0
  %v1420 = vadd.f32 %v1371, %v1419
  %1421 = vmatmul.bf16.gmra.mxu0 %v554
  %v1422 = vpop.f32.mrf.mxu0
  %v1423 = vadd.f32 %v1374, %v1422
  %v1424 = vpop.f32.mrf.mxu0
  %v1425 = vadd.f32 %v1376, %v1424
  %1426 = vmatmul.bf16.gmra.mxu0 %v556
  %v1427 = vpop.f32.mrf.mxu0
  %v1428 = vadd.f32 %v1379, %v1427
  %v1429 = vpop.f32.mrf.mxu0
  %v1430 = vadd.f32 %v1381, %v1429
  %1431 = vmatmul.bf16.gmra.mxu0 %v558
  %v1432 = vpop.f32.mrf.mxu0
  %v1433 = vadd.f32 %v1384, %v1432
  %v1434 = vpop.f32.mrf.mxu0
  %v1435 = vadd.f32 %v1386, %v1434
  %1436 = vmatmul.bf16.gmra.mxu0 %v560
  %v1437 = vpop.f32.mrf.mxu0
  %v1438 = vadd.f32 %v1389, %v1437
  %v1439 = vpop.f32.mrf.mxu0
  %v1440 = vadd.f32 %v1391, %v1439
  %1441 = vmatmul.bf16.gmra.mxu0 %v562
  %v1442 = vpop.f32.mrf.mxu0
  %v1443 = vadd.f32 %v1394, %v1442
  %v1444 = vpop.f32.mrf.mxu0
  %v1445 = vadd.f32 %v1396, %v1444
  %1446 = vdwg.mxu0
  %1447 = vmatpush.bf16.msra.mxu0 %v1150
  %1448 = vmatpush.bf16.msra.mxu0 %v1142
  %1449 = vmatpush.bf16.msra.mxu0 %v1134
  %1450 = vmatpush.bf16.msra.mxu0 %v1126
  %1451 = vmatpush.bf16.msra.mxu0 %v1118
  %1452 = vmatpush.bf16.msra.mxu0 %v1110
  %1453 = vmatpush.bf16.msra.mxu0 %v1102
  %1454 = vmatpush.bf16.msra.mxu0 %v1094
  %1455 = vmatmul.bf16.gmra.mxu0 %v547
  %v1456 = vpop.f32.mrf.mxu0
  %v1457 = vadd.f32 %v694, %v1456
  %v1458 = vpop.f32.mrf.mxu0
  %v1459 = vadd.f32 %v694, %v1458
  %1460 = vmatmul.bf16.gmra.mxu0 %v549
  %v1461 = vpop.f32.mrf.mxu0
  %v1462 = vadd.f32 %v694, %v1461
  %v1463 = vpop.f32.mrf.mxu0
  %v1464 = vadd.f32 %v694, %v1463
  %1465 = vmatmul.bf16.gmra.mxu0 %v551
  %v1466 = vpop.f32.mrf.mxu0
  %v1467 = vadd.f32 %v694, %v1466
  %v1468 = vpop.f32.mrf.mxu0
  %v1469 = vadd.f32 %v694, %v1468
  %1470 = vmatmul.bf16.gmra.mxu0 %v553
  %v1471 = vpop.f32.mrf.mxu0
  %v1472 = vadd.f32 %v694, %v1471
  %v1473 = vpop.f32.mrf.mxu0
  %v1474 = vadd.f32 %v694, %v1473
  %1475 = vmatmul.bf16.gmra.mxu0 %v555
  %v1476 = vpop.f32.mrf.mxu0
  %v1477 = vadd.f32 %v694, %v1476
  %v1478 = vpop.f32.mrf.mxu0
  %v1479 = vadd.f32 %v694, %v1478
  %1480 = vmatmul.bf16.gmra.mxu0 %v557
  %v1481 = vpop.f32.mrf.mxu0
  %v1482 = vadd.f32 %v694, %v1481
  %v1483 = vpop.f32.mrf.mxu0
  %v1484 = vadd.f32 %v694, %v1483
  %1485 = vmatmul.bf16.gmra.mxu0 %v559
  %v1486 = vpop.f32.mrf.mxu0
  %v1487 = vadd.f32 %v694, %v1486
  %v1488 = vpop.f32.mrf.mxu0
  %v1489 = vadd.f32 %v694, %v1488
  %1490 = vmatmul.bf16.gmra.mxu0 %v561
  %v1491 = vpop.f32.mrf.mxu0
  %v1492 = vadd.f32 %v694, %v1491
  %v1493 = vpop.f32.mrf.mxu0
  %v1494 = vadd.f32 %v694, %v1493
  %1495 = vdwg.mxu0
  %1496 = vmatpush.bf16.msra.mxu0 %v1214
  %1497 = vmatpush.bf16.msra.mxu0 %v1206
  %1498 = vmatpush.bf16.msra.mxu0 %v1198
  %1499 = vmatpush.bf16.msra.mxu0 %v1190
  %1500 = vmatpush.bf16.msra.mxu0 %v1182
  %1501 = vmatpush.bf16.msra.mxu0 %v1174
  %1502 = vmatpush.bf16.msra.mxu0 %v1166
  %1503 = vmatpush.bf16.msra.mxu0 %v1158
  %1504 = vmatmul.bf16.gmra.mxu0 %v548
  %v1505 = vpop.f32.mrf.mxu0
  %v1506 = vadd.f32 %v1457, %v1505
  %v1507 = vpop.f32.mrf.mxu0
  %v1508 = vadd.f32 %v1459, %v1507
  %1509 = vmatmul.bf16.gmra.mxu0 %v550
  %v1510 = vpop.f32.mrf.mxu0
  %v1511 = vadd.f32 %v1462, %v1510
  %v1512 = vpop.f32.mrf.mxu0
  %v1513 = vadd.f32 %v1464, %v1512
  %1514 = vmatmul.bf16.gmra.mxu0 %v552
  %v1515 = vpop.f32.mrf.mxu0
  %v1516 = vadd.f32 %v1467, %v1515
  %v1517 = vpop.f32.mrf.mxu0
  %v1518 = vadd.f32 %v1469, %v1517
  %1519 = vmatmul.bf16.gmra.mxu0 %v554
  %v1520 = vpop.f32.mrf.mxu0
  %v1521 = vadd.f32 %v1472, %v1520
  %v1522 = vpop.f32.mrf.mxu0
  %v1523 = vadd.f32 %v1474, %v1522
  %1524 = vmatmul.bf16.gmra.mxu0 %v556
  %v1525 = vpop.f32.mrf.mxu0
  %v1526 = vadd.f32 %v1477, %v1525
  %v1527 = vpop.f32.mrf.mxu0
  %v1528 = vadd.f32 %v1479, %v1527
  %1529 = vmatmul.bf16.gmra.mxu0 %v558
  %v1530 = vpop.f32.mrf.mxu0
  %v1531 = vadd.f32 %v1482, %v1530
  %v1532 = vpop.f32.mrf.mxu0
  %v1533 = vadd.f32 %v1484, %v1532
  %1534 = vmatmul.bf16.gmra.mxu0 %v560
  %v1535 = vpop.f32.mrf.mxu0
  %v1536 = vadd.f32 %v1487, %v1535
  %v1537 = vpop.f32.mrf.mxu0
  %v1538 = vadd.f32 %v1489, %v1537
  %1539 = vmatmul.bf16.gmra.mxu0 %v562
  %v1540 = vpop.f32.mrf.mxu0
  %v1541 = vadd.f32 %v1492, %v1540
  %v1542 = vpop.f32.mrf.mxu0
  %v1543 = vadd.f32 %v1494, %v1542
  %1544 = vdwg.mxu0
  %1545 = vmatpush.bf16.msra.mxu0 %v1151
  %1546 = vmatpush.bf16.msra.mxu0 %v1143
  %1547 = vmatpush.bf16.msra.mxu0 %v1135
  %1548 = vmatpush.bf16.msra.mxu0 %v1127
  %1549 = vmatpush.bf16.msra.mxu0 %v1119
  %1550 = vmatpush.bf16.msra.mxu0 %v1111
  %1551 = vmatpush.bf16.msra.mxu0 %v1103
  %1552 = vmatpush.bf16.msra.mxu0 %v1095
  %1553 = vmatmul.bf16.gmra.mxu0 %v547
  %v1554 = vpop.f32.mrf.mxu0
  %v1555 = vadd.f32 %v695, %v1554
  %v1556 = vpop.f32.mrf.mxu0
  %v1557 = vadd.f32 %v695, %v1556
  %1558 = vmatmul.bf16.gmra.mxu0 %v549
  %v1559 = vpop.f32.mrf.mxu0
  %v1560 = vadd.f32 %v695, %v1559
  %v1561 = vpop.f32.mrf.mxu0
  %v1562 = vadd.f32 %v695, %v1561
  %1563 = vmatmul.bf16.gmra.mxu0 %v551
  %v1564 = vpop.f32.mrf.mxu0
  %v1565 = vadd.f32 %v695, %v1564
  %v1566 = vpop.f32.mrf.mxu0
  %v1567 = vadd.f32 %v695, %v1566
  %1568 = vmatmul.bf16.gmra.mxu0 %v553
  %v1569 = vpop.f32.mrf.mxu0
  %v1570 = vadd.f32 %v695, %v1569
  %v1571 = vpop.f32.mrf.mxu0
  %v1572 = vadd.f32 %v695, %v1571
  %1573 = vmatmul.bf16.gmra.mxu0 %v555
  %v1574 = vpop.f32.mrf.mxu0
  %v1575 = vadd.f32 %v695, %v1574
  %v1576 = vpop.f32.mrf.mxu0
  %v1577 = vadd.f32 %v695, %v1576
  %1578 = vmatmul.bf16.gmra.mxu0 %v557
  %v1579 = vpop.f32.mrf.mxu0
  %v1580 = vadd.f32 %v695, %v1579
  %v1581 = vpop.f32.mrf.mxu0
  %v1582 = vadd.f32 %v695, %v1581
  %1583 = vmatmul.bf16.gmra.mxu0 %v559
  %v1584 = vpop.f32.mrf.mxu0
  %v1585 = vadd.f32 %v695, %v1584
  %v1586 = vpop.f32.mrf.mxu0
  %v1587 = vadd.f32 %v695, %v1586
  %1588 = vmatmul.bf16.gmra.mxu0 %v561
  %v1589 = vpop.f32.mrf.mxu0
  %v1590 = vadd.f32 %v695, %v1589
  %v1591 = vpop.f32.mrf.mxu0
  %v1592 = vadd.f32 %v695, %v1591
  %1593 = vdwg.mxu0
  %1594 = vmatpush.bf16.msra.mxu0 %v1215
  %1595 = vmatpush.bf16.msra.mxu0 %v1207
  %1596 = vmatpush.bf16.msra.mxu0 %v1199
  %1597 = vmatpush.bf16.msra.mxu0 %v1191
  %1598 = vmatpush.bf16.msra.mxu0 %v1183
  %1599 = vmatpush.bf16.msra.mxu0 %v1175
  %1600 = vmatpush.bf16.msra.mxu0 %v1167
  %1601 = vmatpush.bf16.msra.mxu0 %v1159
  %1602 = vmatmul.bf16.gmra.mxu0 %v548
  %v1603 = vpop.f32.mrf.mxu0
  %v1604 = vadd.f32 %v1555, %v1603
  %v1605 = vpop.f32.mrf.mxu0
  %v1606 = vadd.f32 %v1557, %v1605
  %1607 = vmatmul.bf16.gmra.mxu0 %v550
  %v1608 = vpop.f32.mrf.mxu0
  %v1609 = vadd.f32 %v1560, %v1608
  %v1610 = vpop.f32.mrf.mxu0
  %v1611 = vadd.f32 %v1562, %v1610
  %1612 = vmatmul.bf16.gmra.mxu0 %v552
  %v1613 = vpop.f32.mrf.mxu0
  %v1614 = vadd.f32 %v1565, %v1613
  %v1615 = vpop.f32.mrf.mxu0
  %v1616 = vadd.f32 %v1567, %v1615
  %1617 = vmatmul.bf16.gmra.mxu0 %v554
  %v1618 = vpop.f32.mrf.mxu0
  %v1619 = vadd.f32 %v1570, %v1618
  %v1620 = vpop.f32.mrf.mxu0
  %v1621 = vadd.f32 %v1572, %v1620
  %1622 = vmatmul.bf16.gmra.mxu0 %v556
  %v1623 = vpop.f32.mrf.mxu0
  %v1624 = vadd.f32 %v1575, %v1623
  %v1625 = vpop.f32.mrf.mxu0
  %v1626 = vadd.f32 %v1577, %v1625
  %1627 = vmatmul.bf16.gmra.mxu0 %v558
  %v1628 = vpop.f32.mrf.mxu0
  %v1629 = vadd.f32 %v1580, %v1628
  %v1630 = vpop.f32.mrf.mxu0
  %v1631 = vadd.f32 %v1582, %v1630
  %1632 = vmatmul.bf16.gmra.mxu0 %v560
  %v1633 = vpop.f32.mrf.mxu0
  %v1634 = vadd.f32 %v1585, %v1633
  %v1635 = vpop.f32.mrf.mxu0
  %v1636 = vadd.f32 %v1587, %v1635
  %1637 = vmatmul.bf16.gmra.mxu0 %v562
  %v1638 = vpop.f32.mrf.mxu0
  %v1639 = vadd.f32 %v1590, %v1638
  %v1640 = vpop.f32.mrf.mxu0
  %v1641 = vadd.f32 %v1592, %v1640
  %1642 = vdwg.mxu0
  %1643 = vmatpush.bf16.msra.mxu0 %v1152
  %1644 = vmatpush.bf16.msra.mxu0 %v1144
  %1645 = vmatpush.bf16.msra.mxu0 %v1136
  %1646 = vmatpush.bf16.msra.mxu0 %v1128
  %1647 = vmatpush.bf16.msra.mxu0 %v1120
  %1648 = vmatpush.bf16.msra.mxu0 %v1112
  %1649 = vmatpush.bf16.msra.mxu0 %v1104
  %1650 = vmatpush.bf16.msra.mxu0 %v1096
  %1651 = vmatmul.bf16.gmra.mxu0 %v547
  %v1652 = vpop.f32.mrf.mxu0
  %v1653 = vadd.f32 %v696, %v1652
  %v1654 = vpop.f32.mrf.mxu0
  %v1655 = vadd.f32 %v696, %v1654
  %1656 = vmatmul.bf16.gmra.mxu0 %v549
  %v1657 = vpop.f32.mrf.mxu0
  %v1658 = vadd.f32 %v696, %v1657
  %v1659 = vpop.f32.mrf.mxu0
  %v1660 = vadd.f32 %v696, %v1659
  %1661 = vmatmul.bf16.gmra.mxu0 %v551
  %v1662 = vpop.f32.mrf.mxu0
  %v1663 = vadd.f32 %v696, %v1662
  %v1664 = vpop.f32.mrf.mxu0
  %v1665 = vadd.f32 %v696, %v1664
  %1666 = vmatmul.bf16.gmra.mxu0 %v553
  %v1667 = vpop.f32.mrf.mxu0
  %v1668 = vadd.f32 %v696, %v1667
  %v1669 = vpop.f32.mrf.mxu0
  %v1670 = vadd.f32 %v696, %v1669
  %1671 = vmatmul.bf16.gmra.mxu0 %v555
  %v1672 = vpop.f32.mrf.mxu0
  %v1673 = vadd.f32 %v696, %v1672
  %v1674 = vpop.f32.mrf.mxu0
  %v1675 = vadd.f32 %v696, %v1674
  %1676 = vmatmul.bf16.gmra.mxu0 %v557
  %v1677 = vpop.f32.mrf.mxu0
  %v1678 = vadd.f32 %v696, %v1677
  %v1679 = vpop.f32.mrf.mxu0
  %v1680 = vadd.f32 %v696, %v1679
  %1681 = vmatmul.bf16.gmra.mxu0 %v559
  %v1682 = vpop.f32.mrf.mxu0
  %v1683 = vadd.f32 %v696, %v1682
  %v1684 = vpop.f32.mrf.mxu0
  %v1685 = vadd.f32 %v696, %v1684
  %1686 = vmatmul.bf16.gmra.mxu0 %v561
  %v1687 = vpop.f32.mrf.mxu0
  %v1688 = vadd.f32 %v696, %v1687
  %v1689 = vpop.f32.mrf.mxu0
  %v1690 = vadd.f32 %v696, %v1689
  %1691 = vdwg.mxu0
  %1692 = vmatpush.bf16.msra.mxu0 %v1216
  %1693 = vmatpush.bf16.msra.mxu0 %v1208
  %1694 = vmatpush.bf16.msra.mxu0 %v1200
  %1695 = vmatpush.bf16.msra.mxu0 %v1192
  %1696 = vmatpush.bf16.msra.mxu0 %v1184
  %1697 = vmatpush.bf16.msra.mxu0 %v1176
  %1698 = vmatpush.bf16.msra.mxu0 %v1168
  %1699 = vmatpush.bf16.msra.mxu0 %v1160
  %1700 = vmatmul.bf16.gmra.mxu0 %v548
  %v1701 = vpop.f32.mrf.mxu0
  %v1702 = vadd.f32 %v1653, %v1701
  %v1703 = vpop.f32.mrf.mxu0
  %v1704 = vadd.f32 %v1655, %v1703
  %1705 = vmatmul.bf16.gmra.mxu0 %v550
  %v1706 = vpop.f32.mrf.mxu0
  %v1707 = vadd.f32 %v1658, %v1706
  %v1708 = vpop.f32.mrf.mxu0
  %v1709 = vadd.f32 %v1660, %v1708
  %1710 = vmatmul.bf16.gmra.mxu0 %v552
  %v1711 = vpop.f32.mrf.mxu0
  %v1712 = vadd.f32 %v1663, %v1711
  %v1713 = vpop.f32.mrf.mxu0
  %v1714 = vadd.f32 %v1665, %v1713
  %1715 = vmatmul.bf16.gmra.mxu0 %v554
  %v1716 = vpop.f32.mrf.mxu0
  %v1717 = vadd.f32 %v1668, %v1716
  %v1718 = vpop.f32.mrf.mxu0
  %v1719 = vadd.f32 %v1670, %v1718
  %1720 = vmatmul.bf16.gmra.mxu0 %v556
  %v1721 = vpop.f32.mrf.mxu0
  %v1722 = vadd.f32 %v1673, %v1721
  %v1723 = vpop.f32.mrf.mxu0
  %v1724 = vadd.f32 %v1675, %v1723
  %1725 = vmatmul.bf16.gmra.mxu0 %v558
  %v1726 = vpop.f32.mrf.mxu0
  %v1727 = vadd.f32 %v1678, %v1726
  %v1728 = vpop.f32.mrf.mxu0
  %v1729 = vadd.f32 %v1680, %v1728
  %1730 = vmatmul.bf16.gmra.mxu0 %v560
  %v1731 = vpop.f32.mrf.mxu0
  %v1732 = vadd.f32 %v1683, %v1731
  %v1733 = vpop.f32.mrf.mxu0
  %v1734 = vadd.f32 %v1685, %v1733
  %1735 = vmatmul.bf16.gmra.mxu0 %v562
  %v1736 = vpop.f32.mrf.mxu0
  %v1737 = vadd.f32 %v1688, %v1736
  %v1738 = vpop.f32.mrf.mxu0
  %v1739 = vadd.f32 %v1690, %v1738
  %1740 = vdwg.mxu0
  %1741 = vmatpush.bf16.msra.mxu0 %v1153
  %1742 = vmatpush.bf16.msra.mxu0 %v1145
  %1743 = vmatpush.bf16.msra.mxu0 %v1137
  %1744 = vmatpush.bf16.msra.mxu0 %v1129
  %1745 = vmatpush.bf16.msra.mxu0 %v1121
  %1746 = vmatpush.bf16.msra.mxu0 %v1113
  %1747 = vmatpush.bf16.msra.mxu0 %v1105
  %1748 = vmatpush.bf16.msra.mxu0 %v1097
  %1749 = vmatmul.bf16.gmra.mxu0 %v547
  %v1750 = vpop.f32.mrf.mxu0
  %v1751 = vadd.f32 %v697, %v1750
  %v1752 = vpop.f32.mrf.mxu0
  %v1753 = vadd.f32 %v697, %v1752
  %1754 = vmatmul.bf16.gmra.mxu0 %v549
  %v1755 = vpop.f32.mrf.mxu0
  %v1756 = vadd.f32 %v697, %v1755
  %v1757 = vpop.f32.mrf.mxu0
  %v1758 = vadd.f32 %v697, %v1757
  %1759 = vmatmul.bf16.gmra.mxu0 %v551
  %v1760 = vpop.f32.mrf.mxu0
  %v1761 = vadd.f32 %v697, %v1760
  %v1762 = vpop.f32.mrf.mxu0
  %v1763 = vadd.f32 %v697, %v1762
  %1764 = vmatmul.bf16.gmra.mxu0 %v553
  %v1765 = vpop.f32.mrf.mxu0
  %v1766 = vadd.f32 %v697, %v1765
  %v1767 = vpop.f32.mrf.mxu0
  %v1768 = vadd.f32 %v697, %v1767
  %1769 = vmatmul.bf16.gmra.mxu0 %v555
  %v1770 = vpop.f32.mrf.mxu0
  %v1771 = vadd.f32 %v697, %v1770
  %v1772 = vpop.f32.mrf.mxu0
  %v1773 = vadd.f32 %v697, %v1772
  %1774 = vmatmul.bf16.gmra.mxu0 %v557
  %v1775 = vpop.f32.mrf.mxu0
  %v1776 = vadd.f32 %v697, %v1775
  %v1777 = vpop.f32.mrf.mxu0
  %v1778 = vadd.f32 %v697, %v1777
  %1779 = vmatmul.bf16.gmra.mxu0 %v559
  %v1780 = vpop.f32.mrf.mxu0
  %v1781 = vadd.f32 %v697, %v1780
  %v1782 = vpop.f32.mrf.mxu0
  %v1783 = vadd.f32 %v697, %v1782
  %1784 = vmatmul.bf16.gmra.mxu0 %v561
  %v1785 = vpop.f32.mrf.mxu0
  %v1786 = vadd.f32 %v697, %v1785
  %v1787 = vpop.f32.mrf.mxu0
  %v1788 = vadd.f32 %v697, %v1787
  %1789 = vdwg.mxu0
  %1790 = vmatpush.bf16.msra.mxu0 %v1217
  %1791 = vmatpush.bf16.msra.mxu0 %v1209
  %1792 = vmatpush.bf16.msra.mxu0 %v1201
  %1793 = vmatpush.bf16.msra.mxu0 %v1193
  %1794 = vmatpush.bf16.msra.mxu0 %v1185
  %1795 = vmatpush.bf16.msra.mxu0 %v1177
  %1796 = vmatpush.bf16.msra.mxu0 %v1169
  %1797 = vmatpush.bf16.msra.mxu0 %v1161
  %1798 = vmatmul.bf16.gmra.mxu0 %v548
  %v1799 = vpop.f32.mrf.mxu0
  %v1800 = vadd.f32 %v1751, %v1799
  %v1801 = vpop.f32.mrf.mxu0
  %v1802 = vadd.f32 %v1753, %v1801
  %1803 = vmatmul.bf16.gmra.mxu0 %v550
  %v1804 = vpop.f32.mrf.mxu0
  %v1805 = vadd.f32 %v1756, %v1804
  %v1806 = vpop.f32.mrf.mxu0
  %v1807 = vadd.f32 %v1758, %v1806
  %1808 = vmatmul.bf16.gmra.mxu0 %v552
  %v1809 = vpop.f32.mrf.mxu0
  %v1810 = vadd.f32 %v1761, %v1809
  %v1811 = vpop.f32.mrf.mxu0
  %v1812 = vadd.f32 %v1763, %v1811
  %1813 = vmatmul.bf16.gmra.mxu0 %v554
  %v1814 = vpop.f32.mrf.mxu0
  %v1815 = vadd.f32 %v1766, %v1814
  %v1816 = vpop.f32.mrf.mxu0
  %v1817 = vadd.f32 %v1768, %v1816
  %1818 = vmatmul.bf16.gmra.mxu0 %v556
  %v1819 = vpop.f32.mrf.mxu0
  %v1820 = vadd.f32 %v1771, %v1819
  %v1821 = vpop.f32.mrf.mxu0
  %v1822 = vadd.f32 %v1773, %v1821
  %1823 = vmatmul.bf16.gmra.mxu0 %v558
  %v1824 = vpop.f32.mrf.mxu0
  %v1825 = vadd.f32 %v1776, %v1824
  %v1826 = vpop.f32.mrf.mxu0
  %v1827 = vadd.f32 %v1778, %v1826
  %1828 = vmatmul.bf16.gmra.mxu0 %v560
  %v1829 = vpop.f32.mrf.mxu0
  %v1830 = vadd.f32 %v1781, %v1829
  %v1831 = vpop.f32.mrf.mxu0
  %v1832 = vadd.f32 %v1783, %v1831
  %1833 = vmatmul.bf16.gmra.mxu0 %v562
  %v1834 = vpop.f32.mrf.mxu0
  %v1835 = vadd.f32 %v1786, %v1834
  %v1836 = vpop.f32.mrf.mxu0
  %v1837 = vadd.f32 %v1788, %v1836
  %1838 = vdwg.mxu0
  %1839 = vmatpush.bf16.msra.mxu0 %v1154
  %1840 = vmatpush.bf16.msra.mxu0 %v1146
  %1841 = vmatpush.bf16.msra.mxu0 %v1138
  %1842 = vmatpush.bf16.msra.mxu0 %v1130
  %1843 = vmatpush.bf16.msra.mxu0 %v1122
  %1844 = vmatpush.bf16.msra.mxu0 %v1114
  %1845 = vmatpush.bf16.msra.mxu0 %v1106
  %1846 = vmatpush.bf16.msra.mxu0 %v1098
  %1847 = vmatmul.bf16.gmra.mxu0 %v547
  %v1848 = vpop.f32.mrf.mxu0
  %v1849 = vadd.f32 %v698, %v1848
  %v1850 = vpop.f32.mrf.mxu0
  %v1851 = vadd.f32 %v698, %v1850
  %1852 = vmatmul.bf16.gmra.mxu0 %v549
  %v1853 = vpop.f32.mrf.mxu0
  %v1854 = vadd.f32 %v698, %v1853
  %v1855 = vpop.f32.mrf.mxu0
  %v1856 = vadd.f32 %v698, %v1855
  %1857 = vmatmul.bf16.gmra.mxu0 %v551
  %v1858 = vpop.f32.mrf.mxu0
  %v1859 = vadd.f32 %v698, %v1858
  %v1860 = vpop.f32.mrf.mxu0
  %v1861 = vadd.f32 %v698, %v1860
  %1862 = vmatmul.bf16.gmra.mxu0 %v553
  %v1863 = vpop.f32.mrf.mxu0
  %v1864 = vadd.f32 %v698, %v1863
  %v1865 = vpop.f32.mrf.mxu0
  %v1866 = vadd.f32 %v698, %v1865
  %1867 = vmatmul.bf16.gmra.mxu0 %v555
  %v1868 = vpop.f32.mrf.mxu0
  %v1869 = vadd.f32 %v698, %v1868
  %v1870 = vpop.f32.mrf.mxu0
  %v1871 = vadd.f32 %v698, %v1870
  %1872 = vmatmul.bf16.gmra.mxu0 %v557
  %v1873 = vpop.f32.mrf.mxu0
  %v1874 = vadd.f32 %v698, %v1873
  %v1875 = vpop.f32.mrf.mxu0
  %v1876 = vadd.f32 %v698, %v1875
  %1877 = vmatmul.bf16.gmra.mxu0 %v559
  %v1878 = vpop.f32.mrf.mxu0
  %v1879 = vadd.f32 %v698, %v1878
  %v1880 = vpop.f32.mrf.mxu0
  %v1881 = vadd.f32 %v698, %v1880
  %1882 = vmatmul.bf16.gmra.mxu0 %v561
  %v1883 = vpop.f32.mrf.mxu0
  %v1884 = vadd.f32 %v698, %v1883
  %v1885 = vpop.f32.mrf.mxu0
  %v1886 = vadd.f32 %v698, %v1885
  %1887 = vdwg.mxu0
  %1888 = vmatpush.bf16.msra.mxu0 %v1218
  %1889 = vmatpush.bf16.msra.mxu0 %v1210
  %1890 = vmatpush.bf16.msra.mxu0 %v1202
  %1891 = vmatpush.bf16.msra.mxu0 %v1194
  %1892 = vmatpush.bf16.msra.mxu0 %v1186
  %1893 = vmatpush.bf16.msra.mxu0 %v1178
  %1894 = vmatpush.bf16.msra.mxu0 %v1170
  %1895 = vmatpush.bf16.msra.mxu0 %v1162
  %1896 = vmatmul.bf16.gmra.mxu0 %v548
  %v1897 = vpop.f32.mrf.mxu0
  %v1898 = vadd.f32 %v1849, %v1897
  %v1899 = vpop.f32.mrf.mxu0
  %v1900 = vadd.f32 %v1851, %v1899
  %1901 = vmatmul.bf16.gmra.mxu0 %v550
  %v1902 = vpop.f32.mrf.mxu0
  %v1903 = vadd.f32 %v1854, %v1902
  %v1904 = vpop.f32.mrf.mxu0
  %v1905 = vadd.f32 %v1856, %v1904
  %1906 = vmatmul.bf16.gmra.mxu0 %v552
  %v1907 = vpop.f32.mrf.mxu0
  %v1908 = vadd.f32 %v1859, %v1907
  %v1909 = vpop.f32.mrf.mxu0
  %v1910 = vadd.f32 %v1861, %v1909
  %1911 = vmatmul.bf16.gmra.mxu0 %v554
  %v1912 = vpop.f32.mrf.mxu0
  %v1913 = vadd.f32 %v1864, %v1912
  %v1914 = vpop.f32.mrf.mxu0
  %v1915 = vadd.f32 %v1866, %v1914
  %1916 = vmatmul.bf16.gmra.mxu0 %v556
  %v1917 = vpop.f32.mrf.mxu0
  %v1918 = vadd.f32 %v1869, %v1917
  %v1919 = vpop.f32.mrf.mxu0
  %v1920 = vadd.f32 %v1871, %v1919
  %1921 = vmatmul.bf16.gmra.mxu0 %v558
  %v1922 = vpop.f32.mrf.mxu0
  %v1923 = vadd.f32 %v1874, %v1922
  %v1924 = vpop.f32.mrf.mxu0
  %v1925 = vadd.f32 %v1876, %v1924
  %1926 = vmatmul.bf16.gmra.mxu0 %v560
  %v1927 = vpop.f32.mrf.mxu0
  %v1928 = vadd.f32 %v1879, %v1927
  %v1929 = vpop.f32.mrf.mxu0
  %v1930 = vadd.f32 %v1881, %v1929
  %1931 = vmatmul.bf16.gmra.mxu0 %v562
  %v1932 = vpop.f32.mrf.mxu0
  %v1933 = vadd.f32 %v1884, %v1932
  %v1934 = vpop.f32.mrf.mxu0
  %v1935 = vadd.f32 %v1886, %v1934
  %1936 = vdwg.mxu0
  %1937 = vmatpush.bf16.msra.mxu0 %v1155
  %1938 = vmatpush.bf16.msra.mxu0 %v1147
  %1939 = vmatpush.bf16.msra.mxu0 %v1139
  %1940 = vmatpush.bf16.msra.mxu0 %v1131
  %1941 = vmatpush.bf16.msra.mxu0 %v1123
  %1942 = vmatpush.bf16.msra.mxu0 %v1115
  %1943 = vmatpush.bf16.msra.mxu0 %v1107
  %1944 = vmatpush.bf16.msra.mxu0 %v1099
  %1945 = vmatmul.bf16.gmra.mxu0 %v547
  %v1946 = vpop.f32.mrf.mxu0
  %v1947 = vadd.f32 %v699, %v1946
  %v1948 = vpop.f32.mrf.mxu0
  %v1949 = vadd.f32 %v699, %v1948
  %1950 = vmatmul.bf16.gmra.mxu0 %v549
  %v1951 = vpop.f32.mrf.mxu0
  %v1952 = vadd.f32 %v699, %v1951
  %v1953 = vpop.f32.mrf.mxu0
  %v1954 = vadd.f32 %v699, %v1953
  %1955 = vmatmul.bf16.gmra.mxu0 %v551
  %v1956 = vpop.f32.mrf.mxu0
  %v1957 = vadd.f32 %v699, %v1956
  %v1958 = vpop.f32.mrf.mxu0
  %v1959 = vadd.f32 %v699, %v1958
  %1960 = vmatmul.bf16.gmra.mxu0 %v553
  %v1961 = vpop.f32.mrf.mxu0
  %v1962 = vadd.f32 %v699, %v1961
  %v1963 = vpop.f32.mrf.mxu0
  %v1964 = vadd.f32 %v699, %v1963
  %1965 = vmatmul.bf16.gmra.mxu0 %v555
  %v1966 = vpop.f32.mrf.mxu0
  %v1967 = vadd.f32 %v699, %v1966
  %v1968 = vpop.f32.mrf.mxu0
  %v1969 = vadd.f32 %v699, %v1968
  %1970 = vmatmul.bf16.gmra.mxu0 %v557
  %v1971 = vpop.f32.mrf.mxu0
  %v1972 = vadd.f32 %v699, %v1971
  %v1973 = vpop.f32.mrf.mxu0
  %v1974 = vadd.f32 %v699, %v1973
  %1975 = vmatmul.bf16.gmra.mxu0 %v559
  %v1976 = vpop.f32.mrf.mxu0
  %v1977 = vadd.f32 %v699, %v1976
  %v1978 = vpop.f32.mrf.mxu0
  %v1979 = vadd.f32 %v699, %v1978
  %1980 = vmatmul.bf16.gmra.mxu0 %v561
  %v1981 = vpop.f32.mrf.mxu0
  %v1982 = vadd.f32 %v699, %v1981
  %v1983 = vpop.f32.mrf.mxu0
  %v1984 = vadd.f32 %v699, %v1983
  %1985 = vdwg.mxu0
  %1986 = vmatpush.bf16.msra.mxu0 %v1219
  %1987 = vmatpush.bf16.msra.mxu0 %v1211
  %1988 = vmatpush.bf16.msra.mxu0 %v1203
  %1989 = vmatpush.bf16.msra.mxu0 %v1195
  %1990 = vmatpush.bf16.msra.mxu0 %v1187
  %1991 = vmatpush.bf16.msra.mxu0 %v1179
  %1992 = vmatpush.bf16.msra.mxu0 %v1171
  %1993 = vmatpush.bf16.msra.mxu0 %v1163
  %1994 = vmatmul.bf16.gmra.mxu0 %v548
  %v1995 = vpop.f32.mrf.mxu0
  %v1996 = vadd.f32 %v1947, %v1995
  %v1997 = vpop.f32.mrf.mxu0
  %v1998 = vadd.f32 %v1949, %v1997
  %1999 = vmatmul.bf16.gmra.mxu0 %v550
  %v2000 = vpop.f32.mrf.mxu0
  %v2001 = vadd.f32 %v1952, %v2000
  %v2002 = vpop.f32.mrf.mxu0
  %v2003 = vadd.f32 %v1954, %v2002
  %2004 = vmatmul.bf16.gmra.mxu0 %v552
  %v2005 = vpop.f32.mrf.mxu0
  %v2006 = vadd.f32 %v1957, %v2005
  %v2007 = vpop.f32.mrf.mxu0
  %v2008 = vadd.f32 %v1959, %v2007
  %2009 = vmatmul.bf16.gmra.mxu0 %v554
  %v2010 = vpop.f32.mrf.mxu0
  %v2011 = vadd.f32 %v1962, %v2010
  %v2012 = vpop.f32.mrf.mxu0
  %v2013 = vadd.f32 %v1964, %v2012
  %2014 = vmatmul.bf16.gmra.mxu0 %v556
  %v2015 = vpop.f32.mrf.mxu0
  %v2016 = vadd.f32 %v1967, %v2015
  %v2017 = vpop.f32.mrf.mxu0
  %v2018 = vadd.f32 %v1969, %v2017
  %2019 = vmatmul.bf16.gmra.mxu0 %v558
  %v2020 = vpop.f32.mrf.mxu0
  %v2021 = vadd.f32 %v1972, %v2020
  %v2022 = vpop.f32.mrf.mxu0
  %v2023 = vadd.f32 %v1974, %v2022
  %2024 = vmatmul.bf16.gmra.mxu0 %v560
  %v2025 = vpop.f32.mrf.mxu0
  %v2026 = vadd.f32 %v1977, %v2025
  %v2027 = vpop.f32.mrf.mxu0
  %v2028 = vadd.f32 %v1979, %v2027
  %2029 = vmatmul.bf16.gmra.mxu0 %v562
  %v2030 = vpop.f32.mrf.mxu0
  %v2031 = vadd.f32 %v1982, %v2030
  %v2032 = vpop.f32.mrf.mxu0
  %v2033 = vadd.f32 %v1984, %v2032
  %2034 = vdwg.mxu0
  %2035 = vmatpush.bf16.msra.mxu0 %v1156
  %2036 = vmatpush.bf16.msra.mxu0 %v1148
  %2037 = vmatpush.bf16.msra.mxu0 %v1140
  %2038 = vmatpush.bf16.msra.mxu0 %v1132
  %2039 = vmatpush.bf16.msra.mxu0 %v1124
  %2040 = vmatpush.bf16.msra.mxu0 %v1116
  %2041 = vmatpush.bf16.msra.mxu0 %v1108
  %2042 = vmatpush.bf16.msra.mxu0 %v1100
  %2043 = vmatmul.bf16.gmra.mxu0 %v547
  %v2044 = vpop.f32.mrf.mxu0
  %v2045 = vadd.f32 %v700, %v2044
  %v2046 = vpop.f32.mrf.mxu0
  %v2047 = vadd.f32 %v700, %v2046
  %2048 = vmatmul.bf16.gmra.mxu0 %v549
  %v2049 = vpop.f32.mrf.mxu0
  %v2050 = vadd.f32 %v700, %v2049
  %v2051 = vpop.f32.mrf.mxu0
  %v2052 = vadd.f32 %v700, %v2051
  %2053 = vmatmul.bf16.gmra.mxu0 %v551
  %v2054 = vpop.f32.mrf.mxu0
  %v2055 = vadd.f32 %v700, %v2054
  %v2056 = vpop.f32.mrf.mxu0
  %v2057 = vadd.f32 %v700, %v2056
  %2058 = vmatmul.bf16.gmra.mxu0 %v553
  %v2059 = vpop.f32.mrf.mxu0
  %v2060 = vadd.f32 %v700, %v2059
  %v2061 = vpop.f32.mrf.mxu0
  %v2062 = vadd.f32 %v700, %v2061
  %2063 = vmatmul.bf16.gmra.mxu0 %v555
  %v2064 = vpop.f32.mrf.mxu0
  %v2065 = vadd.f32 %v700, %v2064
  %v2066 = vpop.f32.mrf.mxu0
  %v2067 = vadd.f32 %v700, %v2066
  %2068 = vmatmul.bf16.gmra.mxu0 %v557
  %v2069 = vpop.f32.mrf.mxu0
  %v2070 = vadd.f32 %v700, %v2069
  %v2071 = vpop.f32.mrf.mxu0
  %v2072 = vadd.f32 %v700, %v2071
  %2073 = vmatmul.bf16.gmra.mxu0 %v559
  %v2074 = vpop.f32.mrf.mxu0
  %v2075 = vadd.f32 %v700, %v2074
  %v2076 = vpop.f32.mrf.mxu0
  %v2077 = vadd.f32 %v700, %v2076
  %2078 = vmatmul.bf16.gmra.mxu0 %v561
  %v2079 = vpop.f32.mrf.mxu0
  %v2080 = vadd.f32 %v700, %v2079
  %v2081 = vpop.f32.mrf.mxu0
  %v2082 = vadd.f32 %v700, %v2081
  %2083 = vdwg.mxu0
  %2084 = vmatpush.bf16.msra.mxu0 %v1220
  %2085 = vmatpush.bf16.msra.mxu0 %v1212
  %2086 = vmatpush.bf16.msra.mxu0 %v1204
  %2087 = vmatpush.bf16.msra.mxu0 %v1196
  %2088 = vmatpush.bf16.msra.mxu0 %v1188
  %2089 = vmatpush.bf16.msra.mxu0 %v1180
  %2090 = vmatpush.bf16.msra.mxu0 %v1172
  %2091 = vmatpush.bf16.msra.mxu0 %v1164
  %2092 = vmatmul.bf16.gmra.mxu0 %v548
  %v2093 = vpop.f32.mrf.mxu0
  %v2094 = vadd.f32 %v2045, %v2093
  %v2095 = vpop.f32.mrf.mxu0
  %v2096 = vadd.f32 %v2047, %v2095
  %2097 = vmatmul.bf16.gmra.mxu0 %v550
  %v2098 = vpop.f32.mrf.mxu0
  %v2099 = vadd.f32 %v2050, %v2098
  %v2100 = vpop.f32.mrf.mxu0
  %v2101 = vadd.f32 %v2052, %v2100
  %2102 = vmatmul.bf16.gmra.mxu0 %v552
  %v2103 = vpop.f32.mrf.mxu0
  %v2104 = vadd.f32 %v2055, %v2103
  %v2105 = vpop.f32.mrf.mxu0
  %v2106 = vadd.f32 %v2057, %v2105
  %2107 = vmatmul.bf16.gmra.mxu0 %v554
  %v2108 = vpop.f32.mrf.mxu0
  %v2109 = vadd.f32 %v2060, %v2108
  %v2110 = vpop.f32.mrf.mxu0
  %v2111 = vadd.f32 %v2062, %v2110
  %2112 = vmatmul.bf16.gmra.mxu0 %v556
  %v2113 = vpop.f32.mrf.mxu0
  %v2114 = vadd.f32 %v2065, %v2113
  %v2115 = vpop.f32.mrf.mxu0
  %v2116 = vadd.f32 %v2067, %v2115
  %2117 = vmatmul.bf16.gmra.mxu0 %v558
  %v2118 = vpop.f32.mrf.mxu0
  %v2119 = vadd.f32 %v2070, %v2118
  %v2120 = vpop.f32.mrf.mxu0
  %v2121 = vadd.f32 %v2072, %v2120
  %2122 = vmatmul.bf16.gmra.mxu0 %v560
  %v2123 = vpop.f32.mrf.mxu0
  %v2124 = vadd.f32 %v2075, %v2123
  %v2125 = vpop.f32.mrf.mxu0
  %v2126 = vadd.f32 %v2077, %v2125
  %2127 = vmatmul.bf16.gmra.mxu0 %v562
  %v2128 = vpop.f32.mrf.mxu0
  %v2129 = vadd.f32 %v2080, %v2128
  %v2130 = vpop.f32.mrf.mxu0
  %v2131 = vadd.f32 %v2082, %v2130
  %2132 = vdwg.mxu0
  %v2133 = vmul.f32 %v1408, %v1408
  %v2134 = vmul.f32 %v1506, %v1506
  %v2135 = vmul.f32 %v1604, %v1604
  %v2136 = vmul.f32 %v1702, %v1702
  %v2137 = vmul.f32 %v1800, %v1800
  %v2138 = vmul.f32 %v1898, %v1898
  %v2139 = vmul.f32 %v1996, %v1996
  %v2140 = vmul.f32 %v2094, %v2094
  %v2141 = vmul.f32 %v1410, %v1410
  %v2142 = vmul.f32 %v1508, %v1508
  %v2143 = vmul.f32 %v1606, %v1606
  %v2144 = vmul.f32 %v1704, %v1704
  %v2145 = vmul.f32 %v1802, %v1802
  %v2146 = vmul.f32 %v1900, %v1900
  %v2147 = vmul.f32 %v1998, %v1998
  %v2148 = vmul.f32 %v2096, %v2096
  %v2149 = vmul.f32 %v1413, %v1413
  %v2150 = vmul.f32 %v1511, %v1511
  %v2151 = vmul.f32 %v1609, %v1609
  %v2152 = vmul.f32 %v1707, %v1707
  %v2153 = vmul.f32 %v1805, %v1805
  %v2154 = vmul.f32 %v1903, %v1903
  %v2155 = vmul.f32 %v2001, %v2001
  %v2156 = vmul.f32 %v2099, %v2099
  %v2157 = vmul.f32 %v1415, %v1415
  %v2158 = vmul.f32 %v1513, %v1513
  %v2159 = vmul.f32 %v1611, %v1611
  %v2160 = vmul.f32 %v1709, %v1709
  %v2161 = vmul.f32 %v1807, %v1807
  %v2162 = vmul.f32 %v1905, %v1905
  %v2163 = vmul.f32 %v2003, %v2003
  %v2164 = vmul.f32 %v2101, %v2101
  %v2165 = vmul.f32 %v1418, %v1418
  %v2166 = vmul.f32 %v1516, %v1516
  %v2167 = vmul.f32 %v1614, %v1614
  %v2168 = vmul.f32 %v1712, %v1712
  %v2169 = vmul.f32 %v1810, %v1810
  %v2170 = vmul.f32 %v1908, %v1908
  %v2171 = vmul.f32 %v2006, %v2006
  %v2172 = vmul.f32 %v2104, %v2104
  %v2173 = vmul.f32 %v1420, %v1420
  %v2174 = vmul.f32 %v1518, %v1518
  %v2175 = vmul.f32 %v1616, %v1616
  %v2176 = vmul.f32 %v1714, %v1714
  %v2177 = vmul.f32 %v1812, %v1812
  %v2178 = vmul.f32 %v1910, %v1910
  %v2179 = vmul.f32 %v2008, %v2008
  %v2180 = vmul.f32 %v2106, %v2106
  %v2181 = vmul.f32 %v1423, %v1423
  %v2182 = vmul.f32 %v1521, %v1521
  %v2183 = vmul.f32 %v1619, %v1619
  %v2184 = vmul.f32 %v1717, %v1717
  %v2185 = vmul.f32 %v1815, %v1815
  %v2186 = vmul.f32 %v1913, %v1913
  %v2187 = vmul.f32 %v2011, %v2011
  %v2188 = vmul.f32 %v2109, %v2109
  %v2189 = vmul.f32 %v1425, %v1425
  %v2190 = vmul.f32 %v1523, %v1523
  %v2191 = vmul.f32 %v1621, %v1621
  %v2192 = vmul.f32 %v1719, %v1719
  %v2193 = vmul.f32 %v1817, %v1817
  %v2194 = vmul.f32 %v1915, %v1915
  %v2195 = vmul.f32 %v2013, %v2013
  %v2196 = vmul.f32 %v2111, %v2111
  %v2197 = vmul.f32 %v1428, %v1428
  %v2198 = vmul.f32 %v1526, %v1526
  %v2199 = vmul.f32 %v1624, %v1624
  %v2200 = vmul.f32 %v1722, %v1722
  %v2201 = vmul.f32 %v1820, %v1820
  %v2202 = vmul.f32 %v1918, %v1918
  %v2203 = vmul.f32 %v2016, %v2016
  %v2204 = vmul.f32 %v2114, %v2114
  %v2205 = vmul.f32 %v1430, %v1430
  %v2206 = vmul.f32 %v1528, %v1528
  %v2207 = vmul.f32 %v1626, %v1626
  %v2208 = vmul.f32 %v1724, %v1724
  %v2209 = vmul.f32 %v1822, %v1822
  %v2210 = vmul.f32 %v1920, %v1920
  %v2211 = vmul.f32 %v2018, %v2018
  %v2212 = vmul.f32 %v2116, %v2116
  %v2213 = vmul.f32 %v1433, %v1433
  %v2214 = vmul.f32 %v1531, %v1531
  %v2215 = vmul.f32 %v1629, %v1629
  %v2216 = vmul.f32 %v1727, %v1727
  %v2217 = vmul.f32 %v1825, %v1825
  %v2218 = vmul.f32 %v1923, %v1923
  %v2219 = vmul.f32 %v2021, %v2021
  %v2220 = vmul.f32 %v2119, %v2119
  %v2221 = vmul.f32 %v1435, %v1435
  %v2222 = vmul.f32 %v1533, %v1533
  %v2223 = vmul.f32 %v1631, %v1631
  %v2224 = vmul.f32 %v1729, %v1729
  %v2225 = vmul.f32 %v1827, %v1827
  %v2226 = vmul.f32 %v1925, %v1925
  %v2227 = vmul.f32 %v2023, %v2023
  %v2228 = vmul.f32 %v2121, %v2121
  %v2229 = vmul.f32 %v1438, %v1438
  %v2230 = vmul.f32 %v1536, %v1536
  %v2231 = vmul.f32 %v1634, %v1634
  %v2232 = vmul.f32 %v1732, %v1732
  %v2233 = vmul.f32 %v1830, %v1830
  %v2234 = vmul.f32 %v1928, %v1928
  %v2235 = vmul.f32 %v2026, %v2026
  %v2236 = vmul.f32 %v2124, %v2124
  %v2237 = vmul.f32 %v1440, %v1440
  %v2238 = vmul.f32 %v1538, %v1538
  %v2239 = vmul.f32 %v1636, %v1636
  %v2240 = vmul.f32 %v1734, %v1734
  %v2241 = vmul.f32 %v1832, %v1832
  %v2242 = vmul.f32 %v1930, %v1930
  %v2243 = vmul.f32 %v2028, %v2028
  %v2244 = vmul.f32 %v2126, %v2126
  %v2245 = vmul.f32 %v1443, %v1443
  %v2246 = vmul.f32 %v1541, %v1541
  %v2247 = vmul.f32 %v1639, %v1639
  %v2248 = vmul.f32 %v1737, %v1737
  %v2249 = vmul.f32 %v1835, %v1835
  %v2250 = vmul.f32 %v1933, %v1933
  %v2251 = vmul.f32 %v2031, %v2031
  %v2252 = vmul.f32 %v2129, %v2129
  %v2253 = vmul.f32 %v1445, %v1445
  %v2254 = vmul.f32 %v1543, %v1543
  %v2255 = vmul.f32 %v1641, %v1641
  %v2256 = vmul.f32 %v1739, %v1739
  %v2257 = vmul.f32 %v1837, %v1837
  %v2258 = vmul.f32 %v1935, %v1935
  %v2259 = vmul.f32 %v2033, %v2033
  %v2260 = vmul.f32 %v2131, %v2131
  %v2261 = vmul.f32 %v1408, %v2133
  %v2262 = vmul.f32 %v1506, %v2134
  %v2263 = vmul.f32 %v1604, %v2135
  %v2264 = vmul.f32 %v1702, %v2136
  %v2265 = vmul.f32 %v1800, %v2137
  %v2266 = vmul.f32 %v1898, %v2138
  %v2267 = vmul.f32 %v1996, %v2139
  %v2268 = vmul.f32 %v2094, %v2140
  %v2269 = vmul.f32 %v1410, %v2141
  %v2270 = vmul.f32 %v1508, %v2142
  %v2271 = vmul.f32 %v1606, %v2143
  %v2272 = vmul.f32 %v1704, %v2144
  %v2273 = vmul.f32 %v1802, %v2145
  %v2274 = vmul.f32 %v1900, %v2146
  %v2275 = vmul.f32 %v1998, %v2147
  %v2276 = vmul.f32 %v2096, %v2148
  %v2277 = vmul.f32 %v1413, %v2149
  %v2278 = vmul.f32 %v1511, %v2150
  %v2279 = vmul.f32 %v1609, %v2151
  %v2280 = vmul.f32 %v1707, %v2152
  %v2281 = vmul.f32 %v1805, %v2153
  %v2282 = vmul.f32 %v1903, %v2154
  %v2283 = vmul.f32 %v2001, %v2155
  %v2284 = vmul.f32 %v2099, %v2156
  %v2285 = vmul.f32 %v1415, %v2157
  %v2286 = vmul.f32 %v1513, %v2158
  %v2287 = vmul.f32 %v1611, %v2159
  %v2288 = vmul.f32 %v1709, %v2160
  %v2289 = vmul.f32 %v1807, %v2161
  %v2290 = vmul.f32 %v1905, %v2162
  %v2291 = vmul.f32 %v2003, %v2163
  %v2292 = vmul.f32 %v2101, %v2164
  %v2293 = vmul.f32 %v1418, %v2165
  %v2294 = vmul.f32 %v1516, %v2166
  %v2295 = vmul.f32 %v1614, %v2167
  %v2296 = vmul.f32 %v1712, %v2168
  %v2297 = vmul.f32 %v1810, %v2169
  %v2298 = vmul.f32 %v1908, %v2170
  %v2299 = vmul.f32 %v2006, %v2171
  %v2300 = vmul.f32 %v2104, %v2172
  %v2301 = vmul.f32 %v1420, %v2173
  %v2302 = vmul.f32 %v1518, %v2174
  %v2303 = vmul.f32 %v1616, %v2175
  %v2304 = vmul.f32 %v1714, %v2176
  %v2305 = vmul.f32 %v1812, %v2177
  %v2306 = vmul.f32 %v1910, %v2178
  %v2307 = vmul.f32 %v2008, %v2179
  %v2308 = vmul.f32 %v2106, %v2180
  %v2309 = vmul.f32 %v1423, %v2181
  %v2310 = vmul.f32 %v1521, %v2182
  %v2311 = vmul.f32 %v1619, %v2183
  %v2312 = vmul.f32 %v1717, %v2184
  %v2313 = vmul.f32 %v1815, %v2185
  %v2314 = vmul.f32 %v1913, %v2186
  %v2315 = vmul.f32 %v2011, %v2187
  %v2316 = vmul.f32 %v2109, %v2188
  %v2317 = vmul.f32 %v1425, %v2189
  %v2318 = vmul.f32 %v1523, %v2190
  %v2319 = vmul.f32 %v1621, %v2191
  %v2320 = vmul.f32 %v1719, %v2192
  %v2321 = vmul.f32 %v1817, %v2193
  %v2322 = vmul.f32 %v1915, %v2194
  %v2323 = vmul.f32 %v2013, %v2195
  %v2324 = vmul.f32 %v2111, %v2196
  %v2325 = vmul.f32 %v1428, %v2197
  %v2326 = vmul.f32 %v1526, %v2198
  %v2327 = vmul.f32 %v1624, %v2199
  %v2328 = vmul.f32 %v1722, %v2200
  %v2329 = vmul.f32 %v1820, %v2201
  %v2330 = vmul.f32 %v1918, %v2202
  %v2331 = vmul.f32 %v2016, %v2203
  %v2332 = vmul.f32 %v2114, %v2204
  %v2333 = vmul.f32 %v1430, %v2205
  %v2334 = vmul.f32 %v1528, %v2206
  %v2335 = vmul.f32 %v1626, %v2207
  %v2336 = vmul.f32 %v1724, %v2208
  %v2337 = vmul.f32 %v1822, %v2209
  %v2338 = vmul.f32 %v1920, %v2210
  %v2339 = vmul.f32 %v2018, %v2211
  %v2340 = vmul.f32 %v2116, %v2212
  %v2341 = vmul.f32 %v1433, %v2213
  %v2342 = vmul.f32 %v1531, %v2214
  %v2343 = vmul.f32 %v1629, %v2215
  %v2344 = vmul.f32 %v1727, %v2216
  %v2345 = vmul.f32 %v1825, %v2217
  %v2346 = vmul.f32 %v1923, %v2218
  %v2347 = vmul.f32 %v2021, %v2219
  %v2348 = vmul.f32 %v2119, %v2220
  %v2349 = vmul.f32 %v1435, %v2221
  %v2350 = vmul.f32 %v1533, %v2222
  %v2351 = vmul.f32 %v1631, %v2223
  %v2352 = vmul.f32 %v1729, %v2224
  %v2353 = vmul.f32 %v1827, %v2225
  %v2354 = vmul.f32 %v1925, %v2226
  %v2355 = vmul.f32 %v2023, %v2227
  %v2356 = vmul.f32 %v2121, %v2228
  %v2357 = vmul.f32 %v1438, %v2229
  %v2358 = vmul.f32 %v1536, %v2230
  %v2359 = vmul.f32 %v1634, %v2231
  %v2360 = vmul.f32 %v1732, %v2232
  %v2361 = vmul.f32 %v1830, %v2233
  %v2362 = vmul.f32 %v1928, %v2234
  %v2363 = vmul.f32 %v2026, %v2235
  %v2364 = vmul.f32 %v2124, %v2236
  %v2365 = vmul.f32 %v1440, %v2237
  %v2366 = vmul.f32 %v1538, %v2238
  %v2367 = vmul.f32 %v1636, %v2239
  %v2368 = vmul.f32 %v1734, %v2240
  %v2369 = vmul.f32 %v1832, %v2241
  %v2370 = vmul.f32 %v1930, %v2242
  %v2371 = vmul.f32 %v2028, %v2243
  %v2372 = vmul.f32 %v2126, %v2244
  %v2373 = vmul.f32 %v1443, %v2245
  %v2374 = vmul.f32 %v1541, %v2246
  %v2375 = vmul.f32 %v1639, %v2247
  %v2376 = vmul.f32 %v1737, %v2248
  %v2377 = vmul.f32 %v1835, %v2249
  %v2378 = vmul.f32 %v1933, %v2250
  %v2379 = vmul.f32 %v2031, %v2251
  %v2380 = vmul.f32 %v2129, %v2252
  %v2381 = vmul.f32 %v1445, %v2253
  %v2382 = vmul.f32 %v1543, %v2254
  %v2383 = vmul.f32 %v1641, %v2255
  %v2384 = vmul.f32 %v1739, %v2256
  %v2385 = vmul.f32 %v1837, %v2257
  %v2386 = vmul.f32 %v1935, %v2258
  %v2387 = vmul.f32 %v2033, %v2259
  %v2388 = vmul.f32 %v2131, %v2260
  %v2389 = vmul.f32 %v2261, 0.044715
  %v2390 = vmul.f32 %v2262, 0.044715
  %v2391 = vmul.f32 %v2263, 0.044715
  %v2392 = vmul.f32 %v2264, 0.044715
  %v2393 = vmul.f32 %v2265, 0.044715
  %v2394 = vmul.f32 %v2266, 0.044715
  %v2395 = vmul.f32 %v2267, 0.044715
  %v2396 = vmul.f32 %v2268, 0.044715
  %v2397 = vmul.f32 %v2269, 0.044715
  %v2398 = vmul.f32 %v2270, 0.044715
  %v2399 = vmul.f32 %v2271, 0.044715
  %v2400 = vmul.f32 %v2272, 0.044715
  %v2401 = vmul.f32 %v2273, 0.044715
  %v2402 = vmul.f32 %v2274, 0.044715
  %v2403 = vmul.f32 %v2275, 0.044715
  %v2404 = vmul.f32 %v2276, 0.044715
  %v2405 = vmul.f32 %v2277, 0.044715
  %v2406 = vmul.f32 %v2278, 0.044715
  %v2407 = vmul.f32 %v2279, 0.044715
  %v2408 = vmul.f32 %v2280, 0.044715
  %v2409 = vmul.f32 %v2281, 0.044715
  %v2410 = vmul.f32 %v2282, 0.044715
  %v2411 = vmul.f32 %v2283, 0.044715
  %v2412 = vmul.f32 %v2284, 0.044715
  %v2413 = vmul.f32 %v2285, 0.044715
  %v2414 = vmul.f32 %v2286, 0.044715
  %v2415 = vmul.f32 %v2287, 0.044715
  %v2416 = vmul.f32 %v2288, 0.044715
  %v2417 = vmul.f32 %v2289, 0.044715
  %v2418 = vmul.f32 %v2290, 0.044715
  %v2419 = vmul.f32 %v2291, 0.044715
  %v2420 = vmul.f32 %v2292, 0.044715
  %v2421 = vmul.f32 %v2293, 0.044715
  %v2422 = vmul.f32 %v2294, 0.044715
  %v2423 = vmul.f32 %v2295, 0.044715
  %v2424 = vmul.f32 %v2296, 0.044715
  %v2425 = vmul.f32 %v2297, 0.044715
  %v2426 = vmul.f32 %v2298, 0.044715
  %v2427 = vmul.f32 %v2299, 0.044715
  %v2428 = vmul.f32 %v2300, 0.044715
  %v2429 = vmul.f32 %v2301, 0.044715
  %v2430 = vmul.f32 %v2302, 0.044715
  %v2431 = vmul.f32 %v2303, 0.044715
  %v2432 = vmul.f32 %v2304, 0.044715
  %v2433 = vmul.f32 %v2305, 0.044715
  %v2434 = vmul.f32 %v2306, 0.044715
  %v2435 = vmul.f32 %v2307, 0.044715
  %v2436 = vmul.f32 %v2308, 0.044715
  %v2437 = vmul.f32 %v2309, 0.044715
  %v2438 = vmul.f32 %v2310, 0.044715
  %v2439 = vmul.f32 %v2311, 0.044715
  %v2440 = vmul.f32 %v2312, 0.044715
  %v2441 = vmul.f32 %v2313, 0.044715
  %v2442 = vmul.f32 %v2314, 0.044715
  %v2443 = vmul.f32 %v2315, 0.044715
  %v2444 = vmul.f32 %v2316, 0.044715
  %v2445 = vmul.f32 %v2317, 0.044715
  %v2446 = vmul.f32 %v2318, 0.044715
  %v2447 = vmul.f32 %v2319, 0.044715
  %v2448 = vmul.f32 %v2320, 0.044715
  %v2449 = vmul.f32 %v2321, 0.044715
  %v2450 = vmul.f32 %v2322, 0.044715
  %v2451 = vmul.f32 %v2323, 0.044715
  %v2452 = vmul.f32 %v2324, 0.044715
  %v2453 = vmul.f32 %v2325, 0.044715
  %v2454 = vmul.f32 %v2326, 0.044715
  %v2455 = vmul.f32 %v2327, 0.044715
  %v2456 = vmul.f32 %v2328, 0.044715
  %v2457 = vmul.f32 %v2329, 0.044715
  %v2458 = vmul.f32 %v2330, 0.044715
  %v2459 = vmul.f32 %v2331, 0.044715
  %v2460 = vmul.f32 %v2332, 0.044715
  %v2461 = vmul.f32 %v2333, 0.044715
  %v2462 = vmul.f32 %v2334, 0.044715
  %v2463 = vmul.f32 %v2335, 0.044715
  %v2464 = vmul.f32 %v2336, 0.044715
  %v2465 = vmul.f32 %v2337, 0.044715
  %v2466 = vmul.f32 %v2338, 0.044715
  %v2467 = vmul.f32 %v2339, 0.044715
  %v2468 = vmul.f32 %v2340, 0.044715
  %v2469 = vmul.f32 %v2341, 0.044715
  %v2470 = vmul.f32 %v2342, 0.044715
  %v2471 = vmul.f32 %v2343, 0.044715
  %v2472 = vmul.f32 %v2344, 0.044715
  %v2473 = vmul.f32 %v2345, 0.044715
  %v2474 = vmul.f32 %v2346, 0.044715
  %v2475 = vmul.f32 %v2347, 0.044715
  %v2476 = vmul.f32 %v2348, 0.044715
  %v2477 = vmul.f32 %v2349, 0.044715
  %v2478 = vmul.f32 %v2350, 0.044715
  %v2479 = vmul.f32 %v2351, 0.044715
  %v2480 = vmul.f32 %v2352, 0.044715
  %v2481 = vmul.f32 %v2353, 0.044715
  %v2482 = vmul.f32 %v2354, 0.044715
  %v2483 = vmul.f32 %v2355, 0.044715
  %v2484 = vmul.f32 %v2356, 0.044715
  %v2485 = vmul.f32 %v2357, 0.044715
  %v2486 = vmul.f32 %v2358, 0.044715
  %v2487 = vmul.f32 %v2359, 0.044715
  %v2488 = vmul.f32 %v2360, 0.044715
  %v2489 = vmul.f32 %v2361, 0.044715
  %v2490 = vmul.f32 %v2362, 0.044715
  %v2491 = vmul.f32 %v2363, 0.044715
  %v2492 = vmul.f32 %v2364, 0.044715
  %v2493 = vmul.f32 %v2365, 0.044715
  %v2494 = vmul.f32 %v2366, 0.044715
  %v2495 = vmul.f32 %v2367, 0.044715
  %v2496 = vmul.f32 %v2368, 0.044715
  %v2497 = vmul.f32 %v2369, 0.044715
  %v2498 = vmul.f32 %v2370, 0.044715
  %v2499 = vmul.f32 %v2371, 0.044715
  %v2500 = vmul.f32 %v2372, 0.044715
  %v2501 = vmul.f32 %v2373, 0.044715
  %v2502 = vmul.f32 %v2374, 0.044715
  %v2503 = vmul.f32 %v2375, 0.044715
  %v2504 = vmul.f32 %v2376, 0.044715
  %v2505 = vmul.f32 %v2377, 0.044715
  %v2506 = vmul.f32 %v2378, 0.044715
  %v2507 = vmul.f32 %v2379, 0.044715
  %v2508 = vmul.f32 %v2380, 0.044715
  %v2509 = vmul.f32 %v2381, 0.044715
  %v2510 = vmul.f32 %v2382, 0.044715
  %v2511 = vmul.f32 %v2383, 0.044715
  %v2512 = vmul.f32 %v2384, 0.044715
  %v2513 = vmul.f32 %v2385, 0.044715
  %v2514 = vmul.f32 %v2386, 0.044715
  %v2515 = vmul.f32 %v2387, 0.044715
  %v2516 = vmul.f32 %v2388, 0.044715
  %v2517 = vadd.f32 %v1408, %v2389
  %v2518 = vadd.f32 %v1506, %v2390
  %v2519 = vadd.f32 %v1604, %v2391
  %v2520 = vadd.f32 %v1702, %v2392
  %v2521 = vadd.f32 %v1800, %v2393
  %v2522 = vadd.f32 %v1898, %v2394
  %v2523 = vadd.f32 %v1996, %v2395
  %v2524 = vadd.f32 %v2094, %v2396
  %v2525 = vadd.f32 %v1410, %v2397
  %v2526 = vadd.f32 %v1508, %v2398
  %v2527 = vadd.f32 %v1606, %v2399
  %v2528 = vadd.f32 %v1704, %v2400
  %v2529 = vadd.f32 %v1802, %v2401
  %v2530 = vadd.f32 %v1900, %v2402
  %v2531 = vadd.f32 %v1998, %v2403
  %v2532 = vadd.f32 %v2096, %v2404
  %v2533 = vadd.f32 %v1413, %v2405
  %v2534 = vadd.f32 %v1511, %v2406
  %v2535 = vadd.f32 %v1609, %v2407
  %v2536 = vadd.f32 %v1707, %v2408
  %v2537 = vadd.f32 %v1805, %v2409
  %v2538 = vadd.f32 %v1903, %v2410
  %v2539 = vadd.f32 %v2001, %v2411
  %v2540 = vadd.f32 %v2099, %v2412
  %v2541 = vadd.f32 %v1415, %v2413
  %v2542 = vadd.f32 %v1513, %v2414
  %v2543 = vadd.f32 %v1611, %v2415
  %v2544 = vadd.f32 %v1709, %v2416
  %v2545 = vadd.f32 %v1807, %v2417
  %v2546 = vadd.f32 %v1905, %v2418
  %v2547 = vadd.f32 %v2003, %v2419
  %v2548 = vadd.f32 %v2101, %v2420
  %v2549 = vadd.f32 %v1418, %v2421
  %v2550 = vadd.f32 %v1516, %v2422
  %v2551 = vadd.f32 %v1614, %v2423
  %v2552 = vadd.f32 %v1712, %v2424
  %v2553 = vadd.f32 %v1810, %v2425
  %v2554 = vadd.f32 %v1908, %v2426
  %v2555 = vadd.f32 %v2006, %v2427
  %v2556 = vadd.f32 %v2104, %v2428
  %v2557 = vadd.f32 %v1420, %v2429
  %v2558 = vadd.f32 %v1518, %v2430
  %v2559 = vadd.f32 %v1616, %v2431
  %v2560 = vadd.f32 %v1714, %v2432
  %v2561 = vadd.f32 %v1812, %v2433
  %v2562 = vadd.f32 %v1910, %v2434
  %v2563 = vadd.f32 %v2008, %v2435
  %v2564 = vadd.f32 %v2106, %v2436
  %v2565 = vadd.f32 %v1423, %v2437
  %v2566 = vadd.f32 %v1521, %v2438
  %v2567 = vadd.f32 %v1619, %v2439
  %v2568 = vadd.f32 %v1717, %v2440
  %v2569 = vadd.f32 %v1815, %v2441
  %v2570 = vadd.f32 %v1913, %v2442
  %v2571 = vadd.f32 %v2011, %v2443
  %v2572 = vadd.f32 %v2109, %v2444
  %v2573 = vadd.f32 %v1425, %v2445
  %v2574 = vadd.f32 %v1523, %v2446
  %v2575 = vadd.f32 %v1621, %v2447
  %v2576 = vadd.f32 %v1719, %v2448
  %v2577 = vadd.f32 %v1817, %v2449
  %v2578 = vadd.f32 %v1915, %v2450
  %v2579 = vadd.f32 %v2013, %v2451
  %v2580 = vadd.f32 %v2111, %v2452
  %v2581 = vadd.f32 %v1428, %v2453
  %v2582 = vadd.f32 %v1526, %v2454
  %v2583 = vadd.f32 %v1624, %v2455
  %v2584 = vadd.f32 %v1722, %v2456
  %v2585 = vadd.f32 %v1820, %v2457
  %v2586 = vadd.f32 %v1918, %v2458
  %v2587 = vadd.f32 %v2016, %v2459
  %v2588 = vadd.f32 %v2114, %v2460
  %v2589 = vadd.f32 %v1430, %v2461
  %v2590 = vadd.f32 %v1528, %v2462
  %v2591 = vadd.f32 %v1626, %v2463
  %v2592 = vadd.f32 %v1724, %v2464
  %v2593 = vadd.f32 %v1822, %v2465
  %v2594 = vadd.f32 %v1920, %v2466
  %v2595 = vadd.f32 %v2018, %v2467
  %v2596 = vadd.f32 %v2116, %v2468
  %v2597 = vadd.f32 %v1433, %v2469
  %v2598 = vadd.f32 %v1531, %v2470
  %v2599 = vadd.f32 %v1629, %v2471
  %v2600 = vadd.f32 %v1727, %v2472
  %v2601 = vadd.f32 %v1825, %v2473
  %v2602 = vadd.f32 %v1923, %v2474
  %v2603 = vadd.f32 %v2021, %v2475
  %v2604 = vadd.f32 %v2119, %v2476
  %v2605 = vadd.f32 %v1435, %v2477
  %v2606 = vadd.f32 %v1533, %v2478
  %v2607 = vadd.f32 %v1631, %v2479
  %v2608 = vadd.f32 %v1729, %v2480
  %v2609 = vadd.f32 %v1827, %v2481
  %v2610 = vadd.f32 %v1925, %v2482
  %v2611 = vadd.f32 %v2023, %v2483
  %v2612 = vadd.f32 %v2121, %v2484
  %v2613 = vadd.f32 %v1438, %v2485
  %v2614 = vadd.f32 %v1536, %v2486
  %v2615 = vadd.f32 %v1634, %v2487
  %v2616 = vadd.f32 %v1732, %v2488
  %v2617 = vadd.f32 %v1830, %v2489
  %v2618 = vadd.f32 %v1928, %v2490
  %v2619 = vadd.f32 %v2026, %v2491
  %v2620 = vadd.f32 %v2124, %v2492
  %v2621 = vadd.f32 %v1440, %v2493
  %v2622 = vadd.f32 %v1538, %v2494
  %v2623 = vadd.f32 %v1636, %v2495
  %v2624 = vadd.f32 %v1734, %v2496
  %v2625 = vadd.f32 %v1832, %v2497
  %v2626 = vadd.f32 %v1930, %v2498
  %v2627 = vadd.f32 %v2028, %v2499
  %v2628 = vadd.f32 %v2126, %v2500
  %v2629 = vadd.f32 %v1443, %v2501
  %v2630 = vadd.f32 %v1541, %v2502
  %v2631 = vadd.f32 %v1639, %v2503
  %v2632 = vadd.f32 %v1737, %v2504
  %v2633 = vadd.f32 %v1835, %v2505
  %v2634 = vadd.f32 %v1933, %v2506
  %v2635 = vadd.f32 %v2031, %v2507
  %v2636 = vadd.f32 %v2129, %v2508
  %v2637 = vadd.f32 %v1445, %v2509
  %v2638 = vadd.f32 %v1543, %v2510
  %v2639 = vadd.f32 %v1641, %v2511
  %v2640 = vadd.f32 %v1739, %v2512
  %v2641 = vadd.f32 %v1837, %v2513
  %v2642 = vadd.f32 %v1935, %v2514
  %v2643 = vadd.f32 %v2033, %v2515
  %v2644 = vadd.f32 %v2131, %v2516
  %v2645 = vmul.f32 %v2517, 0.7978846
  %v2646 = vmul.f32 %v2518, 0.7978846
  %v2647 = vmul.f32 %v2519, 0.7978846
  %v2648 = vmul.f32 %v2520, 0.7978846
  %v2649 = vmul.f32 %v2521, 0.7978846
  %v2650 = vmul.f32 %v2522, 0.7978846
  %v2651 = vmul.f32 %v2523, 0.7978846
  %v2652 = vmul.f32 %v2524, 0.7978846
  %v2653 = vmul.f32 %v2525, 0.7978846
  %v2654 = vmul.f32 %v2526, 0.7978846
  %v2655 = vmul.f32 %v2527, 0.7978846
  %v2656 = vmul.f32 %v2528, 0.7978846
  %v2657 = vmul.f32 %v2529, 0.7978846
  %v2658 = vmul.f32 %v2530, 0.7978846
  %v2659 = vmul.f32 %v2531, 0.7978846
  %v2660 = vmul.f32 %v2532, 0.7978846
  %v2661 = vmul.f32 %v2533, 0.7978846
  %v2662 = vmul.f32 %v2534, 0.7978846
  %v2663 = vmul.f32 %v2535, 0.7978846
  %v2664 = vmul.f32 %v2536, 0.7978846
  %v2665 = vmul.f32 %v2537, 0.7978846
  %v2666 = vmul.f32 %v2538, 0.7978846
  %v2667 = vmul.f32 %v2539, 0.7978846
  %v2668 = vmul.f32 %v2540, 0.7978846
  %v2669 = vmul.f32 %v2541, 0.7978846
  %v2670 = vmul.f32 %v2542, 0.7978846
  %v2671 = vmul.f32 %v2543, 0.7978846
  %v2672 = vmul.f32 %v2544, 0.7978846
  %v2673 = vmul.f32 %v2545, 0.7978846
  %v2674 = vmul.f32 %v2546, 0.7978846
  %v2675 = vmul.f32 %v2547, 0.7978846
  %v2676 = vmul.f32 %v2548, 0.7978846
  %v2677 = vmul.f32 %v2549, 0.7978846
  %v2678 = vmul.f32 %v2550, 0.7978846
  %v2679 = vmul.f32 %v2551, 0.7978846
  %v2680 = vmul.f32 %v2552, 0.7978846
  %v2681 = vmul.f32 %v2553, 0.7978846
  %v2682 = vmul.f32 %v2554, 0.7978846
  %v2683 = vmul.f32 %v2555, 0.7978846
  %v2684 = vmul.f32 %v2556, 0.7978846
  %v2685 = vmul.f32 %v2557, 0.7978846
  %v2686 = vmul.f32 %v2558, 0.7978846
  %v2687 = vmul.f32 %v2559, 0.7978846
  %v2688 = vmul.f32 %v2560, 0.7978846
  %v2689 = vmul.f32 %v2561, 0.7978846
  %v2690 = vmul.f32 %v2562, 0.7978846
  %v2691 = vmul.f32 %v2563, 0.7978846
  %v2692 = vmul.f32 %v2564, 0.7978846
  %v2693 = vmul.f32 %v2565, 0.7978846
  %v2694 = vmul.f32 %v2566, 0.7978846
  %v2695 = vmul.f32 %v2567, 0.7978846
  %v2696 = vmul.f32 %v2568, 0.7978846
  %v2697 = vmul.f32 %v2569, 0.7978846
  %v2698 = vmul.f32 %v2570, 0.7978846
  %v2699 = vmul.f32 %v2571, 0.7978846
  %v2700 = vmul.f32 %v2572, 0.7978846
  %v2701 = vmul.f32 %v2573, 0.7978846
  %v2702 = vmul.f32 %v2574, 0.7978846
  %v2703 = vmul.f32 %v2575, 0.7978846
  %v2704 = vmul.f32 %v2576, 0.7978846
  %v2705 = vmul.f32 %v2577, 0.7978846
  %v2706 = vmul.f32 %v2578, 0.7978846
  %v2707 = vmul.f32 %v2579, 0.7978846
  %v2708 = vmul.f32 %v2580, 0.7978846
  %v2709 = vmul.f32 %v2581, 0.7978846
  %v2710 = vmul.f32 %v2582, 0.7978846
  %v2711 = vmul.f32 %v2583, 0.7978846
  %v2712 = vmul.f32 %v2584, 0.7978846
  %v2713 = vmul.f32 %v2585, 0.7978846
  %v2714 = vmul.f32 %v2586, 0.7978846
  %v2715 = vmul.f32 %v2587, 0.7978846
  %v2716 = vmul.f32 %v2588, 0.7978846
  %v2717 = vmul.f32 %v2589, 0.7978846
  %v2718 = vmul.f32 %v2590, 0.7978846
  %v2719 = vmul.f32 %v2591, 0.7978846
  %v2720 = vmul.f32 %v2592, 0.7978846
  %v2721 = vmul.f32 %v2593, 0.7978846
  %v2722 = vmul.f32 %v2594, 0.7978846
  %v2723 = vmul.f32 %v2595, 0.7978846
  %v2724 = vmul.f32 %v2596, 0.7978846
  %v2725 = vmul.f32 %v2597, 0.7978846
  %v2726 = vmul.f32 %v2598, 0.7978846
  %v2727 = vmul.f32 %v2599, 0.7978846
  %v2728 = vmul.f32 %v2600, 0.7978846
  %v2729 = vmul.f32 %v2601, 0.7978846
  %v2730 = vmul.f32 %v2602, 0.7978846
  %v2731 = vmul.f32 %v2603, 0.7978846
  %v2732 = vmul.f32 %v2604, 0.7978846
  %v2733 = vmul.f32 %v2605, 0.7978846
  %v2734 = vmul.f32 %v2606, 0.7978846
  %v2735 = vmul.f32 %v2607, 0.7978846
  %v2736 = vmul.f32 %v2608, 0.7978846
  %v2737 = vmul.f32 %v2609, 0.7978846
  %v2738 = vmul.f32 %v2610, 0.7978846
  %v2739 = vmul.f32 %v2611, 0.7978846
  %v2740 = vmul.f32 %v2612, 0.7978846
  %v2741 = vmul.f32 %v2613, 0.7978846
  %v2742 = vmul.f32 %v2614, 0.7978846
  %v2743 = vmul.f32 %v2615, 0.7978846
  %v2744 = vmul.f32 %v2616, 0.7978846
  %v2745 = vmul.f32 %v2617, 0.7978846
  %v2746 = vmul.f32 %v2618, 0.7978846
  %v2747 = vmul.f32 %v2619, 0.7978846
  %v2748 = vmul.f32 %v2620, 0.7978846
  %v2749 = vmul.f32 %v2621, 0.7978846
  %v2750 = vmul.f32 %v2622, 0.7978846
  %v2751 = vmul.f32 %v2623, 0.7978846
  %v2752 = vmul.f32 %v2624, 0.7978846
  %v2753 = vmul.f32 %v2625, 0.7978846
  %v2754 = vmul.f32 %v2626, 0.7978846
  %v2755 = vmul.f32 %v2627, 0.7978846
  %v2756 = vmul.f32 %v2628, 0.7978846
  %v2757 = vmul.f32 %v2629, 0.7978846
  %v2758 = vmul.f32 %v2630, 0.7978846
  %v2759 = vmul.f32 %v2631, 0.7978846
  %v2760 = vmul.f32 %v2632, 0.7978846
  %v2761 = vmul.f32 %v2633, 0.7978846
  %v2762 = vmul.f32 %v2634, 0.7978846
  %v2763 = vmul.f32 %v2635, 0.7978846
  %v2764 = vmul.f32 %v2636, 0.7978846
  %v2765 = vmul.f32 %v2637, 0.7978846
  %v2766 = vmul.f32 %v2638, 0.7978846
  %v2767 = vmul.f32 %v2639, 0.7978846
  %v2768 = vmul.f32 %v2640, 0.7978846
  %v2769 = vmul.f32 %v2641, 0.7978846
  %v2770 = vmul.f32 %v2642, 0.7978846
  %v2771 = vmul.f32 %v2643, 0.7978846
  %v2772 = vmul.f32 %v2644, 0.7978846
  %v2773 = vtanh.pop %v2645
  %v2774 = vtanh.pop %v2646
  %v2775 = vtanh.pop %v2647
  %v2776 = vtanh.pop %v2648
  %v2777 = vtanh.pop %v2649
  %v2778 = vtanh.pop %v2650
  %v2779 = vtanh.pop %v2651
  %v2780 = vtanh.pop %v2652
  %v2781 = vtanh.pop %v2653
  %v2782 = vtanh.pop %v2654
  %v2783 = vtanh.pop %v2655
  %v2784 = vtanh.pop %v2656
  %v2785 = vtanh.pop %v2657
  %v2786 = vtanh.pop %v2658
  %v2787 = vtanh.pop %v2659
  %v2788 = vtanh.pop %v2660
  %v2789 = vtanh.pop %v2661
  %v2790 = vtanh.pop %v2662
  %v2791 = vtanh.pop %v2663
  %v2792 = vtanh.pop %v2664
  %v2793 = vtanh.pop %v2665
  %v2794 = vtanh.pop %v2666
  %v2795 = vtanh.pop %v2667
  %v2796 = vtanh.pop %v2668
  %v2797 = vtanh.pop %v2669
  %v2798 = vtanh.pop %v2670
  %v2799 = vtanh.pop %v2671
  %v2800 = vtanh.pop %v2672
  %v2801 = vtanh.pop %v2673
  %v2802 = vtanh.pop %v2674
  %v2803 = vtanh.pop %v2675
  %v2804 = vtanh.pop %v2676
  %v2805 = vtanh.pop %v2677
  %v2806 = vtanh.pop %v2678
  %v2807 = vtanh.pop %v2679
  %v2808 = vtanh.pop %v2680
  %v2809 = vtanh.pop %v2681
  %v2810 = vtanh.pop %v2682
  %v2811 = vtanh.pop %v2683
  %v2812 = vtanh.pop %v2684
  %v2813 = vtanh.pop %v2685
  %v2814 = vtanh.pop %v2686
  %v2815 = vtanh.pop %v2687
  %v2816 = vtanh.pop %v2688
  %v2817 = vtanh.pop %v2689
  %v2818 = vtanh.pop %v2690
  %v2819 = vtanh.pop %v2691
  %v2820 = vtanh.pop %v2692
  %v2821 = vtanh.pop %v2693
  %v2822 = vtanh.pop %v2694
  %v2823 = vtanh.pop %v2695
  %v2824 = vtanh.pop %v2696
  %v2825 = vtanh.pop %v2697
  %v2826 = vtanh.pop %v2698
  %v2827 = vtanh.pop %v2699
  %v2828 = vtanh.pop %v2700
  %v2829 = vtanh.pop %v2701
  %v2830 = vtanh.pop %v2702
  %v2831 = vtanh.pop %v2703
  %v2832 = vtanh.pop %v2704
  %v2833 = vtanh.pop %v2705
  %v2834 = vtanh.pop %v2706
  %v2835 = vtanh.pop %v2707
  %v2836 = vtanh.pop %v2708
  %v2837 = vtanh.pop %v2709
  %v2838 = vtanh.pop %v2710
  %v2839 = vtanh.pop %v2711
  %v2840 = vtanh.pop %v2712
  %v2841 = vtanh.pop %v2713
  %v2842 = vtanh.pop %v2714
  %v2843 = vtanh.pop %v2715
  %v2844 = vtanh.pop %v2716
  %v2845 = vtanh.pop %v2717
  %v2846 = vtanh.pop %v2718
  %v2847 = vtanh.pop %v2719
  %v2848 = vtanh.pop %v2720
  %v2849 = vtanh.pop %v2721
  %v2850 = vtanh.pop %v2722
  %v2851 = vtanh.pop %v2723
  %v2852 = vtanh.pop %v2724
  %v2853 = vtanh.pop %v2725
  %v2854 = vtanh.pop %v2726
  %v2855 = vtanh.pop %v2727
  %v2856 = vtanh.pop %v2728
  %v2857 = vtanh.pop %v2729
  %v2858 = vtanh.pop %v2730
  %v2859 = vtanh.pop %v2731
  %v2860 = vtanh.pop %v2732
  %v2861 = vtanh.pop %v2733
  %v2862 = vtanh.pop %v2734
  %v2863 = vtanh.pop %v2735
  %v2864 = vtanh.pop %v2736
  %v2865 = vtanh.pop %v2737
  %v2866 = vtanh.pop %v2738
  %v2867 = vtanh.pop %v2739
  %v2868 = vtanh.pop %v2740
  %v2869 = vtanh.pop %v2741
  %v2870 = vtanh.pop %v2742
  %v2871 = vtanh.pop %v2743
  %v2872 = vtanh.pop %v2744
  %v2873 = vtanh.pop %v2745
  %v2874 = vtanh.pop %v2746
  %v2875 = vtanh.pop %v2747
  %v2876 = vtanh.pop %v2748
  %v2877 = vtanh.pop %v2749
  %v2878 = vtanh.pop %v2750
  %v2879 = vtanh.pop %v2751
  %v2880 = vtanh.pop %v2752
  %v2881 = vtanh.pop %v2753
  %v2882 = vtanh.pop %v2754
  %v2883 = vtanh.pop %v2755
  %v2884 = vtanh.pop %v2756
  %v2885 = vtanh.pop %v2757
  %v2886 = vtanh.pop %v2758
  %v2887 = vtanh.pop %v2759
  %v2888 = vtanh.pop %v2760
  %v2889 = vtanh.pop %v2761
  %v2890 = vtanh.pop %v2762
  %v2891 = vtanh.pop %v2763
  %v2892 = vtanh.pop %v2764
  %v2893 = vtanh.pop %v2765
  %v2894 = vtanh.pop %v2766
  %v2895 = vtanh.pop %v2767
  %v2896 = vtanh.pop %v2768
  %v2897 = vtanh.pop %v2769
  %v2898 = vtanh.pop %v2770
  %v2899 = vtanh.pop %v2771
  %v2900 = vtanh.pop %v2772
  %v2901 = vadd.f32 %v2773, 1.0
  %v2902 = vadd.f32 %v2774, 1.0
  %v2903 = vadd.f32 %v2775, 1.0
  %v2904 = vadd.f32 %v2776, 1.0
  %v2905 = vadd.f32 %v2777, 1.0
  %v2906 = vadd.f32 %v2778, 1.0
  %v2907 = vadd.f32 %v2779, 1.0
  %v2908 = vadd.f32 %v2780, 1.0
  %v2909 = vadd.f32 %v2781, 1.0
  %v2910 = vadd.f32 %v2782, 1.0
  %v2911 = vadd.f32 %v2783, 1.0
  %v2912 = vadd.f32 %v2784, 1.0
  %v2913 = vadd.f32 %v2785, 1.0
  %v2914 = vadd.f32 %v2786, 1.0
  %v2915 = vadd.f32 %v2787, 1.0
  %v2916 = vadd.f32 %v2788, 1.0
  %v2917 = vadd.f32 %v2789, 1.0
  %v2918 = vadd.f32 %v2790, 1.0
  %v2919 = vadd.f32 %v2791, 1.0
  %v2920 = vadd.f32 %v2792, 1.0
  %v2921 = vadd.f32 %v2793, 1.0
  %v2922 = vadd.f32 %v2794, 1.0
  %v2923 = vadd.f32 %v2795, 1.0
  %v2924 = vadd.f32 %v2796, 1.0
  %v2925 = vadd.f32 %v2797, 1.0
  %v2926 = vadd.f32 %v2798, 1.0
  %v2927 = vadd.f32 %v2799, 1.0
  %v2928 = vadd.f32 %v2800, 1.0
  %v2929 = vadd.f32 %v2801, 1.0
  %v2930 = vadd.f32 %v2802, 1.0
  %v2931 = vadd.f32 %v2803, 1.0
  %v2932 = vadd.f32 %v2804, 1.0
  %v2933 = vadd.f32 %v2805, 1.0
  %v2934 = vadd.f32 %v2806, 1.0
  %v2935 = vadd.f32 %v2807, 1.0
  %v2936 = vadd.f32 %v2808, 1.0
  %v2937 = vadd.f32 %v2809, 1.0
  %v2938 = vadd.f32 %v2810, 1.0
  %v2939 = vadd.f32 %v2811, 1.0
  %v2940 = vadd.f32 %v2812, 1.0
  %v2941 = vadd.f32 %v2813, 1.0
  %v2942 = vadd.f32 %v2814, 1.0
  %v2943 = vadd.f32 %v2815, 1.0
  %v2944 = vadd.f32 %v2816, 1.0
  %v2945 = vadd.f32 %v2817, 1.0
  %v2946 = vadd.f32 %v2818, 1.0
  %v2947 = vadd.f32 %v2819, 1.0
  %v2948 = vadd.f32 %v2820, 1.0
  %v2949 = vadd.f32 %v2821, 1.0
  %v2950 = vadd.f32 %v2822, 1.0
  %v2951 = vadd.f32 %v2823, 1.0
  %v2952 = vadd.f32 %v2824, 1.0
  %v2953 = vadd.f32 %v2825, 1.0
  %v2954 = vadd.f32 %v2826, 1.0
  %v2955 = vadd.f32 %v2827, 1.0
  %v2956 = vadd.f32 %v2828, 1.0
  %v2957 = vadd.f32 %v2829, 1.0
  %v2958 = vadd.f32 %v2830, 1.0
  %v2959 = vadd.f32 %v2831, 1.0
  %v2960 = vadd.f32 %v2832, 1.0
  %v2961 = vadd.f32 %v2833, 1.0
  %v2962 = vadd.f32 %v2834, 1.0
  %v2963 = vadd.f32 %v2835, 1.0
  %v2964 = vadd.f32 %v2836, 1.0
  %v2965 = vadd.f32 %v2837, 1.0
  %v2966 = vadd.f32 %v2838, 1.0
  %v2967 = vadd.f32 %v2839, 1.0
  %v2968 = vadd.f32 %v2840, 1.0
  %v2969 = vadd.f32 %v2841, 1.0
  %v2970 = vadd.f32 %v2842, 1.0
  %v2971 = vadd.f32 %v2843, 1.0
  %v2972 = vadd.f32 %v2844, 1.0
  %v2973 = vadd.f32 %v2845, 1.0
  %v2974 = vadd.f32 %v2846, 1.0
  %v2975 = vadd.f32 %v2847, 1.0
  %v2976 = vadd.f32 %v2848, 1.0
  %v2977 = vadd.f32 %v2849, 1.0
  %v2978 = vadd.f32 %v2850, 1.0
  %v2979 = vadd.f32 %v2851, 1.0
  %v2980 = vadd.f32 %v2852, 1.0
  %v2981 = vadd.f32 %v2853, 1.0
  %v2982 = vadd.f32 %v2854, 1.0
  %v2983 = vadd.f32 %v2855, 1.0
  %v2984 = vadd.f32 %v2856, 1.0
  %v2985 = vadd.f32 %v2857, 1.0
  %v2986 = vadd.f32 %v2858, 1.0
  %v2987 = vadd.f32 %v2859, 1.0
  %v2988 = vadd.f32 %v2860, 1.0
  %v2989 = vadd.f32 %v2861, 1.0
  %v2990 = vadd.f32 %v2862, 1.0
  %v2991 = vadd.f32 %v2863, 1.0
  %v2992 = vadd.f32 %v2864, 1.0
  %v2993 = vadd.f32 %v2865, 1.0
  %v2994 = vadd.f32 %v2866, 1.0
  %v2995 = vadd.f32 %v2867, 1.0
  %v2996 = vadd.f32 %v2868, 1.0
  %v2997 = vadd.f32 %v2869, 1.0
  %v2998 = vadd.f32 %v2870, 1.0
  %v2999 = vadd.f32 %v2871, 1.0
  %v3000 = vadd.f32 %v2872, 1.0
  %v3001 = vadd.f32 %v2873, 1.0
  %v3002 = vadd.f32 %v2874, 1.0
  %v3003 = vadd.f32 %v2875, 1.0
  %v3004 = vadd.f32 %v2876, 1.0
  %v3005 = vadd.f32 %v2877, 1.0
  %v3006 = vadd.f32 %v2878, 1.0
  %v3007 = vadd.f32 %v2879, 1.0
  %v3008 = vadd.f32 %v2880, 1.0
  %v3009 = vadd.f32 %v2881, 1.0
  %v3010 = vadd.f32 %v2882, 1.0
  %v3011 = vadd.f32 %v2883, 1.0
  %v3012 = vadd.f32 %v2884, 1.0
  %v3013 = vadd.f32 %v2885, 1.0
  %v3014 = vadd.f32 %v2886, 1.0
  %v3015 = vadd.f32 %v2887, 1.0
  %v3016 = vadd.f32 %v2888, 1.0
  %v3017 = vadd.f32 %v2889, 1.0
  %v3018 = vadd.f32 %v2890, 1.0
  %v3019 = vadd.f32 %v2891, 1.0
  %v3020 = vadd.f32 %v2892, 1.0
  %v3021 = vadd.f32 %v2893, 1.0
  %v3022 = vadd.f32 %v2894, 1.0
  %v3023 = vadd.f32 %v2895, 1.0
  %v3024 = vadd.f32 %v2896, 1.0
  %v3025 = vadd.f32 %v2897, 1.0
  %v3026 = vadd.f32 %v2898, 1.0
  %v3027 = vadd.f32 %v2899, 1.0
  %v3028 = vadd.f32 %v2900, 1.0
  %v3029 = vmul.f32 %v2901, 0.5
  %v3030 = vmul.f32 %v2902, 0.5
  %v3031 = vmul.f32 %v2903, 0.5
  %v3032 = vmul.f32 %v2904, 0.5
  %v3033 = vmul.f32 %v2905, 0.5
  %v3034 = vmul.f32 %v2906, 0.5
  %v3035 = vmul.f32 %v2907, 0.5
  %v3036 = vmul.f32 %v2908, 0.5
  %v3037 = vmul.f32 %v2909, 0.5
  %v3038 = vmul.f32 %v2910, 0.5
  %v3039 = vmul.f32 %v2911, 0.5
  %v3040 = vmul.f32 %v2912, 0.5
  %v3041 = vmul.f32 %v2913, 0.5
  %v3042 = vmul.f32 %v2914, 0.5
  %v3043 = vmul.f32 %v2915, 0.5
  %v3044 = vmul.f32 %v2916, 0.5
  %v3045 = vmul.f32 %v2917, 0.5
  %v3046 = vmul.f32 %v2918, 0.5
  %v3047 = vmul.f32 %v2919, 0.5
  %v3048 = vmul.f32 %v2920, 0.5
  %v3049 = vmul.f32 %v2921, 0.5
  %v3050 = vmul.f32 %v2922, 0.5
  %v3051 = vmul.f32 %v2923, 0.5
  %v3052 = vmul.f32 %v2924, 0.5
  %v3053 = vmul.f32 %v2925, 0.5
  %v3054 = vmul.f32 %v2926, 0.5
  %v3055 = vmul.f32 %v2927, 0.5
  %v3056 = vmul.f32 %v2928, 0.5
  %v3057 = vmul.f32 %v2929, 0.5
  %v3058 = vmul.f32 %v2930, 0.5
  %v3059 = vmul.f32 %v2931, 0.5
  %v3060 = vmul.f32 %v2932, 0.5
  %v3061 = vmul.f32 %v2933, 0.5
  %v3062 = vmul.f32 %v2934, 0.5
  %v3063 = vmul.f32 %v2935, 0.5
  %v3064 = vmul.f32 %v2936, 0.5
  %v3065 = vmul.f32 %v2937, 0.5
  %v3066 = vmul.f32 %v2938, 0.5
  %v3067 = vmul.f32 %v2939, 0.5
  %v3068 = vmul.f32 %v2940, 0.5
  %v3069 = vmul.f32 %v2941, 0.5
  %v3070 = vmul.f32 %v2942, 0.5
  %v3071 = vmul.f32 %v2943, 0.5
  %v3072 = vmul.f32 %v2944, 0.5
  %v3073 = vmul.f32 %v2945, 0.5
  %v3074 = vmul.f32 %v2946, 0.5
  %v3075 = vmul.f32 %v2947, 0.5
  %v3076 = vmul.f32 %v2948, 0.5
  %v3077 = vmul.f32 %v2949, 0.5
  %v3078 = vmul.f32 %v2950, 0.5
  %v3079 = vmul.f32 %v2951, 0.5
  %v3080 = vmul.f32 %v2952, 0.5
  %v3081 = vmul.f32 %v2953, 0.5
  %v3082 = vmul.f32 %v2954, 0.5
  %v3083 = vmul.f32 %v2955, 0.5
  %v3084 = vmul.f32 %v2956, 0.5
  %v3085 = vmul.f32 %v2957, 0.5
  %v3086 = vmul.f32 %v2958, 0.5
  %v3087 = vmul.f32 %v2959, 0.5
  %v3088 = vmul.f32 %v2960, 0.5
  %v3089 = vmul.f32 %v2961, 0.5
  %v3090 = vmul.f32 %v2962, 0.5
  %v3091 = vmul.f32 %v2963, 0.5
  %v3092 = vmul.f32 %v2964, 0.5
  %v3093 = vmul.f32 %v2965, 0.5
  %v3094 = vmul.f32 %v2966, 0.5
  %v3095 = vmul.f32 %v2967, 0.5
  %v3096 = vmul.f32 %v2968, 0.5
  %v3097 = vmul.f32 %v2969, 0.5
  %v3098 = vmul.f32 %v2970, 0.5
  %v3099 = vmul.f32 %v2971, 0.5
  %v3100 = vmul.f32 %v2972, 0.5
  %v3101 = vmul.f32 %v2973, 0.5
  %v3102 = vmul.f32 %v2974, 0.5
  %v3103 = vmul.f32 %v2975, 0.5
  %v3104 = vmul.f32 %v2976, 0.5
  %v3105 = vmul.f32 %v2977, 0.5
  %v3106 = vmul.f32 %v2978, 0.5
  %v3107 = vmul.f32 %v2979, 0.5
  %v3108 = vmul.f32 %v2980, 0.5
  %v3109 = vmul.f32 %v2981, 0.5
  %v3110 = vmul.f32 %v2982, 0.5
  %v3111 = vmul.f32 %v2983, 0.5
  %v3112 = vmul.f32 %v2984, 0.5
  %v3113 = vmul.f32 %v2985, 0.5
  %v3114 = vmul.f32 %v2986, 0.5
  %v3115 = vmul.f32 %v2987, 0.5
  %v3116 = vmul.f32 %v2988, 0.5
  %v3117 = vmul.f32 %v2989, 0.5
  %v3118 = vmul.f32 %v2990, 0.5
  %v3119 = vmul.f32 %v2991, 0.5
  %v3120 = vmul.f32 %v2992, 0.5
  %v3121 = vmul.f32 %v2993, 0.5
  %v3122 = vmul.f32 %v2994, 0.5
  %v3123 = vmul.f32 %v2995, 0.5
  %v3124 = vmul.f32 %v2996, 0.5
  %v3125 = vmul.f32 %v2997, 0.5
  %v3126 = vmul.f32 %v2998, 0.5
  %v3127 = vmul.f32 %v2999, 0.5
  %v3128 = vmul.f32 %v3000, 0.5
  %v3129 = vmul.f32 %v3001, 0.5
  %v3130 = vmul.f32 %v3002, 0.5
  %v3131 = vmul.f32 %v3003, 0.5
  %v3132 = vmul.f32 %v3004, 0.5
  %v3133 = vmul.f32 %v3005, 0.5
  %v3134 = vmul.f32 %v3006, 0.5
  %v3135 = vmul.f32 %v3007, 0.5
  %v3136 = vmul.f32 %v3008, 0.5
  %v3137 = vmul.f32 %v3009, 0.5
  %v3138 = vmul.f32 %v3010, 0.5
  %v3139 = vmul.f32 %v3011, 0.5
  %v3140 = vmul.f32 %v3012, 0.5
  %v3141 = vmul.f32 %v3013, 0.5
  %v3142 = vmul.f32 %v3014, 0.5
  %v3143 = vmul.f32 %v3015, 0.5
  %v3144 = vmul.f32 %v3016, 0.5
  %v3145 = vmul.f32 %v3017, 0.5
  %v3146 = vmul.f32 %v3018, 0.5
  %v3147 = vmul.f32 %v3019, 0.5
  %v3148 = vmul.f32 %v3020, 0.5
  %v3149 = vmul.f32 %v3021, 0.5
  %v3150 = vmul.f32 %v3022, 0.5
  %v3151 = vmul.f32 %v3023, 0.5
  %v3152 = vmul.f32 %v3024, 0.5
  %v3153 = vmul.f32 %v3025, 0.5
  %v3154 = vmul.f32 %v3026, 0.5
  %v3155 = vmul.f32 %v3027, 0.5
  %v3156 = vmul.f32 %v3028, 0.5
  %v3157 = vmul.f32 %v1408, %v3029
  %v3158 = vmul.f32 %v1506, %v3030
  %v3159 = vmul.f32 %v1604, %v3031
  %v3160 = vmul.f32 %v1702, %v3032
  %v3161 = vmul.f32 %v1800, %v3033
  %v3162 = vmul.f32 %v1898, %v3034
  %v3163 = vmul.f32 %v1996, %v3035
  %v3164 = vmul.f32 %v2094, %v3036
  %v3165 = vmul.f32 %v1410, %v3037
  %v3166 = vmul.f32 %v1508, %v3038
  %v3167 = vmul.f32 %v1606, %v3039
  %v3168 = vmul.f32 %v1704, %v3040
  %v3169 = vmul.f32 %v1802, %v3041
  %v3170 = vmul.f32 %v1900, %v3042
  %v3171 = vmul.f32 %v1998, %v3043
  %v3172 = vmul.f32 %v2096, %v3044
  %v3173 = vmul.f32 %v1413, %v3045
  %v3174 = vmul.f32 %v1511, %v3046
  %v3175 = vmul.f32 %v1609, %v3047
  %v3176 = vmul.f32 %v1707, %v3048
  %v3177 = vmul.f32 %v1805, %v3049
  %v3178 = vmul.f32 %v1903, %v3050
  %v3179 = vmul.f32 %v2001, %v3051
  %v3180 = vmul.f32 %v2099, %v3052
  %v3181 = vmul.f32 %v1415, %v3053
  %v3182 = vmul.f32 %v1513, %v3054
  %v3183 = vmul.f32 %v1611, %v3055
  %v3184 = vmul.f32 %v1709, %v3056
  %v3185 = vmul.f32 %v1807, %v3057
  %v3186 = vmul.f32 %v1905, %v3058
  %v3187 = vmul.f32 %v2003, %v3059
  %v3188 = vmul.f32 %v2101, %v3060
  %v3189 = vmul.f32 %v1418, %v3061
  %v3190 = vmul.f32 %v1516, %v3062
  %v3191 = vmul.f32 %v1614, %v3063
  %v3192 = vmul.f32 %v1712, %v3064
  %v3193 = vmul.f32 %v1810, %v3065
  %v3194 = vmul.f32 %v1908, %v3066
  %v3195 = vmul.f32 %v2006, %v3067
  %v3196 = vmul.f32 %v2104, %v3068
  %v3197 = vmul.f32 %v1420, %v3069
  %v3198 = vmul.f32 %v1518, %v3070
  %v3199 = vmul.f32 %v1616, %v3071
  %v3200 = vmul.f32 %v1714, %v3072
  %v3201 = vmul.f32 %v1812, %v3073
  %v3202 = vmul.f32 %v1910, %v3074
  %v3203 = vmul.f32 %v2008, %v3075
  %v3204 = vmul.f32 %v2106, %v3076
  %v3205 = vmul.f32 %v1423, %v3077
  %v3206 = vmul.f32 %v1521, %v3078
  %v3207 = vmul.f32 %v1619, %v3079
  %v3208 = vmul.f32 %v1717, %v3080
  %v3209 = vmul.f32 %v1815, %v3081
  %v3210 = vmul.f32 %v1913, %v3082
  %v3211 = vmul.f32 %v2011, %v3083
  %v3212 = vmul.f32 %v2109, %v3084
  %v3213 = vmul.f32 %v1425, %v3085
  %v3214 = vmul.f32 %v1523, %v3086
  %v3215 = vmul.f32 %v1621, %v3087
  %v3216 = vmul.f32 %v1719, %v3088
  %v3217 = vmul.f32 %v1817, %v3089
  %v3218 = vmul.f32 %v1915, %v3090
  %v3219 = vmul.f32 %v2013, %v3091
  %v3220 = vmul.f32 %v2111, %v3092
  %v3221 = vmul.f32 %v1428, %v3093
  %v3222 = vmul.f32 %v1526, %v3094
  %v3223 = vmul.f32 %v1624, %v3095
  %v3224 = vmul.f32 %v1722, %v3096
  %v3225 = vmul.f32 %v1820, %v3097
  %v3226 = vmul.f32 %v1918, %v3098
  %v3227 = vmul.f32 %v2016, %v3099
  %v3228 = vmul.f32 %v2114, %v3100
  %v3229 = vmul.f32 %v1430, %v3101
  %v3230 = vmul.f32 %v1528, %v3102
  %v3231 = vmul.f32 %v1626, %v3103
  %v3232 = vmul.f32 %v1724, %v3104
  %v3233 = vmul.f32 %v1822, %v3105
  %v3234 = vmul.f32 %v1920, %v3106
  %v3235 = vmul.f32 %v2018, %v3107
  %v3236 = vmul.f32 %v2116, %v3108
  %v3237 = vmul.f32 %v1433, %v3109
  %v3238 = vmul.f32 %v1531, %v3110
  %v3239 = vmul.f32 %v1629, %v3111
  %v3240 = vmul.f32 %v1727, %v3112
  %v3241 = vmul.f32 %v1825, %v3113
  %v3242 = vmul.f32 %v1923, %v3114
  %v3243 = vmul.f32 %v2021, %v3115
  %v3244 = vmul.f32 %v2119, %v3116
  %v3245 = vmul.f32 %v1435, %v3117
  %v3246 = vmul.f32 %v1533, %v3118
  %v3247 = vmul.f32 %v1631, %v3119
  %v3248 = vmul.f32 %v1729, %v3120
  %v3249 = vmul.f32 %v1827, %v3121
  %v3250 = vmul.f32 %v1925, %v3122
  %v3251 = vmul.f32 %v2023, %v3123
  %v3252 = vmul.f32 %v2121, %v3124
  %v3253 = vmul.f32 %v1438, %v3125
  %v3254 = vmul.f32 %v1536, %v3126
  %v3255 = vmul.f32 %v1634, %v3127
  %v3256 = vmul.f32 %v1732, %v3128
  %v3257 = vmul.f32 %v1830, %v3129
  %v3258 = vmul.f32 %v1928, %v3130
  %v3259 = vmul.f32 %v2026, %v3131
  %v3260 = vmul.f32 %v2124, %v3132
  %v3261 = vmul.f32 %v1440, %v3133
  %v3262 = vmul.f32 %v1538, %v3134
  %v3263 = vmul.f32 %v1636, %v3135
  %v3264 = vmul.f32 %v1734, %v3136
  %v3265 = vmul.f32 %v1832, %v3137
  %v3266 = vmul.f32 %v1930, %v3138
  %v3267 = vmul.f32 %v2028, %v3139
  %v3268 = vmul.f32 %v2126, %v3140
  %v3269 = vmul.f32 %v1443, %v3141
  %v3270 = vmul.f32 %v1541, %v3142
  %v3271 = vmul.f32 %v1639, %v3143
  %v3272 = vmul.f32 %v1737, %v3144
  %v3273 = vmul.f32 %v1835, %v3145
  %v3274 = vmul.f32 %v1933, %v3146
  %v3275 = vmul.f32 %v2031, %v3147
  %v3276 = vmul.f32 %v2129, %v3148
  %v3277 = vmul.f32 %v1445, %v3149
  %v3278 = vmul.f32 %v1543, %v3150
  %v3279 = vmul.f32 %v1641, %v3151
  %v3280 = vmul.f32 %v1739, %v3152
  %v3281 = vmul.f32 %v1837, %v3153
  %v3282 = vmul.f32 %v1935, %v3154
  %v3283 = vmul.f32 %v2033, %v3155
  %v3284 = vmul.f32 %v2131, %v3156
  %v3285 = vpack.c.bf16 %v3165, %v3157
  %v3286 = vpack.c.bf16 %v3166, %v3158
  %v3287 = vpack.c.bf16 %v3167, %v3159
  %v3288 = vpack.c.bf16 %v3168, %v3160
  %v3289 = vpack.c.bf16 %v3169, %v3161
  %v3290 = vpack.c.bf16 %v3170, %v3162
  %v3291 = vpack.c.bf16 %v3171, %v3163
  %v3292 = vpack.c.bf16 %v3172, %v3164
  %v3293 = vpack.c.bf16 %v3181, %v3173
  %v3294 = vpack.c.bf16 %v3182, %v3174
  %v3295 = vpack.c.bf16 %v3183, %v3175
  %v3296 = vpack.c.bf16 %v3184, %v3176
  %v3297 = vpack.c.bf16 %v3185, %v3177
  %v3298 = vpack.c.bf16 %v3186, %v3178
  %v3299 = vpack.c.bf16 %v3187, %v3179
  %v3300 = vpack.c.bf16 %v3188, %v3180
  %v3301 = vpack.c.bf16 %v3197, %v3189
  %v3302 = vpack.c.bf16 %v3198, %v3190
  %v3303 = vpack.c.bf16 %v3199, %v3191
  %v3304 = vpack.c.bf16 %v3200, %v3192
  %v3305 = vpack.c.bf16 %v3201, %v3193
  %v3306 = vpack.c.bf16 %v3202, %v3194
  %v3307 = vpack.c.bf16 %v3203, %v3195
  %v3308 = vpack.c.bf16 %v3204, %v3196
  %v3309 = vpack.c.bf16 %v3213, %v3205
  %v3310 = vpack.c.bf16 %v3214, %v3206
  %v3311 = vpack.c.bf16 %v3215, %v3207
  %v3312 = vpack.c.bf16 %v3216, %v3208
  %v3313 = vpack.c.bf16 %v3217, %v3209
  %v3314 = vpack.c.bf16 %v3218, %v3210
  %v3315 = vpack.c.bf16 %v3219, %v3211
  %v3316 = vpack.c.bf16 %v3220, %v3212
  %v3317 = vpack.c.bf16 %v3229, %v3221
  %v3318 = vpack.c.bf16 %v3230, %v3222
  %v3319 = vpack.c.bf16 %v3231, %v3223
  %v3320 = vpack.c.bf16 %v3232, %v3224
  %v3321 = vpack.c.bf16 %v3233, %v3225
  %v3322 = vpack.c.bf16 %v3234, %v3226
  %v3323 = vpack.c.bf16 %v3235, %v3227
  %v3324 = vpack.c.bf16 %v3236, %v3228
  %v3325 = vpack.c.bf16 %v3245, %v3237
  %v3326 = vpack.c.bf16 %v3246, %v3238
  %v3327 = vpack.c.bf16 %v3247, %v3239
  %v3328 = vpack.c.bf16 %v3248, %v3240
  %v3329 = vpack.c.bf16 %v3249, %v3241
  %v3330 = vpack.c.bf16 %v3250, %v3242
  %v3331 = vpack.c.bf16 %v3251, %v3243
  %v3332 = vpack.c.bf16 %v3252, %v3244
  %v3333 = vpack.c.bf16 %v3261, %v3253
  %v3334 = vpack.c.bf16 %v3262, %v3254
  %v3335 = vpack.c.bf16 %v3263, %v3255
  %v3336 = vpack.c.bf16 %v3264, %v3256
  %v3337 = vpack.c.bf16 %v3265, %v3257
  %v3338 = vpack.c.bf16 %v3266, %v3258
  %v3339 = vpack.c.bf16 %v3267, %v3259
  %v3340 = vpack.c.bf16 %v3268, %v3260
  %v3341 = vpack.c.bf16 %v3277, %v3269
  %v3342 = vpack.c.bf16 %v3278, %v3270
  %v3343 = vpack.c.bf16 %v3279, %v3271
  %v3344 = vpack.c.bf16 %v3280, %v3272
  %v3345 = vpack.c.bf16 %v3281, %v3273
  %v3346 = vpack.c.bf16 %v3282, %v3274
  %v3347 = vpack.c.bf16 %v3283, %v3275
  %v3348 = vpack.c.bf16 %v3284, %v3276
  %v3349 = vld [vmem:[%s5] sm:$0xff]
  %v3350 = vld [vmem:[%s5 + $0x8] sm:$0xff]
  %v3351 = vld [vmem:[%s5 + $0x10] sm:$0xff]
  %v3352 = vld [vmem:[%s5 + $0x18] sm:$0xff]
  %v3353 = vld [vmem:[%s5 + $0x20] sm:$0xff]
  %v3354 = vld [vmem:[%s5 + $0x28] sm:$0xff]
  %v3355 = vld [vmem:[%s5 + $0x30] sm:$0xff]
  %v3356 = vld [vmem:[%s5 + $0x38] sm:$0xff]
  %v3357 = vld [vmem:[%s5 + $0x40] sm:$0xff]
  %v3358 = vld [vmem:[%s5 + $0x48] sm:$0xff]
  %v3359 = vld [vmem:[%s5 + $0x50] sm:$0xff]
  %v3360 = vld [vmem:[%s5 + $0x58] sm:$0xff]
  %v3361 = vld [vmem:[%s5 + $0x60] sm:$0xff]
  %v3362 = vld [vmem:[%s5 + $0x68] sm:$0xff]
  %v3363 = vld [vmem:[%s5 + $0x70] sm:$0xff]
  %v3364 = vld [vmem:[%s5 + $0x78] sm:$0xff]
  %v3365 = vld [vmem:[%s5 + $0x80] sm:$0xff]
  %v3366 = vld [vmem:[%s5 + $0x88] sm:$0xff]
  %v3367 = vld [vmem:[%s5 + $0x90] sm:$0xff]
  %v3368 = vld [vmem:[%s5 + $0x98] sm:$0xff]
  %v3369 = vld [vmem:[%s5 + $0xa0] sm:$0xff]
  %v3370 = vld [vmem:[%s5 + $0xa8] sm:$0xff]
  %v3371 = vld [vmem:[%s5 + $0xb0] sm:$0xff]
  %v3372 = vld [vmem:[%s5 + $0xb8] sm:$0xff]
  %v3373 = vld [vmem:[%s5 + $0xc0] sm:$0xff]
  %v3374 = vld [vmem:[%s5 + $0xc8] sm:$0xff]
  %v3375 = vld [vmem:[%s5 + $0xd0] sm:$0xff]
  %v3376 = vld [vmem:[%s5 + $0xd8] sm:$0xff]
  %v3377 = vld [vmem:[%s5 + $0xe0] sm:$0xff]
  %v3378 = vld [vmem:[%s5 + $0xe8] sm:$0xff]
  %v3379 = vld [vmem:[%s5 + $0xf0] sm:$0xff]
  %v3380 = vld [vmem:[%s5 + $0xf8] sm:$0xff]
  %v3381 = vld [vmem:[%s5 + $0x100] sm:$0xff]
  %v3382 = vld [vmem:[%s5 + $0x108] sm:$0xff]
  %v3383 = vld [vmem:[%s5 + $0x110] sm:$0xff]
  %v3384 = vld [vmem:[%s5 + $0x118] sm:$0xff]
  %v3385 = vld [vmem:[%s5 + $0x120] sm:$0xff]
  %v3386 = vld [vmem:[%s5 + $0x128] sm:$0xff]
  %v3387 = vld [vmem:[%s5 + $0x130] sm:$0xff]
  %v3388 = vld [vmem:[%s5 + $0x138] sm:$0xff]
  %v3389 = vld [vmem:[%s5 + $0x140] sm:$0xff]
  %v3390 = vld [vmem:[%s5 + $0x148] sm:$0xff]
  %v3391 = vld [vmem:[%s5 + $0x150] sm:$0xff]
  %v3392 = vld [vmem:[%s5 + $0x158] sm:$0xff]
  %v3393 = vld [vmem:[%s5 + $0x160] sm:$0xff]
  %v3394 = vld [vmem:[%s5 + $0x168] sm:$0xff]
  %v3395 = vld [vmem:[%s5 + $0x170] sm:$0xff]
  %v3396 = vld [vmem:[%s5 + $0x178] sm:$0xff]
  %v3397 = vld [vmem:[%s5 + $0x180] sm:$0xff]
  %v3398 = vld [vmem:[%s5 + $0x188] sm:$0xff]
  %v3399 = vld [vmem:[%s5 + $0x190] sm:$0xff]
  %v3400 = vld [vmem:[%s5 + $0x198] sm:$0xff]
  %v3401 = vld [vmem:[%s5 + $0x1a0] sm:$0xff]
  %v3402 = vld [vmem:[%s5 + $0x1a8] sm:$0xff]
  %v3403 = vld [vmem:[%s5 + $0x1b0] sm:$0xff]
  %v3404 = vld [vmem:[%s5 + $0x1b8] sm:$0xff]
  %v3405 = vld [vmem:[%s5 + $0x1c0] sm:$0xff]
  %v3406 = vld [vmem:[%s5 + $0x1c8] sm:$0xff]
  %v3407 = vld [vmem:[%s5 + $0x1d0] sm:$0xff]
  %v3408 = vld [vmem:[%s5 + $0x1d8] sm:$0xff]
  %v3409 = vld [vmem:[%s5 + $0x1e0] sm:$0xff]
  %v3410 = vld [vmem:[%s5 + $0x1e8] sm:$0xff]
  %v3411 = vld [vmem:[%s5 + $0x1f0] sm:$0xff]
  %v3412 = vld [vmem:[%s5 + $0x1f8] sm:$0xff]
  %v3413 = vld [vmem:[%s5 + $0x200] sm:$0xff]
  %v3414 = vld [vmem:[%s5 + $0x208] sm:$0xff]
  %v3415 = vld [vmem:[%s5 + $0x210] sm:$0xff]
  %v3416 = vld [vmem:[%s5 + $0x218] sm:$0xff]
  %v3417 = vld [vmem:[%s5 + $0x220] sm:$0xff]
  %v3418 = vld [vmem:[%s5 + $0x228] sm:$0xff]
  %v3419 = vld [vmem:[%s5 + $0x230] sm:$0xff]
  %v3420 = vld [vmem:[%s5 + $0x238] sm:$0xff]
  %v3421 = vld [vmem:[%s5 + $0x240] sm:$0xff]
  %v3422 = vld [vmem:[%s5 + $0x248] sm:$0xff]
  %v3423 = vld [vmem:[%s5 + $0x250] sm:$0xff]
  %v3424 = vld [vmem:[%s5 + $0x258] sm:$0xff]
  %v3425 = vld [vmem:[%s5 + $0x260] sm:$0xff]
  %v3426 = vld [vmem:[%s5 + $0x268] sm:$0xff]
  %v3427 = vld [vmem:[%s5 + $0x270] sm:$0xff]
  %v3428 = vld [vmem:[%s5 + $0x278] sm:$0xff]
  %v3429 = vld [vmem:[%s5 + $0x280] sm:$0xff]
  %v3430 = vld [vmem:[%s5 + $0x288] sm:$0xff]
  %v3431 = vld [vmem:[%s5 + $0x290] sm:$0xff]
  %v3432 = vld [vmem:[%s5 + $0x298] sm:$0xff]
  %v3433 = vld [vmem:[%s5 + $0x2a0] sm:$0xff]
  %v3434 = vld [vmem:[%s5 + $0x2a8] sm:$0xff]
  %v3435 = vld [vmem:[%s5 + $0x2b0] sm:$0xff]
  %v3436 = vld [vmem:[%s5 + $0x2b8] sm:$0xff]
  %v3437 = vld [vmem:[%s5 + $0x2c0] sm:$0xff]
  %v3438 = vld [vmem:[%s5 + $0x2c8] sm:$0xff]
  %v3439 = vld [vmem:[%s5 + $0x2d0] sm:$0xff]
  %v3440 = vld [vmem:[%s5 + $0x2d8] sm:$0xff]
  %v3441 = vld [vmem:[%s5 + $0x2e0] sm:$0xff]
  %v3442 = vld [vmem:[%s5 + $0x2e8] sm:$0xff]
  %v3443 = vld [vmem:[%s5 + $0x2f0] sm:$0xff]
  %v3444 = vld [vmem:[%s5 + $0x2f8] sm:$0xff]
  %v3445 = vld [vmem:[%s5 + $0x300] sm:$0xff]
  %v3446 = vld [vmem:[%s5 + $0x308] sm:$0xff]
  %v3447 = vld [vmem:[%s5 + $0x310] sm:$0xff]
  %v3448 = vld [vmem:[%s5 + $0x318] sm:$0xff]
  %v3449 = vld [vmem:[%s5 + $0x320] sm:$0xff]
  %v3450 = vld [vmem:[%s5 + $0x328] sm:$0xff]
  %v3451 = vld [vmem:[%s5 + $0x330] sm:$0xff]
  %v3452 = vld [vmem:[%s5 + $0x338] sm:$0xff]
  %v3453 = vld [vmem:[%s5 + $0x340] sm:$0xff]
  %v3454 = vld [vmem:[%s5 + $0x348] sm:$0xff]
  %v3455 = vld [vmem:[%s5 + $0x350] sm:$0xff]
  %v3456 = vld [vmem:[%s5 + $0x358] sm:$0xff]
  %v3457 = vld [vmem:[%s5 + $0x360] sm:$0xff]
  %v3458 = vld [vmem:[%s5 + $0x368] sm:$0xff]
  %v3459 = vld [vmem:[%s5 + $0x370] sm:$0xff]
  %v3460 = vld [vmem:[%s5 + $0x378] sm:$0xff]
  %v3461 = vld [vmem:[%s5 + $0x380] sm:$0xff]
  %v3462 = vld [vmem:[%s5 + $0x388] sm:$0xff]
  %v3463 = vld [vmem:[%s5 + $0x390] sm:$0xff]
  %v3464 = vld [vmem:[%s5 + $0x398] sm:$0xff]
  %v3465 = vld [vmem:[%s5 + $0x3a0] sm:$0xff]
  %v3466 = vld [vmem:[%s5 + $0x3a8] sm:$0xff]
  %v3467 = vld [vmem:[%s5 + $0x3b0] sm:$0xff]
  %v3468 = vld [vmem:[%s5 + $0x3b8] sm:$0xff]
  %v3469 = vld [vmem:[%s5 + $0x3c0] sm:$0xff]
  %v3470 = vld [vmem:[%s5 + $0x3c8] sm:$0xff]
  %v3471 = vld [vmem:[%s5 + $0x3d0] sm:$0xff]
  %v3472 = vld [vmem:[%s5 + $0x3d8] sm:$0xff]
  %v3473 = vld [vmem:[%s5 + $0x3e0] sm:$0xff]
  %v3474 = vld [vmem:[%s5 + $0x3e8] sm:$0xff]
  %v3475 = vld [vmem:[%s5 + $0x3f0] sm:$0xff]
  %v3476 = vld [vmem:[%s5 + $0x3f8] sm:$0xff]
  %v3605 = vunpack.c.l.b16 %v3349
  %v3606 = vunpack.c.h.b16 %v3349
  %v3607 = vunpack.c.l.b16 %v3350
  %v3608 = vunpack.c.h.b16 %v3350
  %v3609 = vunpack.c.l.b16 %v3351
  %v3610 = vunpack.c.h.b16 %v3351
  %v3611 = vunpack.c.l.b16 %v3352
  %v3612 = vunpack.c.h.b16 %v3352
  %v3613 = vunpack.c.l.b16 %v3353
  %v3614 = vunpack.c.h.b16 %v3353
  %v3615 = vunpack.c.l.b16 %v3354
  %v3616 = vunpack.c.h.b16 %v3354
  %v3617 = vunpack.c.l.b16 %v3355
  %v3618 = vunpack.c.h.b16 %v3355
  %v3619 = vunpack.c.l.b16 %v3356
  %v3620 = vunpack.c.h.b16 %v3356
  %v3621 = vunpack.c.l.b16 %v3357
  %v3622 = vunpack.c.h.b16 %v3357
  %v3623 = vunpack.c.l.b16 %v3358
  %v3624 = vunpack.c.h.b16 %v3358
  %v3625 = vunpack.c.l.b16 %v3359
  %v3626 = vunpack.c.h.b16 %v3359
  %v3627 = vunpack.c.l.b16 %v3360
  %v3628 = vunpack.c.h.b16 %v3360
  %v3629 = vunpack.c.l.b16 %v3361
  %v3630 = vunpack.c.h.b16 %v3361
  %v3631 = vunpack.c.l.b16 %v3362
  %v3632 = vunpack.c.h.b16 %v3362
  %v3633 = vunpack.c.l.b16 %v3363
  %v3634 = vunpack.c.h.b16 %v3363
  %v3635 = vunpack.c.l.b16 %v3364
  %v3636 = vunpack.c.h.b16 %v3364
  %v3637 = vunpack.c.l.b16 %v3365
  %v3638 = vunpack.c.h.b16 %v3365
  %v3639 = vunpack.c.l.b16 %v3366
  %v3640 = vunpack.c.h.b16 %v3366
  %v3641 = vunpack.c.l.b16 %v3367
  %v3642 = vunpack.c.h.b16 %v3367
  %v3643 = vunpack.c.l.b16 %v3368
  %v3644 = vunpack.c.h.b16 %v3368
  %v3645 = vunpack.c.l.b16 %v3369
  %v3646 = vunpack.c.h.b16 %v3369
  %v3647 = vunpack.c.l.b16 %v3370
  %v3648 = vunpack.c.h.b16 %v3370
  %v3649 = vunpack.c.l.b16 %v3371
  %v3650 = vunpack.c.h.b16 %v3371
  %v3651 = vunpack.c.l.b16 %v3372
  %v3652 = vunpack.c.h.b16 %v3372
  %v3653 = vunpack.c.l.b16 %v3373
  %v3654 = vunpack.c.h.b16 %v3373
  %v3655 = vunpack.c.l.b16 %v3374
  %v3656 = vunpack.c.h.b16 %v3374
  %v3657 = vunpack.c.l.b16 %v3375
  %v3658 = vunpack.c.h.b16 %v3375
  %v3659 = vunpack.c.l.b16 %v3376
  %v3660 = vunpack.c.h.b16 %v3376
  %v3661 = vunpack.c.l.b16 %v3377
  %v3662 = vunpack.c.h.b16 %v3377
  %v3663 = vunpack.c.l.b16 %v3378
  %v3664 = vunpack.c.h.b16 %v3378
  %v3665 = vunpack.c.l.b16 %v3379
  %v3666 = vunpack.c.h.b16 %v3379
  %v3667 = vunpack.c.l.b16 %v3380
  %v3668 = vunpack.c.h.b16 %v3380
  %v3669 = vunpack.c.l.b16 %v3381
  %v3670 = vunpack.c.h.b16 %v3381
  %v3671 = vunpack.c.l.b16 %v3382
  %v3672 = vunpack.c.h.b16 %v3382
  %v3673 = vunpack.c.l.b16 %v3383
  %v3674 = vunpack.c.h.b16 %v3383
  %v3675 = vunpack.c.l.b16 %v3384
  %v3676 = vunpack.c.h.b16 %v3384
  %v3677 = vunpack.c.l.b16 %v3385
  %v3678 = vunpack.c.h.b16 %v3385
  %v3679 = vunpack.c.l.b16 %v3386
  %v3680 = vunpack.c.h.b16 %v3386
  %v3681 = vunpack.c.l.b16 %v3387
  %v3682 = vunpack.c.h.b16 %v3387
  %v3683 = vunpack.c.l.b16 %v3388
  %v3684 = vunpack.c.h.b16 %v3388
  %v3685 = vunpack.c.l.b16 %v3389
  %v3686 = vunpack.c.h.b16 %v3389
  %v3687 = vunpack.c.l.b16 %v3390
  %v3688 = vunpack.c.h.b16 %v3390
  %v3689 = vunpack.c.l.b16 %v3391
  %v3690 = vunpack.c.h.b16 %v3391
  %v3691 = vunpack.c.l.b16 %v3392
  %v3692 = vunpack.c.h.b16 %v3392
  %v3693 = vunpack.c.l.b16 %v3393
  %v3694 = vunpack.c.h.b16 %v3393
  %v3695 = vunpack.c.l.b16 %v3394
  %v3696 = vunpack.c.h.b16 %v3394
  %v3697 = vunpack.c.l.b16 %v3395
  %v3698 = vunpack.c.h.b16 %v3395
  %v3699 = vunpack.c.l.b16 %v3396
  %v3700 = vunpack.c.h.b16 %v3396
  %v3701 = vunpack.c.l.b16 %v3397
  %v3702 = vunpack.c.h.b16 %v3397
  %v3703 = vunpack.c.l.b16 %v3398
  %v3704 = vunpack.c.h.b16 %v3398
  %v3705 = vunpack.c.l.b16 %v3399
  %v3706 = vunpack.c.h.b16 %v3399
  %v3707 = vunpack.c.l.b16 %v3400
  %v3708 = vunpack.c.h.b16 %v3400
  %v3709 = vunpack.c.l.b16 %v3401
  %v3710 = vunpack.c.h.b16 %v3401
  %v3711 = vunpack.c.l.b16 %v3402
  %v3712 = vunpack.c.h.b16 %v3402
  %v3713 = vunpack.c.l.b16 %v3403
  %v3714 = vunpack.c.h.b16 %v3403
  %v3715 = vunpack.c.l.b16 %v3404
  %v3716 = vunpack.c.h.b16 %v3404
  %v3717 = vunpack.c.l.b16 %v3405
  %v3718 = vunpack.c.h.b16 %v3405
  %v3719 = vunpack.c.l.b16 %v3406
  %v3720 = vunpack.c.h.b16 %v3406
  %v3721 = vunpack.c.l.b16 %v3407
  %v3722 = vunpack.c.h.b16 %v3407
  %v3723 = vunpack.c.l.b16 %v3408
  %v3724 = vunpack.c.h.b16 %v3408
  %v3725 = vunpack.c.l.b16 %v3409
  %v3726 = vunpack.c.h.b16 %v3409
  %v3727 = vunpack.c.l.b16 %v3410
  %v3728 = vunpack.c.h.b16 %v3410
  %v3729 = vunpack.c.l.b16 %v3411
  %v3730 = vunpack.c.h.b16 %v3411
  %v3731 = vunpack.c.l.b16 %v3412
  %v3732 = vunpack.c.h.b16 %v3412
  %v3733 = vunpack.c.l.b16 %v3413
  %v3734 = vunpack.c.h.b16 %v3413
  %v3735 = vunpack.c.l.b16 %v3414
  %v3736 = vunpack.c.h.b16 %v3414
  %v3737 = vunpack.c.l.b16 %v3415
  %v3738 = vunpack.c.h.b16 %v3415
  %v3739 = vunpack.c.l.b16 %v3416
  %v3740 = vunpack.c.h.b16 %v3416
  %v3741 = vunpack.c.l.b16 %v3417
  %v3742 = vunpack.c.h.b16 %v3417
  %v3743 = vunpack.c.l.b16 %v3418
  %v3744 = vunpack.c.h.b16 %v3418
  %v3745 = vunpack.c.l.b16 %v3419
  %v3746 = vunpack.c.h.b16 %v3419
  %v3747 = vunpack.c.l.b16 %v3420
  %v3748 = vunpack.c.h.b16 %v3420
  %v3749 = vunpack.c.l.b16 %v3421
  %v3750 = vunpack.c.h.b16 %v3421
  %v3751 = vunpack.c.l.b16 %v3422
  %v3752 = vunpack.c.h.b16 %v3422
  %v3753 = vunpack.c.l.b16 %v3423
  %v3754 = vunpack.c.h.b16 %v3423
  %v3755 = vunpack.c.l.b16 %v3424
  %v3756 = vunpack.c.h.b16 %v3424
  %v3757 = vunpack.c.l.b16 %v3425
  %v3758 = vunpack.c.h.b16 %v3425
  %v3759 = vunpack.c.l.b16 %v3426
  %v3760 = vunpack.c.h.b16 %v3426
  %v3761 = vunpack.c.l.b16 %v3427
  %v3762 = vunpack.c.h.b16 %v3427
  %v3763 = vunpack.c.l.b16 %v3428
  %v3764 = vunpack.c.h.b16 %v3428
  %v3765 = vunpack.c.l.b16 %v3429
  %v3766 = vunpack.c.h.b16 %v3429
  %v3767 = vunpack.c.l.b16 %v3430
  %v3768 = vunpack.c.h.b16 %v3430
  %v3769 = vunpack.c.l.b16 %v3431
  %v3770 = vunpack.c.h.b16 %v3431
  %v3771 = vunpack.c.l.b16 %v3432
  %v3772 = vunpack.c.h.b16 %v3432
  %v3773 = vunpack.c.l.b16 %v3433
  %v3774 = vunpack.c.h.b16 %v3433
  %v3775 = vunpack.c.l.b16 %v3434
  %v3776 = vunpack.c.h.b16 %v3434
  %v3777 = vunpack.c.l.b16 %v3435
  %v3778 = vunpack.c.h.b16 %v3435
  %v3779 = vunpack.c.l.b16 %v3436
  %v3780 = vunpack.c.h.b16 %v3436
  %v3781 = vunpack.c.l.b16 %v3437
  %v3782 = vunpack.c.h.b16 %v3437
  %v3783 = vunpack.c.l.b16 %v3438
  %v3784 = vunpack.c.h.b16 %v3438
  %v3785 = vunpack.c.l.b16 %v3439
  %v3786 = vunpack.c.h.b16 %v3439
  %v3787 = vunpack.c.l.b16 %v3440
  %v3788 = vunpack.c.h.b16 %v3440
  %v3789 = vunpack.c.l.b16 %v3441
  %v3790 = vunpack.c.h.b16 %v3441
  %v3791 = vunpack.c.l.b16 %v3442
  %v3792 = vunpack.c.h.b16 %v3442
  %v3793 = vunpack.c.l.b16 %v3443
  %v3794 = vunpack.c.h.b16 %v3443
  %v3795 = vunpack.c.l.b16 %v3444
  %v3796 = vunpack.c.h.b16 %v3444
  %v3797 = vunpack.c.l.b16 %v3445
  %v3798 = vunpack.c.h.b16 %v3445
  %v3799 = vunpack.c.l.b16 %v3446
  %v3800 = vunpack.c.h.b16 %v3446
  %v3801 = vunpack.c.l.b16 %v3447
  %v3802 = vunpack.c.h.b16 %v3447
  %v3803 = vunpack.c.l.b16 %v3448
  %v3804 = vunpack.c.h.b16 %v3448
  %v3805 = vunpack.c.l.b16 %v3449
  %v3806 = vunpack.c.h.b16 %v3449
  %v3807 = vunpack.c.l.b16 %v3450
  %v3808 = vunpack.c.h.b16 %v3450
  %v3809 = vunpack.c.l.b16 %v3451
  %v3810 = vunpack.c.h.b16 %v3451
  %v3811 = vunpack.c.l.b16 %v3452
  %v3812 = vunpack.c.h.b16 %v3452
  %v3813 = vunpack.c.l.b16 %v3453
  %v3814 = vunpack.c.h.b16 %v3453
  %v3815 = vunpack.c.l.b16 %v3454
  %v3816 = vunpack.c.h.b16 %v3454
  %v3817 = vunpack.c.l.b16 %v3455
  %v3818 = vunpack.c.h.b16 %v3455
  %v3819 = vunpack.c.l.b16 %v3456
  %v3820 = vunpack.c.h.b16 %v3456
  %v3821 = vunpack.c.l.b16 %v3457
  %v3822 = vunpack.c.h.b16 %v3457
  %v3823 = vunpack.c.l.b16 %v3458
  %v3824 = vunpack.c.h.b16 %v3458
  %v3825 = vunpack.c.l.b16 %v3459
  %v3826 = vunpack.c.h.b16 %v3459
  %v3827 = vunpack.c.l.b16 %v3460
  %v3828 = vunpack.c.h.b16 %v3460
  %v3829 = vunpack.c.l.b16 %v3461
  %v3830 = vunpack.c.h.b16 %v3461
  %v3831 = vunpack.c.l.b16 %v3462
  %v3832 = vunpack.c.h.b16 %v3462
  %v3833 = vunpack.c.l.b16 %v3463
  %v3834 = vunpack.c.h.b16 %v3463
  %v3835 = vunpack.c.l.b16 %v3464
  %v3836 = vunpack.c.h.b16 %v3464
  %v3837 = vunpack.c.l.b16 %v3465
  %v3838 = vunpack.c.h.b16 %v3465
  %v3839 = vunpack.c.l.b16 %v3466
  %v3840 = vunpack.c.h.b16 %v3466
  %v3841 = vunpack.c.l.b16 %v3467
  %v3842 = vunpack.c.h.b16 %v3467
  %v3843 = vunpack.c.l.b16 %v3468
  %v3844 = vunpack.c.h.b16 %v3468
  %v3845 = vunpack.c.l.b16 %v3469
  %v3846 = vunpack.c.h.b16 %v3469
  %v3847 = vunpack.c.l.b16 %v3470
  %v3848 = vunpack.c.h.b16 %v3470
  %v3849 = vunpack.c.l.b16 %v3471
  %v3850 = vunpack.c.h.b16 %v3471
  %v3851 = vunpack.c.l.b16 %v3472
  %v3852 = vunpack.c.h.b16 %v3472
  %v3853 = vunpack.c.l.b16 %v3473
  %v3854 = vunpack.c.h.b16 %v3473
  %v3855 = vunpack.c.l.b16 %v3474
  %v3856 = vunpack.c.h.b16 %v3474
  %v3857 = vunpack.c.l.b16 %v3475
  %v3858 = vunpack.c.h.b16 %v3475
  %v3859 = vunpack.c.l.b16 %v3476
  %v3860 = vunpack.c.h.b16 %v3476
  %v3861 = vpack.c.b16 %v3607, %v3605
  %v3862 = vpack.c.b16 %v3608, %v3606
  %v3863 = vpack.c.b16 %v3611, %v3609
  %v3864 = vpack.c.b16 %v3612, %v3610
  %v3865 = vpack.c.b16 %v3615, %v3613
  %v3866 = vpack.c.b16 %v3616, %v3614
  %v3867 = vpack.c.b16 %v3619, %v3617
  %v3868 = vpack.c.b16 %v3620, %v3618
  %v3869 = vpack.c.b16 %v3623, %v3621
  %v3870 = vpack.c.b16 %v3624, %v3622
  %v3871 = vpack.c.b16 %v3627, %v3625
  %v3872 = vpack.c.b16 %v3628, %v3626
  %v3873 = vpack.c.b16 %v3631, %v3629
  %v3874 = vpack.c.b16 %v3632, %v3630
  %v3875 = vpack.c.b16 %v3635, %v3633
  %v3876 = vpack.c.b16 %v3636, %v3634
  %v3877 = vpack.c.b16 %v3639, %v3637
  %v3878 = vpack.c.b16 %v3640, %v3638
  %v3879 = vpack.c.b16 %v3643, %v3641
  %v3880 = vpack.c.b16 %v3644, %v3642
  %v3881 = vpack.c.b16 %v3647, %v3645
  %v3882 = vpack.c.b16 %v3648, %v3646
  %v3883 = vpack.c.b16 %v3651, %v3649
  %v3884 = vpack.c.b16 %v3652, %v3650
  %v3885 = vpack.c.b16 %v3655, %v3653
  %v3886 = vpack.c.b16 %v3656, %v3654
  %v3887 = vpack.c.b16 %v3659, %v3657
  %v3888 = vpack.c.b16 %v3660, %v3658
  %v3889 = vpack.c.b16 %v3663, %v3661
  %v3890 = vpack.c.b16 %v3664, %v3662
  %v3891 = vpack.c.b16 %v3667, %v3665
  %v3892 = vpack.c.b16 %v3668, %v3666
  %v3893 = vpack.c.b16 %v3671, %v3669
  %v3894 = vpack.c.b16 %v3672, %v3670
  %v3895 = vpack.c.b16 %v3675, %v3673
  %v3896 = vpack.c.b16 %v3676, %v3674
  %v3897 = vpack.c.b16 %v3679, %v3677
  %v3898 = vpack.c.b16 %v3680, %v3678
  %v3899 = vpack.c.b16 %v3683, %v3681
  %v3900 = vpack.c.b16 %v3684, %v3682
  %v3901 = vpack.c.b16 %v3687, %v3685
  %v3902 = vpack.c.b16 %v3688, %v3686
  %v3903 = vpack.c.b16 %v3691, %v3689
  %v3904 = vpack.c.b16 %v3692, %v3690
  %v3905 = vpack.c.b16 %v3695, %v3693
  %v3906 = vpack.c.b16 %v3696, %v3694
  %v3907 = vpack.c.b16 %v3699, %v3697
  %v3908 = vpack.c.b16 %v3700, %v3698
  %v3909 = vpack.c.b16 %v3703, %v3701
  %v3910 = vpack.c.b16 %v3704, %v3702
  %v3911 = vpack.c.b16 %v3707, %v3705
  %v3912 = vpack.c.b16 %v3708, %v3706
  %v3913 = vpack.c.b16 %v3711, %v3709
  %v3914 = vpack.c.b16 %v3712, %v3710
  %v3915 = vpack.c.b16 %v3715, %v3713
  %v3916 = vpack.c.b16 %v3716, %v3714
  %v3917 = vpack.c.b16 %v3719, %v3717
  %v3918 = vpack.c.b16 %v3720, %v3718
  %v3919 = vpack.c.b16 %v3723, %v3721
  %v3920 = vpack.c.b16 %v3724, %v3722
  %v3921 = vpack.c.b16 %v3727, %v3725
  %v3922 = vpack.c.b16 %v3728, %v3726
  %v3923 = vpack.c.b16 %v3731, %v3729
  %v3924 = vpack.c.b16 %v3732, %v3730
  %v3925 = vpack.c.b16 %v3735, %v3733
  %v3926 = vpack.c.b16 %v3736, %v3734
  %v3927 = vpack.c.b16 %v3739, %v3737
  %v3928 = vpack.c.b16 %v3740, %v3738
  %v3929 = vpack.c.b16 %v3743, %v3741
  %v3930 = vpack.c.b16 %v3744, %v3742
  %v3931 = vpack.c.b16 %v3747, %v3745
  %v3932 = vpack.c.b16 %v3748, %v3746
  %v3933 = vpack.c.b16 %v3751, %v3749
  %v3934 = vpack.c.b16 %v3752, %v3750
  %v3935 = vpack.c.b16 %v3755, %v3753
  %v3936 = vpack.c.b16 %v3756, %v3754
  %v3937 = vpack.c.b16 %v3759, %v3757
  %v3938 = vpack.c.b16 %v3760, %v3758
  %v3939 = vpack.c.b16 %v3763, %v3761
  %v3940 = vpack.c.b16 %v3764, %v3762
  %v3941 = vpack.c.b16 %v3767, %v3765
  %v3942 = vpack.c.b16 %v3768, %v3766
  %v3943 = vpack.c.b16 %v3771, %v3769
  %v3944 = vpack.c.b16 %v3772, %v3770
  %v3945 = vpack.c.b16 %v3775, %v3773
  %v3946 = vpack.c.b16 %v3776, %v3774
  %v3947 = vpack.c.b16 %v3779, %v3777
  %v3948 = vpack.c.b16 %v3780, %v3778
  %v3949 = vpack.c.b16 %v3783, %v3781
  %v3950 = vpack.c.b16 %v3784, %v3782
  %v3951 = vpack.c.b16 %v3787, %v3785
  %v3952 = vpack.c.b16 %v3788, %v3786
  %v3953 = vpack.c.b16 %v3791, %v3789
  %v3954 = vpack.c.b16 %v3792, %v3790
  %v3955 = vpack.c.b16 %v3795, %v3793
  %v3956 = vpack.c.b16 %v3796, %v3794
  %v3957 = vpack.c.b16 %v3799, %v3797
  %v3958 = vpack.c.b16 %v3800, %v3798
  %v3959 = vpack.c.b16 %v3803, %v3801
  %v3960 = vpack.c.b16 %v3804, %v3802
  %v3961 = vpack.c.b16 %v3807, %v3805
  %v3962 = vpack.c.b16 %v3808, %v3806
  %v3963 = vpack.c.b16 %v3811, %v3809
  %v3964 = vpack.c.b16 %v3812, %v3810
  %v3965 = vpack.c.b16 %v3815, %v3813
  %v3966 = vpack.c.b16 %v3816, %v3814
  %v3967 = vpack.c.b16 %v3819, %v3817
  %v3968 = vpack.c.b16 %v3820, %v3818
  %v3969 = vpack.c.b16 %v3823, %v3821
  %v3970 = vpack.c.b16 %v3824, %v3822
  %v3971 = vpack.c.b16 %v3827, %v3825
  %v3972 = vpack.c.b16 %v3828, %v3826
  %v3973 = vpack.c.b16 %v3831, %v3829
  %v3974 = vpack.c.b16 %v3832, %v3830
  %v3975 = vpack.c.b16 %v3835, %v3833
  %v3976 = vpack.c.b16 %v3836, %v3834
  %v3977 = vpack.c.b16 %v3839, %v3837
  %v3978 = vpack.c.b16 %v3840, %v3838
  %v3979 = vpack.c.b16 %v3843, %v3841
  %v3980 = vpack.c.b16 %v3844, %v3842
  %v3981 = vpack.c.b16 %v3847, %v3845
  %v3982 = vpack.c.b16 %v3848, %v3846
  %v3983 = vpack.c.b16 %v3851, %v3849
  %v3984 = vpack.c.b16 %v3852, %v3850
  %v3985 = vpack.c.b16 %v3855, %v3853
  %v3986 = vpack.c.b16 %v3856, %v3854
  %v3987 = vpack.c.b16 %v3859, %v3857
  %v3988 = vpack.c.b16 %v3860, %v3858
  %4117 = vmatpush.bf16.msra.mxu0 %v3875
  %4118 = vmatpush.bf16.msra.mxu0 %v3873
  %4119 = vmatpush.bf16.msra.mxu0 %v3871
  %4120 = vmatpush.bf16.msra.mxu0 %v3869
  %4121 = vmatpush.bf16.msra.mxu0 %v3867
  %4122 = vmatpush.bf16.msra.mxu0 %v3865
  %4123 = vmatpush.bf16.msra.mxu0 %v3863
  %4124 = vmatpush.bf16.msra.mxu0 %v3861
  %4125 = vmatmul.bf16.gmra.mxu0 %v3285
  %v4126 = vpop.f32.mrf.mxu0
  %v4127 = vadd.f32 0.0, %v4126
  %v4128 = vpop.f32.mrf.mxu0
  %v4129 = vadd.f32 0.0, %v4128
  %4130 = vmatmul.bf16.gmra.mxu0 %v3293
  %v4131 = vpop.f32.mrf.mxu0
  %v4132 = vadd.f32 0.0, %v4131
  %v4133 = vpop.f32.mrf.mxu0
  %v4134 = vadd.f32 0.0, %v4133
  %4135 = vmatmul.bf16.gmra.mxu0 %v3301
  %v4136 = vpop.f32.mrf.mxu0
  %v4137 = vadd.f32 0.0, %v4136
  %v4138 = vpop.f32.mrf.mxu0
  %v4139 = vadd.f32 0.0, %v4138
  %4140 = vmatmul.bf16.gmra.mxu0 %v3309
  %v4141 = vpop.f32.mrf.mxu0
  %v4142 = vadd.f32 0.0, %v4141
  %v4143 = vpop.f32.mrf.mxu0
  %v4144 = vadd.f32 0.0, %v4143
  %4145 = vmatmul.bf16.gmra.mxu0 %v3317
  %v4146 = vpop.f32.mrf.mxu0
  %v4147 = vadd.f32 0.0, %v4146
  %v4148 = vpop.f32.mrf.mxu0
  %v4149 = vadd.f32 0.0, %v4148
  %4150 = vmatmul.bf16.gmra.mxu0 %v3325
  %v4151 = vpop.f32.mrf.mxu0
  %v4152 = vadd.f32 0.0, %v4151
  %v4153 = vpop.f32.mrf.mxu0
  %v4154 = vadd.f32 0.0, %v4153
  %4155 = vmatmul.bf16.gmra.mxu0 %v3333
  %v4156 = vpop.f32.mrf.mxu0
  %v4157 = vadd.f32 0.0, %v4156
  %v4158 = vpop.f32.mrf.mxu0
  %v4159 = vadd.f32 0.0, %v4158
  %4160 = vmatmul.bf16.gmra.mxu0 %v3341
  %v4161 = vpop.f32.mrf.mxu0
  %v4162 = vadd.f32 0.0, %v4161
  %v4163 = vpop.f32.mrf.mxu0
  %v4164 = vadd.f32 0.0, %v4163
  %4165 = vdwg.mxu0
  %4166 = vmatpush.bf16.msra.mxu0 %v3891
  %4167 = vmatpush.bf16.msra.mxu0 %v3889
  %4168 = vmatpush.bf16.msra.mxu0 %v3887
  %4169 = vmatpush.bf16.msra.mxu0 %v3885
  %4170 = vmatpush.bf16.msra.mxu0 %v3883
  %4171 = vmatpush.bf16.msra.mxu0 %v3881
  %4172 = vmatpush.bf16.msra.mxu0 %v3879
  %4173 = vmatpush.bf16.msra.mxu0 %v3877
  %4174 = vmatmul.bf16.gmra.mxu0 %v3286
  %v4175 = vpop.f32.mrf.mxu0
  %v4176 = vadd.f32 %v4127, %v4175
  %v4177 = vpop.f32.mrf.mxu0
  %v4178 = vadd.f32 %v4129, %v4177
  %4179 = vmatmul.bf16.gmra.mxu0 %v3294
  %v4180 = vpop.f32.mrf.mxu0
  %v4181 = vadd.f32 %v4132, %v4180
  %v4182 = vpop.f32.mrf.mxu0
  %v4183 = vadd.f32 %v4134, %v4182
  %4184 = vmatmul.bf16.gmra.mxu0 %v3302
  %v4185 = vpop.f32.mrf.mxu0
  %v4186 = vadd.f32 %v4137, %v4185
  %v4187 = vpop.f32.mrf.mxu0
  %v4188 = vadd.f32 %v4139, %v4187
  %4189 = vmatmul.bf16.gmra.mxu0 %v3310
  %v4190 = vpop.f32.mrf.mxu0
  %v4191 = vadd.f32 %v4142, %v4190
  %v4192 = vpop.f32.mrf.mxu0
  %v4193 = vadd.f32 %v4144, %v4192
  %4194 = vmatmul.bf16.gmra.mxu0 %v3318
  %v4195 = vpop.f32.mrf.mxu0
  %v4196 = vadd.f32 %v4147, %v4195
  %v4197 = vpop.f32.mrf.mxu0
  %v4198 = vadd.f32 %v4149, %v4197
  %4199 = vmatmul.bf16.gmra.mxu0 %v3326
  %v4200 = vpop.f32.mrf.mxu0
  %v4201 = vadd.f32 %v4152, %v4200
  %v4202 = vpop.f32.mrf.mxu0
  %v4203 = vadd.f32 %v4154, %v4202
  %4204 = vmatmul.bf16.gmra.mxu0 %v3334
  %v4205 = vpop.f32.mrf.mxu0
  %v4206 = vadd.f32 %v4157, %v4205
  %v4207 = vpop.f32.mrf.mxu0
  %v4208 = vadd.f32 %v4159, %v4207
  %4209 = vmatmul.bf16.gmra.mxu0 %v3342
  %v4210 = vpop.f32.mrf.mxu0
  %v4211 = vadd.f32 %v4162, %v4210
  %v4212 = vpop.f32.mrf.mxu0
  %v4213 = vadd.f32 %v4164, %v4212
  %4214 = vdwg.mxu0
  %4215 = vmatpush.bf16.msra.mxu0 %v3907
  %4216 = vmatpush.bf16.msra.mxu0 %v3905
  %4217 = vmatpush.bf16.msra.mxu0 %v3903
  %4218 = vmatpush.bf16.msra.mxu0 %v3901
  %4219 = vmatpush.bf16.msra.mxu0 %v3899
  %4220 = vmatpush.bf16.msra.mxu0 %v3897
  %4221 = vmatpush.bf16.msra.mxu0 %v3895
  %4222 = vmatpush.bf16.msra.mxu0 %v3893
  %4223 = vmatmul.bf16.gmra.mxu0 %v3287
  %v4224 = vpop.f32.mrf.mxu0
  %v4225 = vadd.f32 %v4176, %v4224
  %v4226 = vpop.f32.mrf.mxu0
  %v4227 = vadd.f32 %v4178, %v4226
  %4228 = vmatmul.bf16.gmra.mxu0 %v3295
  %v4229 = vpop.f32.mrf.mxu0
  %v4230 = vadd.f32 %v4181, %v4229
  %v4231 = vpop.f32.mrf.mxu0
  %v4232 = vadd.f32 %v4183, %v4231
  %4233 = vmatmul.bf16.gmra.mxu0 %v3303
  %v4234 = vpop.f32.mrf.mxu0
  %v4235 = vadd.f32 %v4186, %v4234
  %v4236 = vpop.f32.mrf.mxu0
  %v4237 = vadd.f32 %v4188, %v4236
  %4238 = vmatmul.bf16.gmra.mxu0 %v3311
  %v4239 = vpop.f32.mrf.mxu0
  %v4240 = vadd.f32 %v4191, %v4239
  %v4241 = vpop.f32.mrf.mxu0
  %v4242 = vadd.f32 %v4193, %v4241
  %4243 = vmatmul.bf16.gmra.mxu0 %v3319
  %v4244 = vpop.f32.mrf.mxu0
  %v4245 = vadd.f32 %v4196, %v4244
  %v4246 = vpop.f32.mrf.mxu0
  %v4247 = vadd.f32 %v4198, %v4246
  %4248 = vmatmul.bf16.gmra.mxu0 %v3327
  %v4249 = vpop.f32.mrf.mxu0
  %v4250 = vadd.f32 %v4201, %v4249
  %v4251 = vpop.f32.mrf.mxu0
  %v4252 = vadd.f32 %v4203, %v4251
  %4253 = vmatmul.bf16.gmra.mxu0 %v3335
  %v4254 = vpop.f32.mrf.mxu0
  %v4255 = vadd.f32 %v4206, %v4254
  %v4256 = vpop.f32.mrf.mxu0
  %v4257 = vadd.f32 %v4208, %v4256
  %4258 = vmatmul.bf16.gmra.mxu0 %v3343
  %v4259 = vpop.f32.mrf.mxu0
  %v4260 = vadd.f32 %v4211, %v4259
  %v4261 = vpop.f32.mrf.mxu0
  %v4262 = vadd.f32 %v4213, %v4261
  %4263 = vdwg.mxu0
  %4264 = vmatpush.bf16.msra.mxu0 %v3923
  %4265 = vmatpush.bf16.msra.mxu0 %v3921
  %4266 = vmatpush.bf16.msra.mxu0 %v3919
  %4267 = vmatpush.bf16.msra.mxu0 %v3917
  %4268 = vmatpush.bf16.msra.mxu0 %v3915
  %4269 = vmatpush.bf16.msra.mxu0 %v3913
  %4270 = vmatpush.bf16.msra.mxu0 %v3911
  %4271 = vmatpush.bf16.msra.mxu0 %v3909
  %4272 = vmatmul.bf16.gmra.mxu0 %v3288
  %v4273 = vpop.f32.mrf.mxu0
  %v4274 = vadd.f32 %v4225, %v4273
  %v4275 = vpop.f32.mrf.mxu0
  %v4276 = vadd.f32 %v4227, %v4275
  %4277 = vmatmul.bf16.gmra.mxu0 %v3296
  %v4278 = vpop.f32.mrf.mxu0
  %v4279 = vadd.f32 %v4230, %v4278
  %v4280 = vpop.f32.mrf.mxu0
  %v4281 = vadd.f32 %v4232, %v4280
  %4282 = vmatmul.bf16.gmra.mxu0 %v3304
  %v4283 = vpop.f32.mrf.mxu0
  %v4284 = vadd.f32 %v4235, %v4283
  %v4285 = vpop.f32.mrf.mxu0
  %v4286 = vadd.f32 %v4237, %v4285
  %4287 = vmatmul.bf16.gmra.mxu0 %v3312
  %v4288 = vpop.f32.mrf.mxu0
  %v4289 = vadd.f32 %v4240, %v4288
  %v4290 = vpop.f32.mrf.mxu0
  %v4291 = vadd.f32 %v4242, %v4290
  %4292 = vmatmul.bf16.gmra.mxu0 %v3320
  %v4293 = vpop.f32.mrf.mxu0
  %v4294 = vadd.f32 %v4245, %v4293
  %v4295 = vpop.f32.mrf.mxu0
  %v4296 = vadd.f32 %v4247, %v4295
  %4297 = vmatmul.bf16.gmra.mxu0 %v3328
  %v4298 = vpop.f32.mrf.mxu0
  %v4299 = vadd.f32 %v4250, %v4298
  %v4300 = vpop.f32.mrf.mxu0
  %v4301 = vadd.f32 %v4252, %v4300
  %4302 = vmatmul.bf16.gmra.mxu0 %v3336
  %v4303 = vpop.f32.mrf.mxu0
  %v4304 = vadd.f32 %v4255, %v4303
  %v4305 = vpop.f32.mrf.mxu0
  %v4306 = vadd.f32 %v4257, %v4305
  %4307 = vmatmul.bf16.gmra.mxu0 %v3344
  %v4308 = vpop.f32.mrf.mxu0
  %v4309 = vadd.f32 %v4260, %v4308
  %v4310 = vpop.f32.mrf.mxu0
  %v4311 = vadd.f32 %v4262, %v4310
  %4312 = vdwg.mxu0
  %4313 = vmatpush.bf16.msra.mxu0 %v3939
  %4314 = vmatpush.bf16.msra.mxu0 %v3937
  %4315 = vmatpush.bf16.msra.mxu0 %v3935
  %4316 = vmatpush.bf16.msra.mxu0 %v3933
  %4317 = vmatpush.bf16.msra.mxu0 %v3931
  %4318 = vmatpush.bf16.msra.mxu0 %v3929
  %4319 = vmatpush.bf16.msra.mxu0 %v3927
  %4320 = vmatpush.bf16.msra.mxu0 %v3925
  %4321 = vmatmul.bf16.gmra.mxu0 %v3289
  %v4322 = vpop.f32.mrf.mxu0
  %v4323 = vadd.f32 %v4274, %v4322
  %v4324 = vpop.f32.mrf.mxu0
  %v4325 = vadd.f32 %v4276, %v4324
  %4326 = vmatmul.bf16.gmra.mxu0 %v3297
  %v4327 = vpop.f32.mrf.mxu0
  %v4328 = vadd.f32 %v4279, %v4327
  %v4329 = vpop.f32.mrf.mxu0
  %v4330 = vadd.f32 %v4281, %v4329
  %4331 = vmatmul.bf16.gmra.mxu0 %v3305
  %v4332 = vpop.f32.mrf.mxu0
  %v4333 = vadd.f32 %v4284, %v4332
  %v4334 = vpop.f32.mrf.mxu0
  %v4335 = vadd.f32 %v4286, %v4334
  %4336 = vmatmul.bf16.gmra.mxu0 %v3313
  %v4337 = vpop.f32.mrf.mxu0
  %v4338 = vadd.f32 %v4289, %v4337
  %v4339 = vpop.f32.mrf.mxu0
  %v4340 = vadd.f32 %v4291, %v4339
  %4341 = vmatmul.bf16.gmra.mxu0 %v3321
  %v4342 = vpop.f32.mrf.mxu0
  %v4343 = vadd.f32 %v4294, %v4342
  %v4344 = vpop.f32.mrf.mxu0
  %v4345 = vadd.f32 %v4296, %v4344
  %4346 = vmatmul.bf16.gmra.mxu0 %v3329
  %v4347 = vpop.f32.mrf.mxu0
  %v4348 = vadd.f32 %v4299, %v4347
  %v4349 = vpop.f32.mrf.mxu0
  %v4350 = vadd.f32 %v4301, %v4349
  %4351 = vmatmul.bf16.gmra.mxu0 %v3337
  %v4352 = vpop.f32.mrf.mxu0
  %v4353 = vadd.f32 %v4304, %v4352
  %v4354 = vpop.f32.mrf.mxu0
  %v4355 = vadd.f32 %v4306, %v4354
  %4356 = vmatmul.bf16.gmra.mxu0 %v3345
  %v4357 = vpop.f32.mrf.mxu0
  %v4358 = vadd.f32 %v4309, %v4357
  %v4359 = vpop.f32.mrf.mxu0
  %v4360 = vadd.f32 %v4311, %v4359
  %4361 = vdwg.mxu0
  %4362 = vmatpush.bf16.msra.mxu0 %v3955
  %4363 = vmatpush.bf16.msra.mxu0 %v3953
  %4364 = vmatpush.bf16.msra.mxu0 %v3951
  %4365 = vmatpush.bf16.msra.mxu0 %v3949
  %4366 = vmatpush.bf16.msra.mxu0 %v3947
  %4367 = vmatpush.bf16.msra.mxu0 %v3945
  %4368 = vmatpush.bf16.msra.mxu0 %v3943
  %4369 = vmatpush.bf16.msra.mxu0 %v3941
  %4370 = vmatmul.bf16.gmra.mxu0 %v3290
  %v4371 = vpop.f32.mrf.mxu0
  %v4372 = vadd.f32 %v4323, %v4371
  %v4373 = vpop.f32.mrf.mxu0
  %v4374 = vadd.f32 %v4325, %v4373
  %4375 = vmatmul.bf16.gmra.mxu0 %v3298
  %v4376 = vpop.f32.mrf.mxu0
  %v4377 = vadd.f32 %v4328, %v4376
  %v4378 = vpop.f32.mrf.mxu0
  %v4379 = vadd.f32 %v4330, %v4378
  %4380 = vmatmul.bf16.gmra.mxu0 %v3306
  %v4381 = vpop.f32.mrf.mxu0
  %v4382 = vadd.f32 %v4333, %v4381
  %v4383 = vpop.f32.mrf.mxu0
  %v4384 = vadd.f32 %v4335, %v4383
  %4385 = vmatmul.bf16.gmra.mxu0 %v3314
  %v4386 = vpop.f32.mrf.mxu0
  %v4387 = vadd.f32 %v4338, %v4386
  %v4388 = vpop.f32.mrf.mxu0
  %v4389 = vadd.f32 %v4340, %v4388
  %4390 = vmatmul.bf16.gmra.mxu0 %v3322
  %v4391 = vpop.f32.mrf.mxu0
  %v4392 = vadd.f32 %v4343, %v4391
  %v4393 = vpop.f32.mrf.mxu0
  %v4394 = vadd.f32 %v4345, %v4393
  %4395 = vmatmul.bf16.gmra.mxu0 %v3330
  %v4396 = vpop.f32.mrf.mxu0
  %v4397 = vadd.f32 %v4348, %v4396
  %v4398 = vpop.f32.mrf.mxu0
  %v4399 = vadd.f32 %v4350, %v4398
  %4400 = vmatmul.bf16.gmra.mxu0 %v3338
  %v4401 = vpop.f32.mrf.mxu0
  %v4402 = vadd.f32 %v4353, %v4401
  %v4403 = vpop.f32.mrf.mxu0
  %v4404 = vadd.f32 %v4355, %v4403
  %4405 = vmatmul.bf16.gmra.mxu0 %v3346
  %v4406 = vpop.f32.mrf.mxu0
  %v4407 = vadd.f32 %v4358, %v4406
  %v4408 = vpop.f32.mrf.mxu0
  %v4409 = vadd.f32 %v4360, %v4408
  %4410 = vdwg.mxu0
  %4411 = vmatpush.bf16.msra.mxu0 %v3971
  %4412 = vmatpush.bf16.msra.mxu0 %v3969
  %4413 = vmatpush.bf16.msra.mxu0 %v3967
  %4414 = vmatpush.bf16.msra.mxu0 %v3965
  %4415 = vmatpush.bf16.msra.mxu0 %v3963
  %4416 = vmatpush.bf16.msra.mxu0 %v3961
  %4417 = vmatpush.bf16.msra.mxu0 %v3959
  %4418 = vmatpush.bf16.msra.mxu0 %v3957
  %4419 = vmatmul.bf16.gmra.mxu0 %v3291
  %v4420 = vpop.f32.mrf.mxu0
  %v4421 = vadd.f32 %v4372, %v4420
  %v4422 = vpop.f32.mrf.mxu0
  %v4423 = vadd.f32 %v4374, %v4422
  %4424 = vmatmul.bf16.gmra.mxu0 %v3299
  %v4425 = vpop.f32.mrf.mxu0
  %v4426 = vadd.f32 %v4377, %v4425
  %v4427 = vpop.f32.mrf.mxu0
  %v4428 = vadd.f32 %v4379, %v4427
  %4429 = vmatmul.bf16.gmra.mxu0 %v3307
  %v4430 = vpop.f32.mrf.mxu0
  %v4431 = vadd.f32 %v4382, %v4430
  %v4432 = vpop.f32.mrf.mxu0
  %v4433 = vadd.f32 %v4384, %v4432
  %4434 = vmatmul.bf16.gmra.mxu0 %v3315
  %v4435 = vpop.f32.mrf.mxu0
  %v4436 = vadd.f32 %v4387, %v4435
  %v4437 = vpop.f32.mrf.mxu0
  %v4438 = vadd.f32 %v4389, %v4437
  %4439 = vmatmul.bf16.gmra.mxu0 %v3323
  %v4440 = vpop.f32.mrf.mxu0
  %v4441 = vadd.f32 %v4392, %v4440
  %v4442 = vpop.f32.mrf.mxu0
  %v4443 = vadd.f32 %v4394, %v4442
  %4444 = vmatmul.bf16.gmra.mxu0 %v3331
  %v4445 = vpop.f32.mrf.mxu0
  %v4446 = vadd.f32 %v4397, %v4445
  %v4447 = vpop.f32.mrf.mxu0
  %v4448 = vadd.f32 %v4399, %v4447
  %4449 = vmatmul.bf16.gmra.mxu0 %v3339
  %v4450 = vpop.f32.mrf.mxu0
  %v4451 = vadd.f32 %v4402, %v4450
  %v4452 = vpop.f32.mrf.mxu0
  %v4453 = vadd.f32 %v4404, %v4452
  %4454 = vmatmul.bf16.gmra.mxu0 %v3347
  %v4455 = vpop.f32.mrf.mxu0
  %v4456 = vadd.f32 %v4407, %v4455
  %v4457 = vpop.f32.mrf.mxu0
  %v4458 = vadd.f32 %v4409, %v4457
  %4459 = vdwg.mxu0
  %4460 = vmatpush.bf16.msra.mxu0 %v3987
  %4461 = vmatpush.bf16.msra.mxu0 %v3985
  %4462 = vmatpush.bf16.msra.mxu0 %v3983
  %4463 = vmatpush.bf16.msra.mxu0 %v3981
  %4464 = vmatpush.bf16.msra.mxu0 %v3979
  %4465 = vmatpush.bf16.msra.mxu0 %v3977
  %4466 = vmatpush.bf16.msra.mxu0 %v3975
  %4467 = vmatpush.bf16.msra.mxu0 %v3973
  %4468 = vmatmul.bf16.gmra.mxu0 %v3292
  %v4469 = vpop.f32.mrf.mxu0
  %v4470 = vadd.f32 %v4421, %v4469
  %v4471 = vpop.f32.mrf.mxu0
  %v4472 = vadd.f32 %v4423, %v4471
  %4473 = vmatmul.bf16.gmra.mxu0 %v3300
  %v4474 = vpop.f32.mrf.mxu0
  %v4475 = vadd.f32 %v4426, %v4474
  %v4476 = vpop.f32.mrf.mxu0
  %v4477 = vadd.f32 %v4428, %v4476
  %4478 = vmatmul.bf16.gmra.mxu0 %v3308
  %v4479 = vpop.f32.mrf.mxu0
  %v4480 = vadd.f32 %v4431, %v4479
  %v4481 = vpop.f32.mrf.mxu0
  %v4482 = vadd.f32 %v4433, %v4481
  %4483 = vmatmul.bf16.gmra.mxu0 %v3316
  %v4484 = vpop.f32.mrf.mxu0
  %v4485 = vadd.f32 %v4436, %v4484
  %v4486 = vpop.f32.mrf.mxu0
  %v4487 = vadd.f32 %v4438, %v4486
  %4488 = vmatmul.bf16.gmra.mxu0 %v3324
  %v4489 = vpop.f32.mrf.mxu0
  %v4490 = vadd.f32 %v4441, %v4489
  %v4491 = vpop.f32.mrf.mxu0
  %v4492 = vadd.f32 %v4443, %v4491
  %4493 = vmatmul.bf16.gmra.mxu0 %v3332
  %v4494 = vpop.f32.mrf.mxu0
  %v4495 = vadd.f32 %v4446, %v4494
  %v4496 = vpop.f32.mrf.mxu0
  %v4497 = vadd.f32 %v4448, %v4496
  %4498 = vmatmul.bf16.gmra.mxu0 %v3340
  %v4499 = vpop.f32.mrf.mxu0
  %v4500 = vadd.f32 %v4451, %v4499
  %v4501 = vpop.f32.mrf.mxu0
  %v4502 = vadd.f32 %v4453, %v4501
  %4503 = vmatmul.bf16.gmra.mxu0 %v3348
  %v4504 = vpop.f32.mrf.mxu0
  %v4505 = vadd.f32 %v4456, %v4504
  %v4506 = vpop.f32.mrf.mxu0
  %v4507 = vadd.f32 %v4458, %v4506
  %4508 = vdwg.mxu0
  %4509 = vmatpush.bf16.msra.mxu0 %v3876
  %4510 = vmatpush.bf16.msra.mxu0 %v3874
  %4511 = vmatpush.bf16.msra.mxu0 %v3872
  %4512 = vmatpush.bf16.msra.mxu0 %v3870
  %4513 = vmatpush.bf16.msra.mxu0 %v3868
  %4514 = vmatpush.bf16.msra.mxu0 %v3866
  %4515 = vmatpush.bf16.msra.mxu0 %v3864
  %4516 = vmatpush.bf16.msra.mxu0 %v3862
  %4517 = vmatmul.bf16.gmra.mxu0 %v3285
  %v4518 = vpop.f32.mrf.mxu0
  %v4519 = vadd.f32 0.0, %v4518
  %v4520 = vpop.f32.mrf.mxu0
  %v4521 = vadd.f32 0.0, %v4520
  %4522 = vmatmul.bf16.gmra.mxu0 %v3293
  %v4523 = vpop.f32.mrf.mxu0
  %v4524 = vadd.f32 0.0, %v4523
  %v4525 = vpop.f32.mrf.mxu0
  %v4526 = vadd.f32 0.0, %v4525
  %4527 = vmatmul.bf16.gmra.mxu0 %v3301
  %v4528 = vpop.f32.mrf.mxu0
  %v4529 = vadd.f32 0.0, %v4528
  %v4530 = vpop.f32.mrf.mxu0
  %v4531 = vadd.f32 0.0, %v4530
  %4532 = vmatmul.bf16.gmra.mxu0 %v3309
  %v4533 = vpop.f32.mrf.mxu0
  %v4534 = vadd.f32 0.0, %v4533
  %v4535 = vpop.f32.mrf.mxu0
  %v4536 = vadd.f32 0.0, %v4535
  %4537 = vmatmul.bf16.gmra.mxu0 %v3317
  %v4538 = vpop.f32.mrf.mxu0
  %v4539 = vadd.f32 0.0, %v4538
  %v4540 = vpop.f32.mrf.mxu0
  %v4541 = vadd.f32 0.0, %v4540
  %4542 = vmatmul.bf16.gmra.mxu0 %v3325
  %v4543 = vpop.f32.mrf.mxu0
  %v4544 = vadd.f32 0.0, %v4543
  %v4545 = vpop.f32.mrf.mxu0
  %v4546 = vadd.f32 0.0, %v4545
  %4547 = vmatmul.bf16.gmra.mxu0 %v3333
  %v4548 = vpop.f32.mrf.mxu0
  %v4549 = vadd.f32 0.0, %v4548
  %v4550 = vpop.f32.mrf.mxu0
  %v4551 = vadd.f32 0.0, %v4550
  %4552 = vmatmul.bf16.gmra.mxu0 %v3341
  %v4553 = vpop.f32.mrf.mxu0
  %v4554 = vadd.f32 0.0, %v4553
  %v4555 = vpop.f32.mrf.mxu0
  %v4556 = vadd.f32 0.0, %v4555
  %4557 = vdwg.mxu0
  %4558 = vmatpush.bf16.msra.mxu0 %v3892
  %4559 = vmatpush.bf16.msra.mxu0 %v3890
  %4560 = vmatpush.bf16.msra.mxu0 %v3888
  %4561 = vmatpush.bf16.msra.mxu0 %v3886
  %4562 = vmatpush.bf16.msra.mxu0 %v3884
  %4563 = vmatpush.bf16.msra.mxu0 %v3882
  %4564 = vmatpush.bf16.msra.mxu0 %v3880
  %4565 = vmatpush.bf16.msra.mxu0 %v3878
  %4566 = vmatmul.bf16.gmra.mxu0 %v3286
  %v4567 = vpop.f32.mrf.mxu0
  %v4568 = vadd.f32 %v4519, %v4567
  %v4569 = vpop.f32.mrf.mxu0
  %v4570 = vadd.f32 %v4521, %v4569
  %4571 = vmatmul.bf16.gmra.mxu0 %v3294
  %v4572 = vpop.f32.mrf.mxu0
  %v4573 = vadd.f32 %v4524, %v4572
  %v4574 = vpop.f32.mrf.mxu0
  %v4575 = vadd.f32 %v4526, %v4574
  %4576 = vmatmul.bf16.gmra.mxu0 %v3302
  %v4577 = vpop.f32.mrf.mxu0
  %v4578 = vadd.f32 %v4529, %v4577
  %v4579 = vpop.f32.mrf.mxu0
  %v4580 = vadd.f32 %v4531, %v4579
  %4581 = vmatmul.bf16.gmra.mxu0 %v3310
  %v4582 = vpop.f32.mrf.mxu0
  %v4583 = vadd.f32 %v4534, %v4582
  %v4584 = vpop.f32.mrf.mxu0
  %v4585 = vadd.f32 %v4536, %v4584
  %4586 = vmatmul.bf16.gmra.mxu0 %v3318
  %v4587 = vpop.f32.mrf.mxu0
  %v4588 = vadd.f32 %v4539, %v4587
  %v4589 = vpop.f32.mrf.mxu0
  %v4590 = vadd.f32 %v4541, %v4589
  %4591 = vmatmul.bf16.gmra.mxu0 %v3326
  %v4592 = vpop.f32.mrf.mxu0
  %v4593 = vadd.f32 %v4544, %v4592
  %v4594 = vpop.f32.mrf.mxu0
  %v4595 = vadd.f32 %v4546, %v4594
  %4596 = vmatmul.bf16.gmra.mxu0 %v3334
  %v4597 = vpop.f32.mrf.mxu0
  %v4598 = vadd.f32 %v4549, %v4597
  %v4599 = vpop.f32.mrf.mxu0
  %v4600 = vadd.f32 %v4551, %v4599
  %4601 = vmatmul.bf16.gmra.mxu0 %v3342
  %v4602 = vpop.f32.mrf.mxu0
  %v4603 = vadd.f32 %v4554, %v4602
  %v4604 = vpop.f32.mrf.mxu0
  %v4605 = vadd.f32 %v4556, %v4604
  %4606 = vdwg.mxu0
  %4607 = vmatpush.bf16.msra.mxu0 %v3908
  %4608 = vmatpush.bf16.msra.mxu0 %v3906
  %4609 = vmatpush.bf16.msra.mxu0 %v3904
  %4610 = vmatpush.bf16.msra.mxu0 %v3902
  %4611 = vmatpush.bf16.msra.mxu0 %v3900
  %4612 = vmatpush.bf16.msra.mxu0 %v3898
  %4613 = vmatpush.bf16.msra.mxu0 %v3896
  %4614 = vmatpush.bf16.msra.mxu0 %v3894
  %4615 = vmatmul.bf16.gmra.mxu0 %v3287
  %v4616 = vpop.f32.mrf.mxu0
  %v4617 = vadd.f32 %v4568, %v4616
  %v4618 = vpop.f32.mrf.mxu0
  %v4619 = vadd.f32 %v4570, %v4618
  %4620 = vmatmul.bf16.gmra.mxu0 %v3295
  %v4621 = vpop.f32.mrf.mxu0
  %v4622 = vadd.f32 %v4573, %v4621
  %v4623 = vpop.f32.mrf.mxu0
  %v4624 = vadd.f32 %v4575, %v4623
  %4625 = vmatmul.bf16.gmra.mxu0 %v3303
  %v4626 = vpop.f32.mrf.mxu0
  %v4627 = vadd.f32 %v4578, %v4626
  %v4628 = vpop.f32.mrf.mxu0
  %v4629 = vadd.f32 %v4580, %v4628
  %4630 = vmatmul.bf16.gmra.mxu0 %v3311
  %v4631 = vpop.f32.mrf.mxu0
  %v4632 = vadd.f32 %v4583, %v4631
  %v4633 = vpop.f32.mrf.mxu0
  %v4634 = vadd.f32 %v4585, %v4633
  %4635 = vmatmul.bf16.gmra.mxu0 %v3319
  %v4636 = vpop.f32.mrf.mxu0
  %v4637 = vadd.f32 %v4588, %v4636
  %v4638 = vpop.f32.mrf.mxu0
  %v4639 = vadd.f32 %v4590, %v4638
  %4640 = vmatmul.bf16.gmra.mxu0 %v3327
  %v4641 = vpop.f32.mrf.mxu0
  %v4642 = vadd.f32 %v4593, %v4641
  %v4643 = vpop.f32.mrf.mxu0
  %v4644 = vadd.f32 %v4595, %v4643
  %4645 = vmatmul.bf16.gmra.mxu0 %v3335
  %v4646 = vpop.f32.mrf.mxu0
  %v4647 = vadd.f32 %v4598, %v4646
  %v4648 = vpop.f32.mrf.mxu0
  %v4649 = vadd.f32 %v4600, %v4648
  %4650 = vmatmul.bf16.gmra.mxu0 %v3343
  %v4651 = vpop.f32.mrf.mxu0
  %v4652 = vadd.f32 %v4603, %v4651
  %v4653 = vpop.f32.mrf.mxu0
  %v4654 = vadd.f32 %v4605, %v4653
  %4655 = vdwg.mxu0
  %4656 = vmatpush.bf16.msra.mxu0 %v3924
  %4657 = vmatpush.bf16.msra.mxu0 %v3922
  %4658 = vmatpush.bf16.msra.mxu0 %v3920
  %4659 = vmatpush.bf16.msra.mxu0 %v3918
  %4660 = vmatpush.bf16.msra.mxu0 %v3916
  %4661 = vmatpush.bf16.msra.mxu0 %v3914
  %4662 = vmatpush.bf16.msra.mxu0 %v3912
  %4663 = vmatpush.bf16.msra.mxu0 %v3910
  %4664 = vmatmul.bf16.gmra.mxu0 %v3288
  %v4665 = vpop.f32.mrf.mxu0
  %v4666 = vadd.f32 %v4617, %v4665
  %v4667 = vpop.f32.mrf.mxu0
  %v4668 = vadd.f32 %v4619, %v4667
  %4669 = vmatmul.bf16.gmra.mxu0 %v3296
  %v4670 = vpop.f32.mrf.mxu0
  %v4671 = vadd.f32 %v4622, %v4670
  %v4672 = vpop.f32.mrf.mxu0
  %v4673 = vadd.f32 %v4624, %v4672
  %4674 = vmatmul.bf16.gmra.mxu0 %v3304
  %v4675 = vpop.f32.mrf.mxu0
  %v4676 = vadd.f32 %v4627, %v4675
  %v4677 = vpop.f32.mrf.mxu0
  %v4678 = vadd.f32 %v4629, %v4677
  %4679 = vmatmul.bf16.gmra.mxu0 %v3312
  %v4680 = vpop.f32.mrf.mxu0
  %v4681 = vadd.f32 %v4632, %v4680
  %v4682 = vpop.f32.mrf.mxu0
  %v4683 = vadd.f32 %v4634, %v4682
  %4684 = vmatmul.bf16.gmra.mxu0 %v3320
  %v4685 = vpop.f32.mrf.mxu0
  %v4686 = vadd.f32 %v4637, %v4685
  %v4687 = vpop.f32.mrf.mxu0
  %v4688 = vadd.f32 %v4639, %v4687
  %4689 = vmatmul.bf16.gmra.mxu0 %v3328
  %v4690 = vpop.f32.mrf.mxu0
  %v4691 = vadd.f32 %v4642, %v4690
  %v4692 = vpop.f32.mrf.mxu0
  %v4693 = vadd.f32 %v4644, %v4692
  %4694 = vmatmul.bf16.gmra.mxu0 %v3336
  %v4695 = vpop.f32.mrf.mxu0
  %v4696 = vadd.f32 %v4647, %v4695
  %v4697 = vpop.f32.mrf.mxu0
  %v4698 = vadd.f32 %v4649, %v4697
  %4699 = vmatmul.bf16.gmra.mxu0 %v3344
  %v4700 = vpop.f32.mrf.mxu0
  %v4701 = vadd.f32 %v4652, %v4700
  %v4702 = vpop.f32.mrf.mxu0
  %v4703 = vadd.f32 %v4654, %v4702
  %4704 = vdwg.mxu0
  %4705 = vmatpush.bf16.msra.mxu0 %v3940
  %4706 = vmatpush.bf16.msra.mxu0 %v3938
  %4707 = vmatpush.bf16.msra.mxu0 %v3936
  %4708 = vmatpush.bf16.msra.mxu0 %v3934
  %4709 = vmatpush.bf16.msra.mxu0 %v3932
  %4710 = vmatpush.bf16.msra.mxu0 %v3930
  %4711 = vmatpush.bf16.msra.mxu0 %v3928
  %4712 = vmatpush.bf16.msra.mxu0 %v3926
  %4713 = vmatmul.bf16.gmra.mxu0 %v3289
  %v4714 = vpop.f32.mrf.mxu0
  %v4715 = vadd.f32 %v4666, %v4714
  %v4716 = vpop.f32.mrf.mxu0
  %v4717 = vadd.f32 %v4668, %v4716
  %4718 = vmatmul.bf16.gmra.mxu0 %v3297
  %v4719 = vpop.f32.mrf.mxu0
  %v4720 = vadd.f32 %v4671, %v4719
  %v4721 = vpop.f32.mrf.mxu0
  %v4722 = vadd.f32 %v4673, %v4721
  %4723 = vmatmul.bf16.gmra.mxu0 %v3305
  %v4724 = vpop.f32.mrf.mxu0
  %v4725 = vadd.f32 %v4676, %v4724
  %v4726 = vpop.f32.mrf.mxu0
  %v4727 = vadd.f32 %v4678, %v4726
  %4728 = vmatmul.bf16.gmra.mxu0 %v3313
  %v4729 = vpop.f32.mrf.mxu0
  %v4730 = vadd.f32 %v4681, %v4729
  %v4731 = vpop.f32.mrf.mxu0
  %v4732 = vadd.f32 %v4683, %v4731
  %4733 = vmatmul.bf16.gmra.mxu0 %v3321
  %v4734 = vpop.f32.mrf.mxu0
  %v4735 = vadd.f32 %v4686, %v4734
  %v4736 = vpop.f32.mrf.mxu0
  %v4737 = vadd.f32 %v4688, %v4736
  %4738 = vmatmul.bf16.gmra.mxu0 %v3329
  %v4739 = vpop.f32.mrf.mxu0
  %v4740 = vadd.f32 %v4691, %v4739
  %v4741 = vpop.f32.mrf.mxu0
  %v4742 = vadd.f32 %v4693, %v4741
  %4743 = vmatmul.bf16.gmra.mxu0 %v3337
  %v4744 = vpop.f32.mrf.mxu0
  %v4745 = vadd.f32 %v4696, %v4744
  %v4746 = vpop.f32.mrf.mxu0
  %v4747 = vadd.f32 %v4698, %v4746
  %4748 = vmatmul.bf16.gmra.mxu0 %v3345
  %v4749 = vpop.f32.mrf.mxu0
  %v4750 = vadd.f32 %v4701, %v4749
  %v4751 = vpop.f32.mrf.mxu0
  %v4752 = vadd.f32 %v4703, %v4751
  %4753 = vdwg.mxu0
  %4754 = vmatpush.bf16.msra.mxu0 %v3956
  %4755 = vmatpush.bf16.msra.mxu0 %v3954
  %4756 = vmatpush.bf16.msra.mxu0 %v3952
  %4757 = vmatpush.bf16.msra.mxu0 %v3950
  %4758 = vmatpush.bf16.msra.mxu0 %v3948
  %4759 = vmatpush.bf16.msra.mxu0 %v3946
  %4760 = vmatpush.bf16.msra.mxu0 %v3944
  %4761 = vmatpush.bf16.msra.mxu0 %v3942
  %4762 = vmatmul.bf16.gmra.mxu0 %v3290
  %v4763 = vpop.f32.mrf.mxu0
  %v4764 = vadd.f32 %v4715, %v4763
  %v4765 = vpop.f32.mrf.mxu0
  %v4766 = vadd.f32 %v4717, %v4765
  %4767 = vmatmul.bf16.gmra.mxu0 %v3298
  %v4768 = vpop.f32.mrf.mxu0
  %v4769 = vadd.f32 %v4720, %v4768
  %v4770 = vpop.f32.mrf.mxu0
  %v4771 = vadd.f32 %v4722, %v4770
  %4772 = vmatmul.bf16.gmra.mxu0 %v3306
  %v4773 = vpop.f32.mrf.mxu0
  %v4774 = vadd.f32 %v4725, %v4773
  %v4775 = vpop.f32.mrf.mxu0
  %v4776 = vadd.f32 %v4727, %v4775
  %4777 = vmatmul.bf16.gmra.mxu0 %v3314
  %v4778 = vpop.f32.mrf.mxu0
  %v4779 = vadd.f32 %v4730, %v4778
  %v4780 = vpop.f32.mrf.mxu0
  %v4781 = vadd.f32 %v4732, %v4780
  %4782 = vmatmul.bf16.gmra.mxu0 %v3322
  %v4783 = vpop.f32.mrf.mxu0
  %v4784 = vadd.f32 %v4735, %v4783
  %v4785 = vpop.f32.mrf.mxu0
  %v4786 = vadd.f32 %v4737, %v4785
  %4787 = vmatmul.bf16.gmra.mxu0 %v3330
  %v4788 = vpop.f32.mrf.mxu0
  %v4789 = vadd.f32 %v4740, %v4788
  %v4790 = vpop.f32.mrf.mxu0
  %v4791 = vadd.f32 %v4742, %v4790
  %4792 = vmatmul.bf16.gmra.mxu0 %v3338
  %v4793 = vpop.f32.mrf.mxu0
  %v4794 = vadd.f32 %v4745, %v4793
  %v4795 = vpop.f32.mrf.mxu0
  %v4796 = vadd.f32 %v4747, %v4795
  %4797 = vmatmul.bf16.gmra.mxu0 %v3346
  %v4798 = vpop.f32.mrf.mxu0
  %v4799 = vadd.f32 %v4750, %v4798
  %v4800 = vpop.f32.mrf.mxu0
  %v4801 = vadd.f32 %v4752, %v4800
  %4802 = vdwg.mxu0
  %4803 = vmatpush.bf16.msra.mxu0 %v3972
  %4804 = vmatpush.bf16.msra.mxu0 %v3970
  %4805 = vmatpush.bf16.msra.mxu0 %v3968
  %4806 = vmatpush.bf16.msra.mxu0 %v3966
  %4807 = vmatpush.bf16.msra.mxu0 %v3964
  %4808 = vmatpush.bf16.msra.mxu0 %v3962
  %4809 = vmatpush.bf16.msra.mxu0 %v3960
  %4810 = vmatpush.bf16.msra.mxu0 %v3958
  %4811 = vmatmul.bf16.gmra.mxu0 %v3291
  %v4812 = vpop.f32.mrf.mxu0
  %v4813 = vadd.f32 %v4764, %v4812
  %v4814 = vpop.f32.mrf.mxu0
  %v4815 = vadd.f32 %v4766, %v4814
  %4816 = vmatmul.bf16.gmra.mxu0 %v3299
  %v4817 = vpop.f32.mrf.mxu0
  %v4818 = vadd.f32 %v4769, %v4817
  %v4819 = vpop.f32.mrf.mxu0
  %v4820 = vadd.f32 %v4771, %v4819
  %4821 = vmatmul.bf16.gmra.mxu0 %v3307
  %v4822 = vpop.f32.mrf.mxu0
  %v4823 = vadd.f32 %v4774, %v4822
  %v4824 = vpop.f32.mrf.mxu0
  %v4825 = vadd.f32 %v4776, %v4824
  %4826 = vmatmul.bf16.gmra.mxu0 %v3315
  %v4827 = vpop.f32.mrf.mxu0
  %v4828 = vadd.f32 %v4779, %v4827
  %v4829 = vpop.f32.mrf.mxu0
  %v4830 = vadd.f32 %v4781, %v4829
  %4831 = vmatmul.bf16.gmra.mxu0 %v3323
  %v4832 = vpop.f32.mrf.mxu0
  %v4833 = vadd.f32 %v4784, %v4832
  %v4834 = vpop.f32.mrf.mxu0
  %v4835 = vadd.f32 %v4786, %v4834
  %4836 = vmatmul.bf16.gmra.mxu0 %v3331
  %v4837 = vpop.f32.mrf.mxu0
  %v4838 = vadd.f32 %v4789, %v4837
  %v4839 = vpop.f32.mrf.mxu0
  %v4840 = vadd.f32 %v4791, %v4839
  %4841 = vmatmul.bf16.gmra.mxu0 %v3339
  %v4842 = vpop.f32.mrf.mxu0
  %v4843 = vadd.f32 %v4794, %v4842
  %v4844 = vpop.f32.mrf.mxu0
  %v4845 = vadd.f32 %v4796, %v4844
  %4846 = vmatmul.bf16.gmra.mxu0 %v3347
  %v4847 = vpop.f32.mrf.mxu0
  %v4848 = vadd.f32 %v4799, %v4847
  %v4849 = vpop.f32.mrf.mxu0
  %v4850 = vadd.f32 %v4801, %v4849
  %4851 = vdwg.mxu0
  %4852 = vmatpush.bf16.msra.mxu0 %v3988
  %4853 = vmatpush.bf16.msra.mxu0 %v3986
  %4854 = vmatpush.bf16.msra.mxu0 %v3984
  %4855 = vmatpush.bf16.msra.mxu0 %v3982
  %4856 = vmatpush.bf16.msra.mxu0 %v3980
  %4857 = vmatpush.bf16.msra.mxu0 %v3978
  %4858 = vmatpush.bf16.msra.mxu0 %v3976
  %4859 = vmatpush.bf16.msra.mxu0 %v3974
  %4860 = vmatmul.bf16.gmra.mxu0 %v3292
  %v4861 = vpop.f32.mrf.mxu0
  %v4862 = vadd.f32 %v4813, %v4861
  %v4863 = vpop.f32.mrf.mxu0
  %v4864 = vadd.f32 %v4815, %v4863
  %4865 = vmatmul.bf16.gmra.mxu0 %v3300
  %v4866 = vpop.f32.mrf.mxu0
  %v4867 = vadd.f32 %v4818, %v4866
  %v4868 = vpop.f32.mrf.mxu0
  %v4869 = vadd.f32 %v4820, %v4868
  %4870 = vmatmul.bf16.gmra.mxu0 %v3308
  %v4871 = vpop.f32.mrf.mxu0
  %v4872 = vadd.f32 %v4823, %v4871
  %v4873 = vpop.f32.mrf.mxu0
  %v4874 = vadd.f32 %v4825, %v4873
  %4875 = vmatmul.bf16.gmra.mxu0 %v3316
  %v4876 = vpop.f32.mrf.mxu0
  %v4877 = vadd.f32 %v4828, %v4876
  %v4878 = vpop.f32.mrf.mxu0
  %v4879 = vadd.f32 %v4830, %v4878
  %4880 = vmatmul.bf16.gmra.mxu0 %v3324
  %v4881 = vpop.f32.mrf.mxu0
  %v4882 = vadd.f32 %v4833, %v4881
  %v4883 = vpop.f32.mrf.mxu0
  %v4884 = vadd.f32 %v4835, %v4883
  %4885 = vmatmul.bf16.gmra.mxu0 %v3332
  %v4886 = vpop.f32.mrf.mxu0
  %v4887 = vadd.f32 %v4838, %v4886
  %v4888 = vpop.f32.mrf.mxu0
  %v4889 = vadd.f32 %v4840, %v4888
  %4890 = vmatmul.bf16.gmra.mxu0 %v3340
  %v4891 = vpop.f32.mrf.mxu0
  %v4892 = vadd.f32 %v4843, %v4891
  %v4893 = vpop.f32.mrf.mxu0
  %v4894 = vadd.f32 %v4845, %v4893
  %4895 = vmatmul.bf16.gmra.mxu0 %v3348
  %v4896 = vpop.f32.mrf.mxu0
  %v4897 = vadd.f32 %v4848, %v4896
  %v4898 = vpop.f32.mrf.mxu0
  %v4899 = vadd.f32 %v4850, %v4898
  %4900 = vdwg.mxu0
  %v4901 = vadd.f32 %v32, %v4470
  %v4902 = vadd.f32 %v33, %v4862
  %v4903 = vadd.f32 %v34, %v4472
  %v4904 = vadd.f32 %v35, %v4864
  %v4905 = vadd.f32 %v36, %v4475
  %v4906 = vadd.f32 %v37, %v4867
  %v4907 = vadd.f32 %v38, %v4477
  %v4908 = vadd.f32 %v39, %v4869
  %v4909 = vadd.f32 %v40, %v4480
  %v4910 = vadd.f32 %v41, %v4872
  %v4911 = vadd.f32 %v42, %v4482
  %v4912 = vadd.f32 %v43, %v4874
  %v4913 = vadd.f32 %v44, %v4485
  %v4914 = vadd.f32 %v45, %v4877
  %v4915 = vadd.f32 %v46, %v4487
  %v4916 = vadd.f32 %v47, %v4879
  %v4917 = vadd.f32 %v48, %v4490
  %v4918 = vadd.f32 %v49, %v4882
  %v4919 = vadd.f32 %v50, %v4492
  %v4920 = vadd.f32 %v51, %v4884
  %v4921 = vadd.f32 %v52, %v4495
  %v4922 = vadd.f32 %v53, %v4887
  %v4923 = vadd.f32 %v54, %v4497
  %v4924 = vadd.f32 %v55, %v4889
  %v4925 = vadd.f32 %v56, %v4500
  %v4926 = vadd.f32 %v57, %v4892
  %v4927 = vadd.f32 %v58, %v4502
  %v4928 = vadd.f32 %v59, %v4894
  %v4929 = vadd.f32 %v60, %v4505
  %v4930 = vadd.f32 %v61, %v4897
  %v4931 = vadd.f32 %v62, %v4507
  %v4932 = vadd.f32 %v63, %v4899
  %v4933 = vld [vmem:[%s6] sm:$0x3]
  %v4935 = vperm.slane %v4933, 0
  %v4936 = vperm.slane %v4933, 1
  %v4939 = vadd.f32 %v4901, %v4935
  %v4940 = vadd.f32 %v4902, %v4936
  %v4941 = vadd.f32 %v4903, %v4935
  %v4942 = vadd.f32 %v4904, %v4936
  %v4943 = vadd.f32 %v4905, %v4935
  %v4944 = vadd.f32 %v4906, %v4936
  %v4945 = vadd.f32 %v4907, %v4935
  %v4946 = vadd.f32 %v4908, %v4936
  %v4947 = vadd.f32 %v4909, %v4935
  %v4948 = vadd.f32 %v4910, %v4936
  %v4949 = vadd.f32 %v4911, %v4935
  %v4950 = vadd.f32 %v4912, %v4936
  %v4951 = vadd.f32 %v4913, %v4935
  %v4952 = vadd.f32 %v4914, %v4936
  %v4953 = vadd.f32 %v4915, %v4935
  %v4954 = vadd.f32 %v4916, %v4936
  %v4955 = vadd.f32 %v4917, %v4935
  %v4956 = vadd.f32 %v4918, %v4936
  %v4957 = vadd.f32 %v4919, %v4935
  %v4958 = vadd.f32 %v4920, %v4936
  %v4959 = vadd.f32 %v4921, %v4935
  %v4960 = vadd.f32 %v4922, %v4936
  %v4961 = vadd.f32 %v4923, %v4935
  %v4962 = vadd.f32 %v4924, %v4936
  %v4963 = vadd.f32 %v4925, %v4935
  %v4964 = vadd.f32 %v4926, %v4936
  %v4965 = vadd.f32 %v4927, %v4935
  %v4966 = vadd.f32 %v4928, %v4936
  %v4967 = vadd.f32 %v4929, %v4935
  %v4968 = vadd.f32 %v4930, %v4936
  %v4969 = vadd.f32 %v4931, %v4935
  %v4970 = vadd.f32 %v4932, %v4936
  %v4971 = vld [vmem:[%s7] sm:$0xff]
  %v4972 = vld [vmem:[%s7 + $0x8] sm:$0xff]
  %v4973 = vld [vmem:[%s7 + $0x10] sm:$0xf]
  %v4974 = vld [vmem:[%s7 + $0x18] sm:$0xf]
  %v4975 = vld [vmem:[%s8] sm:$0xff]
  %v4976 = vld [vmem:[%s8 + $0x8] sm:$0xf]
  %4978 = vset.pattern.permute.xlu0 0
  %4979 = vperm.xlu0 %4978, %v4975
  %v4980 = vpop.permute.xlu0 %4979
  %4983 = vset.pattern.permute.xlu0 0
  %4984 = vperm.xlu0 %4983, %v4976
  %v4985 = vpop.permute.xlu0 %4984
  %4987 = vmatpush.xpose.msra.mxu0 %v4969
  %4988 = vmatpush.xpose.msra.mxu0 %v4967
  %4989 = vmatpush.xpose.msra.mxu0 %v4965
  %4990 = vmatpush.xpose.msra.mxu0 %v4963
  %4991 = vmatpush.xpose.msra.mxu0 %v4961
  %4992 = vmatpush.xpose.msra.mxu0 %v4959
  %4993 = vmatpush.xpose.msra.mxu0 %v4957
  %4994 = vmatpush.xpose.msra.mxu0 %v4955
  %4995 = vmatpush.xpose.msra.mxu0 %v4953
  %4996 = vmatpush.xpose.msra.mxu0 %v4951
  %4997 = vmatpush.xpose.msra.mxu0 %v4949
  %4998 = vmatpush.xpose.msra.mxu0 %v4947
  %4999 = vmatpush.xpose.msra.mxu0 %v4945
  %5000 = vmatpush.xpose.msra.mxu0 %v4943
  %5001 = vmatpush.xpose.msra.mxu0 %v4941
  %5002 = vmatpush.xpose.msra.mxu0 %v4939
  %5003 = vmatmul.f32.gmra.mxu0 %v4971
  %v5004 = vpop.f32.mrf.mxu0
  %v5005 = vadd.f32 %v4980, %v5004
  %5006 = vmatmul.f32.gmra.mxu0 %v4973
  %v5007 = vpop.f32.mrf.mxu0
  %v5008 = vadd.f32 %v4985, %v5007
  %5009 = vdwg.mxu0
  %5010 = vmatpush.xpose.msra.mxu0 %v4970
  %5011 = vmatpush.xpose.msra.mxu0 %v4968
  %5012 = vmatpush.xpose.msra.mxu0 %v4966
  %5013 = vmatpush.xpose.msra.mxu0 %v4964
  %5014 = vmatpush.xpose.msra.mxu0 %v4962
  %5015 = vmatpush.xpose.msra.mxu0 %v4960
  %5016 = vmatpush.xpose.msra.mxu0 %v4958
  %5017 = vmatpush.xpose.msra.mxu0 %v4956
  %5018 = vmatpush.xpose.msra.mxu0 %v4954
  %5019 = vmatpush.xpose.msra.mxu0 %v4952
  %5020 = vmatpush.xpose.msra.mxu0 %v4950
  %5021 = vmatpush.xpose.msra.mxu0 %v4948
  %5022 = vmatpush.xpose.msra.mxu0 %v4946
  %5023 = vmatpush.xpose.msra.mxu0 %v4944
  %5024 = vmatpush.xpose.msra.mxu0 %v4942
  %5025 = vmatpush.xpose.msra.mxu0 %v4940
  %5026 = vmatmul.f32.gmra.mxu0 %v4972
  %v5027 = vpop.f32.mrf.mxu0
  %v5028 = vadd.f32 %v5005, %v5027
  %5029 = vmatmul.f32.gmra.mxu0 %v4974
  %v5030 = vpop.f32.mrf.mxu0
  %v5031 = vadd.f32 %v5008, %v5030
  %5032 = vdwg.mxu0
  %v5033 = vmax.f32 %v5028, 0.0
  %v5034 = vand.u32 2147483647, %v5028
  %v5035 = vsub.f32 0.0, %v5034
  %v5036 = vmul.f32 %v5035, 1.442695
  %v5037 = vpow.pop %v5036
  %v5038 = vadd.f32 %v5037, 1.0
  %v5039 = vlog2.pop %v5038
  %v5040 = vmul.f32 %v5039, 0.6931472
  %v5041 = vadd.f32 %v5033, %v5040
  %v5042 = vmul.f32 %v5028, %v5028
  %v5044 = vrot.slane %v5042, 3
  %v5046 = vadd.f32 %v5042, %v5044
  %v5047 = vmul.f32 %v5031, %v5031
  %v5049 = vrot.slane %v5047, 6
  %v5051 = vadd.f32 %v5046, %v5049
  %v5052 = vadd.f32 %v5051, 1e-20
  %v5053 = vrsqrt.pop %v5052
  %v5054 = vmul.f32 %v5053, %v5052
  %v5055 = vmul.f32 %v5054, %v5053
  %v5056 = vmul.f32 0.5, %v5055
  %v5057 = vsub.f32 1.5, %v5056
  %v5058 = vmul.f32 %v5053, %v5057
  %vm5059 = vweird.f32 %v5052
  %vm5060 = vweird.f32 %v5053
  %vm5061 = vmor %vm5059, %vm5060
  %v5062 = vsel %vm5061, %v5053, %v5058
  %v5063 = vmul.f32 %v5028, %v5062
  %v5065 = vrot.slane %v5062, 5
  %v5067 = vmul.f32 %v5028, %v5065
  %v5068 = vrot.slane %v5062, 2
  %v5070 = vmul.f32 %v5031, %v5068
  %v5072 = vrot.slane %v5028, 1
  %v5074 = vmul.f32 %v5063, %v5072
  %v5075 = vmul.f32 %v5067, %v5072
  %v5077 = vrot.slane %v5075, 3
  %v5079 = vadd.f32 %v5074, %v5077
  %v5081 = vrot.slane %v5031, 1
  %v5083 = vmul.f32 %v5070, %v5081
  %v5085 = vrot.slane %v5083, 6
  %v5087 = vadd.f32 %v5079, %v5085
  %v5088 = vmul.f32 %v5087, %v5063
  %v5090 = vrot.slane %v5088, 7
  %v5092 = vsub.f32 %v5028, %v5090
  %v5094 = vrot.slane %v5067, 3
  %v5096 = vmul.f32 %v5087, %v5094
  %v5098 = vrot.slane %v5096, 4
  %v5100 = vsub.f32 %v5028, %v5098
  %v5102 = vrot.slane %v5070, 6
  %v5104 = vmul.f32 %v5087, %v5102
  %v5106 = vrot.slane %v5104, 1
  %v5108 = vsub.f32 %v5031, %v5106
  %v5109 = vmul.f32 %v5092, %v5092
  %v5110 = vmul.f32 %v5100, %v5100
  %v5112 = vrot.slane %v5110, 3
  %v5114 = vadd.f32 %v5109, %v5112
  %v5115 = vmul.f32 %v5108, %v5108
  %v5117 = vrot.slane %v5115, 6
  %v5119 = vadd.f32 %v5114, %v5117
  %v5120 = vadd.f32 %v5119, 1e-20
  %v5121 = vrsqrt.pop %v5120
  %v5122 = vmul.f32 %v5121, %v5120
  %v5123 = vmul.f32 %v5122, %v5121
  %v5124 = vmul.f32 0.5, %v5123
  %v5125 = vsub.f32 1.5, %v5124
  %v5126 = vmul.f32 %v5121, %v5125
  %vm5127 = vweird.f32 %v5120
  %vm5128 = vweird.f32 %v5121
  %vm5129 = vmor %vm5127, %vm5128
  %v5130 = vsel %vm5129, %v5121, %v5126
  %v5131 = vmul.f32 %v5092, %v5130
  %v5133 = vrot.slane %v5130, 5
  %v5135 = vmul.f32 %v5100, %v5133
  %v5136 = vrot.slane %v5130, 2
  %v5138 = vmul.f32 %v5108, %v5136
  %v5139 = vrot.slane %v5028, 2
  %v5141 = vmul.f32 %v5063, %v5139
  %v5142 = vrot.slane %v5031, 2
  %v5144 = vmul.f32 %v5067, %v5142
  %v5146 = vrot.slane %v5144, 3
  %v5148 = vadd.f32 %v5141, %v5146
  %v5149 = vmul.f32 %v5070, %v5142
  %v5151 = vrot.slane %v5149, 6
  %v5153 = vadd.f32 %v5148, %v5151
  %v5154 = vmul.f32 %v5131, %v5072
  %v5155 = vmul.f32 %v5135, %v5081
  %v5157 = vrot.slane %v5155, 3
  %v5159 = vadd.f32 %v5154, %v5157
  %v5160 = vmul.f32 %v5138, %v5081
  %v5162 = vrot.slane %v5160, 6
  %v5164 = vadd.f32 %v5159, %v5162
  %v5165 = vmul.f32 %v5153, %v5063
  %v5167 = vrot.slane %v5165, 6
  %v5169 = vsub.f32 %v5028, %v5167
  %v5170 = vmul.f32 %v5164, %v5131
  %v5172 = vrot.slane %v5170, 7
  %v5174 = vsub.f32 %v5169, %v5172
  %v5175 = vmul.f32 %v5153, %v5094
  %v5177 = vrot.slane %v5175, 3
  %v5179 = vsub.f32 %v5031, %v5177
  %v5181 = vrot.slane %v5135, 3
  %v5183 = vmul.f32 %v5164, %v5181
  %v5185 = vrot.slane %v5183, 4
  %v5187 = vsub.f32 %v5179, %v5185
  %v5188 = vmul.f32 %v5153, %v5102
  %v5189 = vsub.f32 %v5031, %v5188
  %v5191 = vrot.slane %v5138, 6
  %v5193 = vmul.f32 %v5164, %v5191
  %v5195 = vrot.slane %v5193, 1
  %v5197 = vsub.f32 %v5189, %v5195
  %v5198 = vmul.f32 %v5174, %v5174
  %v5199 = vmul.f32 %v5187, %v5187
  %v5201 = vrot.slane %v5199, 3
  %v5203 = vadd.f32 %v5198, %v5201
  %v5204 = vmul.f32 %v5197, %v5197
  %v5206 = vrot.slane %v5204, 6
  %v5208 = vadd.f32 %v5203, %v5206
  %v5209 = vadd.f32 %v5208, 1e-20
  %v5210 = vrsqrt.pop %v5209
  %v5211 = vmul.f32 %v5210, %v5209
  %v5212 = vmul.f32 %v5211, %v5210
  %v5213 = vmul.f32 0.5, %v5212
  %v5214 = vsub.f32 1.5, %v5213
  %v5215 = vmul.f32 %v5210, %v5214
  %vm5216 = vweird.f32 %v5209
  %vm5217 = vweird.f32 %v5210
  %vm5218 = vmor %vm5216, %vm5217
  %v5219 = vsel %vm5218, %v5210, %v5215
  %v5220 = vmul.f32 %v5174, %v5219
  %v5222 = vrot.slane %v5219, 5
  %v5224 = vmul.f32 %v5187, %v5222
  %v5225 = vrot.slane %v5219, 2
  %v5227 = vmul.f32 %v5197, %v5225
  %v5229 = vrot.slane %v5063, 3
  %v5231 = vmul.f32 %v5041, %v5229
  %v5232 = vmul.f32 %v5231, %v5229
  %v5234 = vrot.slane %v5131, 3
  %v5236 = vmul.f32 %v5041, %v5234
  %v5237 = vmul.f32 %v5236, %v5234
  %v5239 = vrot.slane %v5237, 1
  %v5241 = vadd.f32 %v5232, %v5239
  %v5243 = vrot.slane %v5220, 3
  %v5245 = vmul.f32 %v5041, %v5243
  %v5246 = vmul.f32 %v5245, %v5243
  %v5248 = vrot.slane %v5246, 2
  %v5250 = vadd.f32 %v5241, %v5248
  %v5251 = vadd.f32 %v5250, 1e-08
  %v5252 = vrot.slane %v5067, 6
  %v5254 = vmul.f32 %v5231, %v5252
  %v5255 = vrot.slane %v5135, 6
  %v5257 = vmul.f32 %v5236, %v5255
  %v5259 = vrot.slane %v5257, 1
  %v5261 = vadd.f32 %v5254, %v5259
  %v5263 = vrot.slane %v5224, 6
  %v5265 = vmul.f32 %v5245, %v5263
  %v5267 = vrot.slane %v5265, 2
  %v5269 = vadd.f32 %v5261, %v5267
  %v5270 = vrot.slane %v5070, 1
  %v5272 = vmul.f32 %v5231, %v5270
  %v5273 = vrot.slane %v5138, 1
  %v5275 = vmul.f32 %v5236, %v5273
  %v5277 = vrot.slane %v5275, 1
  %v5279 = vadd.f32 %v5272, %v5277
  %v5281 = vrot.slane %v5227, 1
  %v5283 = vmul.f32 %v5245, %v5281
  %v5285 = vrot.slane %v5283, 2
  %v5287 = vadd.f32 %v5279, %v5285
  %v5288 = vmul.f32 %v5041, %v5252
  %v5289 = vmul.f32 %v5288, %v5252
  %v5290 = vmul.f32 %v5041, %v5255
  %v5291 = vmul.f32 %v5290, %v5255
  %v5293 = vrot.slane %v5291, 1
  %v5295 = vadd.f32 %v5289, %v5293
  %v5296 = vmul.f32 %v5041, %v5263
  %v5297 = vmul.f32 %v5296, %v5263
  %v5299 = vrot.slane %v5297, 2
  %v5301 = vadd.f32 %v5295, %v5299
  %v5302 = vadd.f32 %v5301, 1e-08
  %v5303 = vmul.f32 %v5288, %v5270
  %v5304 = vmul.f32 %v5290, %v5273
  %v5306 = vrot.slane %v5304, 1
  %v5308 = vadd.f32 %v5303, %v5306
  %v5309 = vmul.f32 %v5296, %v5281
  %v5311 = vrot.slane %v5309, 2
  %v5313 = vadd.f32 %v5308, %v5311
  %v5314 = vmul.f32 %v5041, %v5270
  %v5315 = vmul.f32 %v5314, %v5270
  %v5316 = vmul.f32 %v5041, %v5273
  %v5317 = vmul.f32 %v5316, %v5273
  %v5319 = vrot.slane %v5317, 1
  %v5321 = vadd.f32 %v5315, %v5319
  %v5322 = vmul.f32 %v5041, %v5281
  %v5323 = vmul.f32 %v5322, %v5281
  %v5325 = vrot.slane %v5323, 2
  %v5327 = vadd.f32 %v5321, %v5325
  %v5328 = vadd.f32 %v5327, 1e-08
  %v5330 = vrot.slane %v5269, 7
  %v5333 = vrot.slane %v5287, 6
  %v5335 = vrot.slane %v5269, 5
  %v5338 = vrot.slane %v5302, 4
  %v5341 = vrot.slane %v5313, 3
  %v5343 = vrot.slane %v5287, 2
  %v5345 = vrot.slane %v5313, 1
  %vm5347 = vcmask 1040384
  %v5348 = vsel %vm5347, %v5251, %v5330
  %vm5349 = vcmask 1041408
  %v5350 = vsel %vm5349, %v5348, %v5333
  %vm5351 = vcmask 1042432
  %v5352 = vsel %vm5351, %v5350, %v5335
  %vm5353 = vcmask 1043456
  %v5354 = vsel %vm5353, %v5352, %v5338
  %vm5355 = vcmask 1044480
  %v5356 = vsel %vm5355, %v5354, %v5341
  %vm5357 = vcmask 1045504
  %v5358 = vsel %vm5357, %v5356, %v5343
  %vm5359 = vcmask 1046528
  %v5360 = vsel %vm5359, %v5358, %v5345
  %5361 = vst [vmem:[%s9] sm:$0xff] %v5360
  %5362 = vst [vmem:[%s9 + $0x8] sm:$0x1] %v5328
  // Predicated region
  $region38: #{full_cov_predict.1} parent=0 // pred_check
    _
  $region39: #{full_cov_predict.1} parent=0 // pred_check_branch
    %5364 = sbr.rel (0) target = $region41
  $region40: #{full_cov_predict.1} parent=0 // pred_region
    _
  $region41: #{full_cov_predict.1} parent=0 // pred_fallthru
    _
  // Predicated region
  $region42: #{full_cov_predict.1} parent=0 // pred_check
    _
  $region43: #{full_cov_predict.1} parent=0 // pred_check_branch
    %5366 = sbr.rel (0) target = $region45
  $region44: #{full_cov_predict.1} parent=0 // pred_region
    _
  $region45: #{full_cov_predict.1} parent=0 // pred_fallthru
    _

</llo_original>
